<compile_context>
chip_gen: v7x
topology: tpu7x:2x2x1
jax: 0.10.0
libtpu: 0.0.40
codegen_flags: <defaults>
</compile_context>

<pallas_src>
import functools
import math

import jax
import jax.numpy as jnp
import numpy as np
from jax import lax
from jax.experimental import pallas as pl
from jax.experimental.pallas import tpu as pltpu


# ----------------------------- fused kernel ----------------------------------
def _self_attention_kernel(x_ref, gamma_ref, beta_ref, gmean_ref,
                           wqkv_ref, wout_ref, bout_ref, o_ref,
                           *, n_head, eps):
    B, C, S = x_ref.shape
    hd = C // n_head

    gamma = gamma_ref[...]                         # (C, 1) f32
    beta = beta_ref[...]                           # (C, 1) f32
    bout = bout_ref[...]                           # (C, 1) f32
    gmean = gmean_ref[...]                         # (C, C) f32 group-average matrix
    w_qkv = wqkv_ref[...]                          # (3C, C) bf16 (Wq pre-scaled)
    w_out = wout_ref[...]                          # (C, C)  bf16
    ones_row = jnp.ones((1, S), dtype=jnp.bfloat16)  # softmax-denominator probe

    # Static unroll over batch: both batches handled in a single grid step
    # (single-TC friendly; see TODO(synk) above for v7x core sharding).
    for b in range(B):
        x = x_ref[b].astype(jnp.float32)           # (C, S), spatial axis lane-dense

        # ---- GroupNorm: batched stats + one (C,C)@(C,2) group-average matmul ----
        s1 = jnp.sum(x, axis=1, keepdims=True)                      # (C, 1)
        s2 = jnp.sum(x * x, axis=1, keepdims=True)                  # (C, 1)
        gstats = jnp.dot(gmean, jnp.concatenate([s1, s2], axis=1),
                         preferred_element_type=jnp.float32)        # (C, 2)
        mean = gstats[:, 0:1]
        var = gstats[:, 1:2] - mean * mean                          # E[x^2] - mean^2
        xn = (x - mean) * (lax.rsqrt(var + eps) * gamma) + beta     # (C, S) f32

        # ---- fused qkv projection: single (3C,C)@(C,S) bf16 matmul, f32 acc ----
        qkv = jnp.dot(w_qkv, xn.astype(jnp.bfloat16),
                      preferred_element_type=jnp.float32)           # (3C, S)
        qkv = qkv.astype(jnp.bfloat16)

        # ---- attention (channels-major: head slices are sublane slices) --------
        outs = []
        for h in range(n_head):                                     # n_head=1 default
            q = qkv[h * hd:(h + 1) * hd]                            # (hd, S) bf16
            k = qkv[C + h * hd:C + (h + 1) * hd]                    # (hd, S) bf16
            v = qkv[2 * C + h * hd:2 * C + (h + 1) * hd]            # (hd, S) bf16

            # scores[p, x'] = sum_c q[c, p] * k[c, x']   (scale already in Wq)
            scores = lax.dot_general(q, k, (((0,), (0,)), ((), ())),
                                     preferred_element_type=jnp.float32)  # (S, S)
            m = jnp.max(scores, axis=-1, keepdims=True)             # (S, 1)
            e = jnp.exp(scores - m).astype(jnp.bfloat16)            # (S, S), exp in f32

            # unnormalized out and the softmax denominator, both lane-major
            num = lax.dot_general(v, e, (((1,), (1,)), ((), ())),
                                  preferred_element_type=jnp.float32)     # (hd, S)
            den = lax.dot_general(ones_row, e, (((1,), (1,)), ((), ())),
                                  preferred_element_type=jnp.float32)     # (1, S)
            outs.append(num * pl.reciprocal(den, approx=True))      # deferred divide

        att = outs[0] if n_head == 1 else jnp.concatenate(outs, axis=0)   # (C, S)

        # ---- output 1x1 conv (with bias) + residual, full-width (C,S) store ----
        y = jnp.dot(w_out, att.astype(jnp.bfloat16),
                    preferred_element_type=jnp.float32)             # (C, S)
        o_ref[b] = (y + bout + x).astype(o_ref.dtype)


# ------------------------------- wrapper --------------------------------------
def self_attention_forward(x_nchw, params, *, n_head=1, norm_groups=32, eps=1e-5):
    """SelfAttention forward. x_nchw: (B, C, H, W) like PyTorch; returns same shape."""
    B, C, H, W = x_nchw.shape
    S = H * W
    cg = C // norm_groups
    x = x_nchw.reshape(B, C, S)   # free reshape: merges contiguous trailing dims

    # block-diagonal group-averaging matrix (compile-time constant, f32)
    gid = jnp.arange(C) // cg
    gmean = (gid[:, None] == gid[None, :]).astype(jnp.float32) / float(cg * S)

    # fused qkv weight (out_ch, in_ch) with the 1/sqrt(C) scale folded into Wq;
    # all MXU weights pre-cast to bf16 (f32 accumulate in-kernel).
    scale = 1.0 / math.sqrt(C)
    w_qkv = jnp.concatenate(
        [params["wq"] * scale, params["wk"], params["wv"]], axis=0
    ).astype(jnp.bfloat16)                                          # (3C, C)
    w_out = params["wout"].astype(jnp.bfloat16)                     # (C, C)

    kernel = functools.partial(_self_attention_kernel, n_head=n_head, eps=eps)
    out = pl.pallas_call(
        kernel,
        out_shape=jax.ShapeDtypeStruct((B, C, S), x.dtype),
        grid=(1,),
        in_specs=[
            pl.BlockSpec((B, C, S), lambda i: (0, 0, 0)),   # x (all batches)
            pl.BlockSpec((C, 1), lambda i: (0, 0)),          # gamma
            pl.BlockSpec((C, 1), lambda i: (0, 0)),          # beta
            pl.BlockSpec((C, C), lambda i: (0, 0)),          # group-average matrix
            pl.BlockSpec((3 * C, C), lambda i: (0, 0)),      # fused Wqkv (bf16)
            pl.BlockSpec((C, C), lambda i: (0, 0)),          # Wout (bf16)
            pl.BlockSpec((C, 1), lambda i: (0, 0)),          # out bias
        ],
        out_specs=pl.BlockSpec((B, C, S), lambda i: (0, 0, 0)),
        compiler_params=pltpu.CompilerParams(dimension_semantics=("arbitrary",)),
    )(x,
      params["gamma"].reshape(C, 1), params["beta"].reshape(C, 1), gmean,
      w_qkv, w_out, params["bout"].reshape(C, 1))
    return out.reshape(B, C, H, W)


# ------------------------------ parameters -------------------------------------
def init_params(key, C):
    ks = jax.random.split(key, 7)
    w_scale = 1.0 / math.sqrt(C)
    return {
        "gamma": 1.0 + 0.1 * jax.random.normal(ks[0], (C,), jnp.float32),
        "beta": 0.1 * jax.random.normal(ks[1], (C,), jnp.float32),
        # 1x1 conv weights stored as (out_channels, in_channels)
        "wq": w_scale * jax.random.normal(ks[2], (C, C), jnp.float32),
        "wk": w_scale * jax.random.normal(ks[3], (C, C), jnp.float32),
        "wv": w_scale * jax.random.normal(ks[4], (C, C), jnp.float32),
        "wout": w_scale * jax.random.normal(ks[5], (C, C), jnp.float32),
        "bout": 0.1 * jax.random.normal(ks[6], (C,), jnp.float32),
    }


# --------------------------- pure-JAX reference ---------------------------------
def _ref_forward(x, p, *, n_head=1, norm_groups=32, eps=1e-5):
    B, C, H, W = x.shape
    hd = C // n_head
    xg = x.reshape(B, norm_groups, C // norm_groups, H, W)
    mean = xg.mean(axis=(2, 3, 4), keepdims=True)
    var = ((xg - mean) ** 2).mean(axis=(2, 3, 4), keepdims=True)
    xn = ((xg - mean) / jnp.sqrt(var + eps)).reshape(B, C, H, W)
    xn = xn * p["gamma"][None, :, None, None] + p["beta"][None, :, None, None]

    q = jnp.einsum("oc,bchw->bohw", p["wq"], xn).reshape(B, n_head, hd, H * W)
    k = jnp.einsum("oc,bchw->bohw", p["wk"], xn).reshape(B, n_head, hd, H * W)
    v = jnp.einsum("oc,bchw->bohw", p["wv"], xn).reshape(B, n_head, hd, H * W)

    attn = jnp.einsum("bncp,bncq->bnpq", q, k) / math.sqrt(C)
    attn = jax.nn.softmax(attn, axis=-1)
    out = jnp.einsum("bnpq,bncq->bncp", attn, v).reshape(B, C, H, W)
    out = jnp.einsum("oc,bchw->bohw", p["wout"], out) + p["bout"][None, :, None, None]
    return out + x


if __name__ == "__main__":
    # SelfAttention(in_channel=64, n_head=1, norm_groups=32)  — module defaults
    B, C, H, W = 2, 64, 16, 16
    n_head, norm_groups = 1, 32

    key = jax.random.PRNGKey(0)
    kx, kp = jax.random.split(key, 2)
    x = jax.random.normal(kx, (B, C, H, W), jnp.float32)     # NCHW like PyTorch
    params = init_params(kp, C)

    out = jax.block_until_ready(
        self_attention_forward(x, params, n_head=n_head, norm_groups=norm_groups))
    ref = jax.block_until_ready(
        _ref_forward(x, params, n_head=n_head, norm_groups=norm_groups))

    assert out.shape == (B, C, H, W), out.shape
    # Tolerance reflects bf16 MXU operands (f32 accumulate); the f32 reference
    # and the kernel agree to ~1e-2 while real bugs would be O(1) off.
    np.testing.assert_allclose(np.asarray(out), np.asarray(ref), rtol=2e-2, atol=2e-2)
    print("KERNEL_OK")
</pallas_src>

<mosaic_0001>
module attributes {stable_mosaic.version = 11 : i64} {
  func.func @_self_attention_kernel(%arg0: i32, %arg1: memref<2x64x256xf32, #tpu.memory_space<vmem>>, %arg2: memref<64x1xf32, #tpu.memory_space<vmem>>, %arg3: memref<64x1xf32, #tpu.memory_space<vmem>>, %arg4: memref<64x64xf32, #tpu.memory_space<vmem>>, %arg5: memref<192x64xbf16, #tpu.memory_space<vmem>>, %arg6: memref<64x64xbf16, #tpu.memory_space<vmem>>, %arg7: memref<64x1xf32, #tpu.memory_space<vmem>>, %arg8: memref<2x64x256xf32, #tpu.memory_space<vmem>>) attributes {dimension_semantics = [#tpu.dimension_semantics<arbitrary>], iteration_bounds = array<i64: 1>, scalar_prefetch = 0 : i64, scratch_operands = 0 : i64, tpu.core_type = #tpu.core_type<tc>, window_params = [{pipeline_mode = #tpu.pipeline_mode<synchronous>, transform_indices = @transform_0, window_bounds = array<i64: 2, 64, 256>}, {pipeline_mode = #tpu.pipeline_mode<synchronous>, transform_indices = @transform_1, window_bounds = array<i64: 64, 1>}, {pipeline_mode = #tpu.pipeline_mode<synchronous>, transform_indices = @transform_2, window_bounds = array<i64: 64, 1>}, {pipeline_mode = #tpu.pipeline_mode<synchronous>, transform_indices = @transform_3, window_bounds = array<i64: 64, 64>}, {pipeline_mode = #tpu.pipeline_mode<synchronous>, transform_indices = @transform_4, window_bounds = array<i64: 192, 64>}, {pipeline_mode = #tpu.pipeline_mode<synchronous>, transform_indices = @transform_5, window_bounds = array<i64: 64, 64>}, {pipeline_mode = #tpu.pipeline_mode<synchronous>, transform_indices = @transform_6, window_bounds = array<i64: 64, 1>}, {pipeline_mode = #tpu.pipeline_mode<synchronous>, transform_indices = @transform_7, window_bounds = array<i64: 2, 64, 256>}]} {
    %c0 = arith.constant 0 : index
    %c0_0 = arith.constant 0 : index
    %0 = vector.load %arg2[%c0, %c0_0] : memref<64x1xf32, #tpu.memory_space<vmem>>, vector<64x1xf32>
    %c0_1 = arith.constant 0 : index
    %c0_2 = arith.constant 0 : index
    %1 = vector.load %arg3[%c0_1, %c0_2] : memref<64x1xf32, #tpu.memory_space<vmem>>, vector<64x1xf32>
    %c0_3 = arith.constant 0 : index
    %c0_4 = arith.constant 0 : index
    %2 = vector.load %arg7[%c0_3, %c0_4] : memref<64x1xf32, #tpu.memory_space<vmem>>, vector<64x1xf32>
    %c0_5 = arith.constant 0 : index
    %c0_6 = arith.constant 0 : index
    %3 = vector.load %arg4[%c0_5, %c0_6] : memref<64x64xf32, #tpu.memory_space<vmem>>, vector<64x64xf32>
    %c0_7 = arith.constant 0 : index
    %c0_8 = arith.constant 0 : index
    %4 = vector.load %arg5[%c0_7, %c0_8] : memref<192x64xbf16, #tpu.memory_space<vmem>>, vector<192x64xbf16>
    %c0_9 = arith.constant 0 : index
    %c0_10 = arith.constant 0 : index
    %5 = vector.load %arg6[%c0_9, %c0_10] : memref<64x64xbf16, #tpu.memory_space<vmem>>, vector<64x64xbf16>
    %cst = arith.constant 1.000000e+00 : bf16
    %6 = vector.broadcast %cst : bf16 to vector<1x256xbf16>
    %c0_11 = arith.constant 0 : index
    %c0_12 = arith.constant 0 : index
    %c0_13 = arith.constant 0 : index
    %7 = vector.load %arg1[%c0_11, %c0_12, %c0_13] : memref<2x64x256xf32, #tpu.memory_space<vmem>>, vector<1x64x256xf32>
    %8 = vector.shape_cast %7 : vector<1x64x256xf32> to vector<64x256xf32>
    %cst_14 = arith.constant dense<0.000000e+00> : vector<64xf32>
    %9 = vector.multi_reduction <add>, %8, %cst_14 [1] : vector<64x256xf32> to vector<64xf32>
    %10 = vector.shape_cast %9 : vector<64xf32> to vector<64x1xf32>
    %11 = arith.mulf %8, %8 : vector<64x256xf32>
    %cst_15 = arith.constant dense<0.000000e+00> : vector<64xf32>
    %12 = vector.multi_reduction <add>, %11, %cst_15 [1] : vector<64x256xf32> to vector<64xf32>
    %13 = vector.shape_cast %12 : vector<64xf32> to vector<64x1xf32>
    %14 = tpu.concatenate %10, %13 in 1 : vector<64x1xf32>, vector<64x1xf32> -> vector<64x2xf32>
    %cst_16 = arith.constant dense<0.000000e+00> : vector<64x2xf32>
    %15 = tpu.matmul %3, %14, %cst_16 {dimension_numbers = #tpu.dot_dimension_numbers<[1], [0], [0], [1], [0, 0, 1, 1], [], []>} : vector<64x64xf32>, vector<64x2xf32>, vector<64x2xf32> -> vector<64x2xf32>
    %16 = vector.extract_strided_slice %15 {offsets = [0, 0], sizes = [64, 1], strides = [1, 1]} : vector<64x2xf32> to vector<64x1xf32>
    %17 = vector.extract_strided_slice %15 {offsets = [0, 1], sizes = [64, 1], strides = [1, 1]} : vector<64x2xf32> to vector<64x1xf32>
    %18 = arith.mulf %16, %16 : vector<64x1xf32>
    %19 = arith.subf %17, %18 : vector<64x1xf32>
    %20 = vector.broadcast %16 : vector<64x1xf32> to vector<64x256xf32>
    %21 = arith.subf %8, %20 : vector<64x256xf32>
    %cst_17 = arith.constant 9.99999974E-6 : f32
    %22 = vector.broadcast %cst_17 : f32 to vector<64x1xf32>
    %23 = arith.addf %19, %22 : vector<64x1xf32>
    %24 = math.rsqrt %23 : vector<64x1xf32>
    %25 = arith.mulf %24, %0 : vector<64x1xf32>
    %26 = vector.broadcast %25 : vector<64x1xf32> to vector<64x256xf32>
    %27 = arith.mulf %21, %26 : vector<64x256xf32>
    %28 = vector.broadcast %1 : vector<64x1xf32> to vector<64x256xf32>
    %29 = arith.addf %27, %28 : vector<64x256xf32>
    %30 = arith.truncf %29 : vector<64x256xf32> to vector<64x256xbf16>
    %cst_18 = arith.constant dense<0.000000e+00> : vector<192x256xf32>
    %31 = tpu.matmul %4, %30, %cst_18 {dimension_numbers = #tpu.dot_dimension_numbers<[1], [0], [0], [1], [0, 0, 1, 1], [], []>} : vector<192x64xbf16>, vector<64x256xbf16>, vector<192x256xf32> -> vector<192x256xf32>
    %32 = arith.truncf %31 : vector<192x256xf32> to vector<192x256xbf16>
    %33 = vector.extract_strided_slice %32 {offsets = [0, 0], sizes = [64, 256], strides = [1, 1]} : vector<192x256xbf16> to vector<64x256xbf16>
    %34 = vector.extract_strided_slice %32 {offsets = [64, 0], sizes = [64, 256], strides = [1, 1]} : vector<192x256xbf16> to vector<64x256xbf16>
    %35 = vector.extract_strided_slice %32 {offsets = [128, 0], sizes = [64, 256], strides = [1, 1]} : vector<192x256xbf16> to vector<64x256xbf16>
    %cst_19 = arith.constant dense<0.000000e+00> : vector<256x256xf32>
    %36 = tpu.matmul %33, %34, %cst_19 {dimension_numbers = #tpu.dot_dimension_numbers<[0], [0], [1], [1], [0, 1, 1, 1], [], []>} : vector<64x256xbf16>, vector<64x256xbf16>, vector<256x256xf32> -> vector<256x256xf32>
    %cst_20 = arith.constant dense<0xFF800000> : vector<256xf32>
    %37 = vector.multi_reduction <maximumf>, %36, %cst_20 [1] : vector<256x256xf32> to vector<256xf32>
    %38 = vector.shape_cast %37 : vector<256xf32> to vector<256x1xf32>
    %39 = vector.broadcast %38 : vector<256x1xf32> to vector<256x256xf32>
    %40 = arith.subf %36, %39 : vector<256x256xf32>
    %41 = math.exp %40 : vector<256x256xf32>
    %42 = arith.truncf %41 : vector<256x256xf32> to vector<256x256xbf16>
    %cst_21 = arith.constant dense<0.000000e+00> : vector<64x256xf32>
    %43 = tpu.matmul %35, %42, %cst_21 {dimension_numbers = #tpu.dot_dimension_numbers<[1], [1], [0], [0], [0, 0, 1, 0], [], []>} : vector<64x256xbf16>, vector<256x256xbf16>, vector<64x256xf32> -> vector<64x256xf32>
    %cst_22 = arith.constant dense<0.000000e+00> : vector<1x256xf32>
    %44 = tpu.matmul %6, %42, %cst_22 {dimension_numbers = #tpu.dot_dimension_numbers<[1], [1], [0], [0], [0, 0, 1, 0], [], []>} : vector<1x256xbf16>, vector<256x256xbf16>, vector<1x256xf32> -> vector<1x256xf32>
    %45 = tpu.reciprocal %44 {approx = true} : vector<1x256xf32> -> vector<1x256xf32>
    %46 = vector.broadcast %45 : vector<1x256xf32> to vector<64x256xf32>
    %47 = arith.mulf %43, %46 : vector<64x256xf32>
    %48 = arith.truncf %47 : vector<64x256xf32> to vector<64x256xbf16>
    %cst_23 = arith.constant dense<0.000000e+00> : vector<64x256xf32>
    %49 = tpu.matmul %5, %48, %cst_23 {dimension_numbers = #tpu.dot_dimension_numbers<[1], [0], [0], [1], [0, 0, 1, 1], [], []>} : vector<64x64xbf16>, vector<64x256xbf16>, vector<64x256xf32> -> vector<64x256xf32>
    %50 = vector.broadcast %2 : vector<64x1xf32> to vector<64x256xf32>
    %51 = arith.addf %49, %50 : vector<64x256xf32>
    %52 = arith.addf %51, %8 : vector<64x256xf32>
    %c0_24 = arith.constant 0 : index
    %c0_25 = arith.constant 0 : index
    %c0_26 = arith.constant 0 : index
    %53 = vector.load %arg8[%c0_24, %c0_25, %c0_26] : memref<2x64x256xf32, #tpu.memory_space<vmem>>, vector<1x64x256xf32>
    %54 = vector.shape_cast %53 : vector<1x64x256xf32> to vector<64x256xf32>
    %55 = vector.shape_cast %52 : vector<64x256xf32> to vector<1x64x256xf32>
    tpu.vector_store %arg8[%c0_24, %c0_25, %c0_26], %55 {strides = array<i32>} : memref<2x64x256xf32, #tpu.memory_space<vmem>>, vector<1x64x256xf32>,
    %c1 = arith.constant 1 : index
    %c0_27 = arith.constant 0 : index
    %c0_28 = arith.constant 0 : index
    %56 = vector.load %arg1[%c1, %c0_27, %c0_28] : memref<2x64x256xf32, #tpu.memory_space<vmem>>, vector<1x64x256xf32>
    %57 = vector.shape_cast %56 : vector<1x64x256xf32> to vector<64x256xf32>
    %cst_29 = arith.constant dense<0.000000e+00> : vector<64xf32>
    %58 = vector.multi_reduction <add>, %57, %cst_29 [1] : vector<64x256xf32> to vector<64xf32>
    %59 = vector.shape_cast %58 : vector<64xf32> to vector<64x1xf32>
    %60 = arith.mulf %57, %57 : vector<64x256xf32>
    %cst_30 = arith.constant dense<0.000000e+00> : vector<64xf32>
    %61 = vector.multi_reduction <add>, %60, %cst_30 [1] : vector<64x256xf32> to vector<64xf32>
    %62 = vector.shape_cast %61 : vector<64xf32> to vector<64x1xf32>
    %63 = tpu.concatenate %59, %62 in 1 : vector<64x1xf32>, vector<64x1xf32> -> vector<64x2xf32>
    %cst_31 = arith.constant dense<0.000000e+00> : vector<64x2xf32>
    %64 = tpu.matmul %3, %63, %cst_31 {dimension_numbers = #tpu.dot_dimension_numbers<[1], [0], [0], [1], [0, 0, 1, 1], [], []>} : vector<64x64xf32>, vector<64x2xf32>, vector<64x2xf32> -> vector<64x2xf32>
    %65 = vector.extract_strided_slice %64 {offsets = [0, 0], sizes = [64, 1], strides = [1, 1]} : vector<64x2xf32> to vector<64x1xf32>
    %66 = vector.extract_strided_slice %64 {offsets = [0, 1], sizes = [64, 1], strides = [1, 1]} : vector<64x2xf32> to vector<64x1xf32>
    %67 = arith.mulf %65, %65 : vector<64x1xf32>
    %68 = arith.subf %66, %67 : vector<64x1xf32>
    %69 = vector.broadcast %65 : vector<64x1xf32> to vector<64x256xf32>
    %70 = arith.subf %57, %69 : vector<64x256xf32>
    %cst_32 = arith.constant 9.99999974E-6 : f32
    %71 = vector.broadcast %cst_32 : f32 to vector<64x1xf32>
    %72 = arith.addf %68, %71 : vector<64x1xf32>
    %73 = math.rsqrt %72 : vector<64x1xf32>
    %74 = arith.mulf %73, %0 : vector<64x1xf32>
    %75 = vector.broadcast %74 : vector<64x1xf32> to vector<64x256xf32>
    %76 = arith.mulf %70, %75 : vector<64x256xf32>
    %77 = vector.broadcast %1 : vector<64x1xf32> to vector<64x256xf32>
    %78 = arith.addf %76, %77 : vector<64x256xf32>
    %79 = arith.truncf %78 : vector<64x256xf32> to vector<64x256xbf16>
    %cst_33 = arith.constant dense<0.000000e+00> : vector<192x256xf32>
    %80 = tpu.matmul %4, %79, %cst_33 {dimension_numbers = #tpu.dot_dimension_numbers<[1], [0], [0], [1], [0, 0, 1, 1], [], []>} : vector<192x64xbf16>, vector<64x256xbf16>, vector<192x256xf32> -> vector<192x256xf32>
    %81 = arith.truncf %80 : vector<192x256xf32> to vector<192x256xbf16>
    %82 = vector.extract_strided_slice %81 {offsets = [0, 0], sizes = [64, 256], strides = [1, 1]} : vector<192x256xbf16> to vector<64x256xbf16>
    %83 = vector.extract_strided_slice %81 {offsets = [64, 0], sizes = [64, 256], strides = [1, 1]} : vector<192x256xbf16> to vector<64x256xbf16>
    %84 = vector.extract_strided_slice %81 {offsets = [128, 0], sizes = [64, 256], strides = [1, 1]} : vector<192x256xbf16> to vector<64x256xbf16>
    %cst_34 = arith.constant dense<0.000000e+00> : vector<256x256xf32>
    %85 = tpu.matmul %82, %83, %cst_34 {dimension_numbers = #tpu.dot_dimension_numbers<[0], [0], [1], [1], [0, 1, 1, 1], [], []>} : vector<64x256xbf16>, vector<64x256xbf16>, vector<256x256xf32> -> vector<256x256xf32>
    %cst_35 = arith.constant dense<0xFF800000> : vector<256xf32>
    %86 = vector.multi_reduction <maximumf>, %85, %cst_35 [1] : vector<256x256xf32> to vector<256xf32>
    %87 = vector.shape_cast %86 : vector<256xf32> to vector<256x1xf32>
    %88 = vector.broadcast %87 : vector<256x1xf32> to vector<256x256xf32>
    %89 = arith.subf %85, %88 : vector<256x256xf32>
    %90 = math.exp %89 : vector<256x256xf32>
    %91 = arith.truncf %90 : vector<256x256xf32> to vector<256x256xbf16>
    %cst_36 = arith.constant dense<0.000000e+00> : vector<64x256xf32>
    %92 = tpu.matmul %84, %91, %cst_36 {dimension_numbers = #tpu.dot_dimension_numbers<[1], [1], [0], [0], [0, 0, 1, 0], [], []>} : vector<64x256xbf16>, vector<256x256xbf16>, vector<64x256xf32> -> vector<64x256xf32>
    %cst_37 = arith.constant dense<0.000000e+00> : vector<1x256xf32>
    %93 = tpu.matmul %6, %91, %cst_37 {dimension_numbers = #tpu.dot_dimension_numbers<[1], [1], [0], [0], [0, 0, 1, 0], [], []>} : vector<1x256xbf16>, vector<256x256xbf16>, vector<1x256xf32> -> vector<1x256xf32>
    %94 = tpu.reciprocal %93 {approx = true} : vector<1x256xf32> -> vector<1x256xf32>
    %95 = vector.broadcast %94 : vector<1x256xf32> to vector<64x256xf32>
    %96 = arith.mulf %92, %95 : vector<64x256xf32>
    %97 = arith.truncf %96 : vector<64x256xf32> to vector<64x256xbf16>
    %cst_38 = arith.constant dense<0.000000e+00> : vector<64x256xf32>
    %98 = tpu.matmul %5, %97, %cst_38 {dimension_numbers = #tpu.dot_dimension_numbers<[1], [0], [0], [1], [0, 0, 1, 1], [], []>} : vector<64x64xbf16>, vector<64x256xbf16>, vector<64x256xf32> -> vector<64x256xf32>
    %99 = vector.broadcast %2 : vector<64x1xf32> to vector<64x256xf32>
    %100 = arith.addf %98, %99 : vector<64x256xf32>
    %101 = arith.addf %100, %57 : vector<64x256xf32>
    %c1_39 = arith.constant 1 : index
    %c0_40 = arith.constant 0 : index
    %c0_41 = arith.constant 0 : index
    %102 = vector.load %arg8[%c1_39, %c0_40, %c0_41] : memref<2x64x256xf32, #tpu.memory_space<vmem>>, vector<1x64x256xf32>
    %103 = vector.shape_cast %102 : vector<1x64x256xf32> to vector<64x256xf32>
    %104 = vector.shape_cast %101 : vector<64x256xf32> to vector<1x64x256xf32>
    tpu.vector_store %arg8[%c1_39, %c0_40, %c0_41], %104 {strides = array<i32>} : memref<2x64x256xf32, #tpu.memory_space<vmem>>, vector<1x64x256xf32>,
    return
  }
  func.func @transform_0(%arg0: i32) -> (i32, i32, i32) {
    %c0_i32 = arith.constant 0 : i32
    %c0_i32_0 = arith.constant 0 : i32
    %c0_i32_1 = arith.constant 0 : i32
    %c0_i32_2 = arith.constant 0 : i32
    return %c0_i32, %c0_i32_0, %c0_i32_1 : i32, i32, i32
  }
  func.func @transform_1(%arg0: i32) -> (i32, i32) {
    %c0_i32 = arith.constant 0 : i32
    %c0_i32_0 = arith.constant 0 : i32
    %c0_i32_1 = arith.constant 0 : i32
    return %c0_i32, %c0_i32_0 : i32, i32
  }
  func.func @transform_2(%arg0: i32) -> (i32, i32) {
    %c0_i32 = arith.constant 0 : i32
    %c0_i32_0 = arith.constant 0 : i32
    %c0_i32_1 = arith.constant 0 : i32
    return %c0_i32, %c0_i32_0 : i32, i32
  }
  func.func @transform_3(%arg0: i32) -> (i32, i32) {
    %c0_i32 = arith.constant 0 : i32
    %c0_i32_0 = arith.constant 0 : i32
    %c0_i32_1 = arith.constant 0 : i32
    return %c0_i32, %c0_i32_0 : i32, i32
  }
  func.func @transform_4(%arg0: i32) -> (i32, i32) {
    %c0_i32 = arith.constant 0 : i32
    %c0_i32_0 = arith.constant 0 : i32
    %c0_i32_1 = arith.constant 0 : i32
    return %c0_i32, %c0_i32_0 : i32, i32
  }
  func.func @transform_5(%arg0: i32) -> (i32, i32) {
    %c0_i32 = arith.constant 0 : i32
    %c0_i32_0 = arith.constant 0 : i32
    %c0_i32_1 = arith.constant 0 : i32
    return %c0_i32, %c0_i32_0 : i32, i32
  }
  func.func @transform_6(%arg0: i32) -> (i32, i32) {
    %c0_i32 = arith.constant 0 : i32
    %c0_i32_0 = arith.constant 0 : i32
    %c0_i32_1 = arith.constant 0 : i32
    return %c0_i32, %c0_i32_0 : i32, i32
  }
  func.func @transform_7(%arg0: i32) -> (i32, i32, i32) {
    %c0_i32 = arith.constant 0 : i32
    %c0_i32_0 = arith.constant 0 : i32
    %c0_i32_1 = arith.constant 0 : i32
    %c0_i32_2 = arith.constant 0 : i32
    return %c0_i32, %c0_i32_0, %c0_i32_1 : i32, i32, i32
  }
}

</mosaic_0001>

<llo_original>
// kernel: tpu_custom_call.1
$region0: #{tpu_custom_call.1}
  #allocation0 [shape = 'u32[]', space=smem, size = 0x4, offset = 0x4, fixed_abs, tag = 'smem constant byte address 0x4 - core index']
  #allocation1 [shape = 'u32[144,128]{1,0:T(1,128)}', space=vmem, size = 0x12000, scoped, tag = 'internal scratch']
  %s0 = inlined_call_operand.vmem [shape: f32[2,64,256], index: 0, kind: input, shape index: {}]
  %s1 = inlined_call_operand.vmem [shape: f32[64,1], index: 1, kind: input, shape index: {}]
  %s2 = inlined_call_operand.vmem [shape: f32[64,1], index: 2, kind: input, shape index: {}]
  %s3 = inlined_call_operand.vmem [shape: f32[64,64], index: 3, kind: input, shape index: {}]
  %s4 = inlined_call_operand.vmem [shape: bf16[192,64], index: 4, kind: input, shape index: {}]
  %s5 = inlined_call_operand.vmem [shape: bf16[64,64], index: 5, kind: input, shape index: {}]
  %s6 = inlined_call_operand.vmem [shape: f32[64,1], index: 6, kind: input, shape index: {}]
  %s7 = inlined_call_operand.hbm [shape: f32[2,64,256], index: 7, kind: output, shape index: {}]
  %s8 = sld [smem:[#allocation0]]
  $region38: #{tpu_custom_call.1} parent=0
    _
  %s10 = ssub.s32 1, %s8
  %s11 = scalar_select 0, %s10, %s8
  $region1: #{tpu_custom_call.1} parent=0
    #allocation2 [shape = 'u8[131072]{0}', space=vmem, size = 0x20000, scoped, tag = 'output window, operand 0, single buffered']
    #allocation3 [shape = 's32[1]{0}', space=sflag, size = 0x4, scoped, tag = 'scoped memory for tpu_custom_call.1']
    %12 = vsyncpa [#allocation3], 0
    // Predicated region
    $region2: #{tpu_custom_call.1} parent=1 // pred_check
      _
    $region3: #{tpu_custom_call.1} parent=1 // pred_check_branch
      %14 = sbr.rel (0) target = $region5
    $region4: #{tpu_custom_call.1} parent=1 // pred_region
      _
    $region5: #{tpu_custom_call.1} parent=1 // pred_fallthru
      _
    // Predicated region
    $region6: #{tpu_custom_call.1} parent=1 // pred_check
      _
    $region7: #{tpu_custom_call.1} parent=1 // pred_check_branch
      %16 = sbr.rel (0) target = $region9
    $region8: #{tpu_custom_call.1} parent=1 // pred_region
      _
    $region9: #{tpu_custom_call.1} parent=1 // pred_fallthru
      _
    // Predicated region
    $region10: #{tpu_custom_call.1} parent=1 // pred_check
      _
    $region11: #{tpu_custom_call.1} parent=1 // pred_check_branch
      %18 = sbr.rel (0) target = $region13
    $region12: #{tpu_custom_call.1} parent=1 // pred_region
      _
    $region13: #{tpu_custom_call.1} parent=1 // pred_fallthru
      _
    // Predicated region
    $region14: #{tpu_custom_call.1} parent=1 // pred_check
      _
    $region15: #{tpu_custom_call.1} parent=1 // pred_check_branch
      %20 = sbr.rel (0) target = $region17
    $region16: #{tpu_custom_call.1} parent=1 // pred_region
      _
    $region17: #{tpu_custom_call.1} parent=1 // pred_fallthru
      _
    // Predicated region
    $region18: #{tpu_custom_call.1} parent=1 // pred_check
      _
    $region19: #{tpu_custom_call.1} parent=1 // pred_check_branch
      %22 = sbr.rel (0) target = $region21
    $region20: #{tpu_custom_call.1} parent=1 // pred_region
      _
    $region21: #{tpu_custom_call.1} parent=1 // pred_fallthru
      _
    // Predicated region
    $region22: #{tpu_custom_call.1} parent=1 // pred_check
      _
    $region23: #{tpu_custom_call.1} parent=1 // pred_check_branch
      %24 = sbr.rel (0) target = $region25
    $region24: #{tpu_custom_call.1} parent=1 // pred_region
      _
    $region25: #{tpu_custom_call.1} parent=1 // pred_fallthru
      _
    // Predicated region
    $region26: #{tpu_custom_call.1} parent=1 // pred_check
      _
    $region27: #{tpu_custom_call.1} parent=1 // pred_check_branch
      %26 = sbr.rel (0) target = $region29
    $region28: #{tpu_custom_call.1} parent=1 // pred_region
      _
    $region29: #{tpu_custom_call.1} parent=1 // pred_fallthru
      _
    %v29 = vld [vmem:[%s1] sm:$0xff]
    %v30 = vld [vmem:[%s1 + $0x8] sm:$0xff]
    %v31 = vld [vmem:[%s1 + $0x10] sm:$0xff]
    %v32 = vld [vmem:[%s1 + $0x18] sm:$0xff]
    %v33 = vld [vmem:[%s1 + $0x20] sm:$0xff]
    %v34 = vld [vmem:[%s1 + $0x28] sm:$0xff]
    %v35 = vld [vmem:[%s1 + $0x30] sm:$0xff]
    %v36 = vld [vmem:[%s1 + $0x38] sm:$0xff]
    %v37 = vld [vmem:[%s2] sm:$0xff]
    %v38 = vld [vmem:[%s2 + $0x8] sm:$0xff]
    %v39 = vld [vmem:[%s2 + $0x10] sm:$0xff]
    %v40 = vld [vmem:[%s2 + $0x18] sm:$0xff]
    %v41 = vld [vmem:[%s2 + $0x20] sm:$0xff]
    %v42 = vld [vmem:[%s2 + $0x28] sm:$0xff]
    %v43 = vld [vmem:[%s2 + $0x30] sm:$0xff]
    %v44 = vld [vmem:[%s2 + $0x38] sm:$0xff]
    %v45 = vld [vmem:[%s6] sm:$0xff]
    %v46 = vld [vmem:[%s6 + $0x8] sm:$0xff]
    %v47 = vld [vmem:[%s6 + $0x10] sm:$0xff]
    %v48 = vld [vmem:[%s6 + $0x18] sm:$0xff]
    %v49 = vld [vmem:[%s6 + $0x20] sm:$0xff]
    %v50 = vld [vmem:[%s6 + $0x28] sm:$0xff]
    %v51 = vld [vmem:[%s6 + $0x30] sm:$0xff]
    %v52 = vld [vmem:[%s6 + $0x38] sm:$0xff]
    %v53 = vld [vmem:[%s3] sm:$0xff]
    %v54 = vld [vmem:[%s3 + $0x8] sm:$0xff]
    %v55 = vld [vmem:[%s3 + $0x10] sm:$0xff]
    %v56 = vld [vmem:[%s3 + $0x18] sm:$0xff]
    %v57 = vld [vmem:[%s3 + $0x20] sm:$0xff]
    %v58 = vld [vmem:[%s3 + $0x28] sm:$0xff]
    %v59 = vld [vmem:[%s3 + $0x30] sm:$0xff]
    %v60 = vld [vmem:[%s3 + $0x38] sm:$0xff]
    %v61 = vld [vmem:[%s4] sm:$0xf]
    %v62 = vld [vmem:[%s4 + $0x4] sm:$0xf]
    %v63 = vld [vmem:[%s4 + $0x8] sm:$0xf]
    %v64 = vld [vmem:[%s4 + $0xc] sm:$0xf]
    %v65 = vld [vmem:[%s4 + $0x10] sm:$0xf]
    %v66 = vld [vmem:[%s4 + $0x14] sm:$0xf]
    %v67 = vld [vmem:[%s4 + $0x18] sm:$0xf]
    %v68 = vld [vmem:[%s4 + $0x1c] sm:$0xf]
    %v69 = vld [vmem:[%s4 + $0x20] sm:$0xf]
    %v70 = vld [vmem:[%s4 + $0x24] sm:$0xf]
    %v71 = vld [vmem:[%s4 + $0x28] sm:$0xf]
    %v72 = vld [vmem:[%s4 + $0x2c] sm:$0xf]
    %v73 = vld [vmem:[%s4 + $0x30] sm:$0xf]
    %v74 = vld [vmem:[%s4 + $0x34] sm:$0xf]
    %v75 = vld [vmem:[%s4 + $0x38] sm:$0xf]
    %v76 = vld [vmem:[%s4 + $0x3c] sm:$0xf]
    %v77 = vld [vmem:[%s4 + $0x40] sm:$0xf]
    %v78 = vld [vmem:[%s4 + $0x44] sm:$0xf]
    %v79 = vld [vmem:[%s4 + $0x48] sm:$0xf]
    %v80 = vld [vmem:[%s4 + $0x4c] sm:$0xf]
    %v81 = vld [vmem:[%s4 + $0x50] sm:$0xf]
    %v82 = vld [vmem:[%s4 + $0x54] sm:$0xf]
    %v83 = vld [vmem:[%s4 + $0x58] sm:$0xf]
    %v84 = vld [vmem:[%s4 + $0x5c] sm:$0xf]
    %v85 = vld [vmem:[%s5] sm:$0xf]
    %v86 = vld [vmem:[%s5 + $0x4] sm:$0xf]
    %v87 = vld [vmem:[%s5 + $0x8] sm:$0xf]
    %v88 = vld [vmem:[%s5 + $0xc] sm:$0xf]
    %v89 = vld [vmem:[%s5 + $0x10] sm:$0xf]
    %v90 = vld [vmem:[%s5 + $0x14] sm:$0xf]
    %v91 = vld [vmem:[%s5 + $0x18] sm:$0xf]
    %v92 = vld [vmem:[%s5 + $0x1c] sm:$0xf]
    %v93 = vld [vmem:[%s0] sm:$0xff]
    %v94 = vld [vmem:[%s0 + $0x8] sm:$0xff]
    %v95 = vld [vmem:[%s0 + $0x10] sm:$0xff]
    %v96 = vld [vmem:[%s0 + $0x18] sm:$0xff]
    %v97 = vld [vmem:[%s0 + $0x20] sm:$0xff]
    %v98 = vld [vmem:[%s0 + $0x28] sm:$0xff]
    %v99 = vld [vmem:[%s0 + $0x30] sm:$0xff]
    %v100 = vld [vmem:[%s0 + $0x38] sm:$0xff]
    %v101 = vld [vmem:[%s0 + $0x40] sm:$0xff]
    %v102 = vld [vmem:[%s0 + $0x48] sm:$0xff]
    %v103 = vld [vmem:[%s0 + $0x50] sm:$0xff]
    %v104 = vld [vmem:[%s0 + $0x58] sm:$0xff]
    %v105 = vld [vmem:[%s0 + $0x60] sm:$0xff]
    %v106 = vld [vmem:[%s0 + $0x68] sm:$0xff]
    %v107 = vld [vmem:[%s0 + $0x70] sm:$0xff]
    %v108 = vld [vmem:[%s0 + $0x78] sm:$0xff]
    %v109 = vadd.f32 %v93, %v94
    %110 = vadd.xlane.f32.xlu0 %v109
    %v111 = vpop.xlane.xlu0 %110
    %v112 = vadd.f32 %v95, %v96
    %113 = vadd.xlane.f32.xlu0 %v112
    %v114 = vpop.xlane.xlu0 %113
    %v115 = vadd.f32 %v97, %v98
    %116 = vadd.xlane.f32.xlu0 %v115
    %v117 = vpop.xlane.xlu0 %116
    %v118 = vadd.f32 %v99, %v100
    %119 = vadd.xlane.f32.xlu0 %v118
    %v120 = vpop.xlane.xlu0 %119
    %v121 = vadd.f32 %v101, %v102
    %122 = vadd.xlane.f32.xlu0 %v121
    %v123 = vpop.xlane.xlu0 %122
    %v124 = vadd.f32 %v103, %v104
    %125 = vadd.xlane.f32.xlu0 %v124
    %v126 = vpop.xlane.xlu0 %125
    %v127 = vadd.f32 %v105, %v106
    %128 = vadd.xlane.f32.xlu0 %v127
    %v129 = vpop.xlane.xlu0 %128
    %v130 = vadd.f32 %v107, %v108
    %131 = vadd.xlane.f32.xlu0 %v130
    %v132 = vpop.xlane.xlu0 %131
    %v133 = vmul.f32 %v93, %v93
    %v134 = vmul.f32 %v94, %v94
    %v135 = vmul.f32 %v95, %v95
    %v136 = vmul.f32 %v96, %v96
    %v137 = vmul.f32 %v97, %v97
    %v138 = vmul.f32 %v98, %v98
    %v139 = vmul.f32 %v99, %v99
    %v140 = vmul.f32 %v100, %v100
    %v141 = vmul.f32 %v101, %v101
    %v142 = vmul.f32 %v102, %v102
    %v143 = vmul.f32 %v103, %v103
    %v144 = vmul.f32 %v104, %v104
    %v145 = vmul.f32 %v105, %v105
    %v146 = vmul.f32 %v106, %v106
    %v147 = vmul.f32 %v107, %v107
    %v148 = vmul.f32 %v108, %v108
    %v149 = vadd.f32 %v133, %v134
    %150 = vadd.xlane.f32.xlu0 %v149
    %v151 = vpop.xlane.xlu0 %150
    %v152 = vadd.f32 %v135, %v136
    %153 = vadd.xlane.f32.xlu0 %v152
    %v154 = vpop.xlane.xlu0 %153
    %v155 = vadd.f32 %v137, %v138
    %156 = vadd.xlane.f32.xlu0 %v155
    %v157 = vpop.xlane.xlu0 %156
    %v158 = vadd.f32 %v139, %v140
    %159 = vadd.xlane.f32.xlu0 %v158
    %v160 = vpop.xlane.xlu0 %159
    %v161 = vadd.f32 %v141, %v142
    %162 = vadd.xlane.f32.xlu0 %v161
    %v163 = vpop.xlane.xlu0 %162
    %v164 = vadd.f32 %v143, %v144
    %165 = vadd.xlane.f32.xlu0 %v164
    %v166 = vpop.xlane.xlu0 %165
    %v167 = vadd.f32 %v145, %v146
    %168 = vadd.xlane.f32.xlu0 %v167
    %v169 = vpop.xlane.xlu0 %168
    %v170 = vadd.f32 %v147, %v148
    %171 = vadd.xlane.f32.xlu0 %v170
    %v172 = vpop.xlane.xlu0 %171
    %vm173 = vcmask 7168
    %v174 = vsel %vm173, %v111, %v151
    %v175 = vsel %vm173, %v114, %v154
    %v176 = vsel %vm173, %v117, %v157
    %v177 = vsel %vm173, %v120, %v160
    %v178 = vsel %vm173, %v123, %v163
    %v179 = vsel %vm173, %v126, %v166
    %v180 = vsel %vm173, %v129, %v169
    %v181 = vsel %vm173, %v132, %v172
    %vm182 = vcmask 523264
    %v184 = vsel %vm182, %v53, 0
    %v187 = vsel %vm182, %v54, 0
    %v190 = vsel %vm182, %v55, 0
    %v193 = vsel %vm182, %v56, 0
    %v196 = vsel %vm182, %v57, 0
    %v199 = vsel %vm182, %v58, 0
    %v202 = vsel %vm182, %v59, 0
    %v205 = vsel %vm182, %v60, 0
    %207 = vmatprep.subr.mxu0 0.0
    %208 = vmatpush1.msra.mxu0 %v174
    %209 = vmatprep.subr.mxu0 0.0
    %210 = vmatpush1.msra.mxu0 %v175
    %211 = vmatprep.subr.mxu0 0.0
    %212 = vmatpush1.msra.mxu0 %v176
    %213 = vmatprep.subr.mxu0 0.0
    %214 = vmatpush1.msra.mxu0 %v177
    %215 = vmatprep.subr.mxu0 0.0
    %216 = vmatpush1.msra.mxu0 %v178
    %217 = vmatprep.subr.mxu0 0.0
    %218 = vmatpush1.msra.mxu0 %v179
    %219 = vmatprep.subr.mxu0 0.0
    %220 = vmatpush1.msra.mxu0 %v180
    %221 = vmatprep.subr.mxu0 0.0
    %222 = vmatpush1.msra.mxu0 %v181
    %223 = vmatprep.subr.mxu0 0.0
    %224 = vmatpush1.msra.mxu0 0.0
    %225 = vmatprep.subr.mxu0 0.0
    %226 = vmatpush1.msra.mxu0 0.0
    %227 = vmatprep.subr.mxu0 0.0
    %228 = vmatpush1.msra.mxu0 0.0
    %229 = vmatprep.subr.mxu0 0.0
    %230 = vmatpush1.msra.mxu0 0.0
    %231 = vmatprep.subr.mxu0 0.0
    %232 = vmatpush1.msra.mxu0 0.0
    %233 = vmatprep.subr.mxu0 0.0
    %234 = vmatpush1.msra.mxu0 0.0
    %235 = vmatprep.subr.mxu0 0.0
    %236 = vmatpush1.msra.mxu0 0.0
    %237 = vmatprep.subr.mxu0 0.0
    %238 = vmatpush1.msra.mxu0 0.0
    %239 = vmatprep.subr.mxu0 0.0
    %240 = vmatpush1.msra.mxu0 0.0
    %241 = vmatprep.subr.mxu0 0.0
    %242 = vmatpush1.msra.mxu0 0.0
    %243 = vmatprep.subr.mxu0 0.0
    %244 = vmatpush1.msra.mxu0 0.0
    %245 = vmatprep.subr.mxu0 0.0
    %246 = vmatpush1.msra.mxu0 0.0
    %247 = vmatprep.subr.mxu0 0.0
    %248 = vmatpush1.msra.mxu0 0.0
    %249 = vmatprep.subr.mxu0 0.0
    %250 = vmatpush1.msra.mxu0 0.0
    %251 = vmatprep.subr.mxu0 0.0
    %252 = vmatpush1.msra.mxu0 0.0
    %253 = vmatprep.subr.mxu0 0.0
    %254 = vmatpush1.msra.mxu0 0.0
    %255 = vmatprep.subr.mxu0 0.0
    %256 = vmatpush1.msra.mxu0 0.0
    %257 = vmatprep.subr.mxu0 0.0
    %258 = vmatpush1.msra.mxu0 0.0
    %259 = vmatprep.subr.mxu0 0.0
    %260 = vmatpush1.msra.mxu0 0.0
    %261 = vmatprep.subr.mxu0 0.0
    %262 = vmatpush1.msra.mxu0 0.0
    %263 = vmatprep.subr.mxu0 0.0
    %264 = vmatpush1.msra.mxu0 0.0
    %265 = vmatprep.subr.mxu0 0.0
    %266 = vmatpush1.msra.mxu0 0.0
    %267 = vmatprep.subr.mxu0 0.0
    %268 = vmatpush1.msra.mxu0 0.0
    %269 = vmatprep.subr.mxu0 0.0
    %270 = vmatpush1.msra.mxu0 0.0
    %271 = vmatprep.mubr.f32.mxu0 0.0
    %272 = vmatmul.mubr.f32.gmra.mrb[0].mxu0 %v184
    %v273 = vpop.f32.mrb[0].mxu0
    %v274 = vadd.f32 0.0, %v273
    %v275 = vpop.f32.mrb[0].mxu0
    %276 = vmatprep.mubr.f32.mxu0 0.0
    %277 = vmatmul.mubr.f32.gmra.mrb[0].mxu0 %v187
    %v278 = vpop.f32.mrb[0].mxu0
    %v279 = vadd.f32 0.0, %v278
    %v280 = vpop.f32.mrb[0].mxu0
    %281 = vmatprep.mubr.f32.mxu0 0.0
    %282 = vmatmul.mubr.f32.gmra.mrb[0].mxu0 %v190
    %v283 = vpop.f32.mrb[0].mxu0
    %v284 = vadd.f32 0.0, %v283
    %v285 = vpop.f32.mrb[0].mxu0
    %286 = vmatprep.mubr.f32.mxu0 0.0
    %287 = vmatmul.mubr.f32.gmra.mrb[0].mxu0 %v193
    %v288 = vpop.f32.mrb[0].mxu0
    %v289 = vadd.f32 0.0, %v288
    %v290 = vpop.f32.mrb[0].mxu0
    %291 = vmatprep.mubr.f32.mxu0 0.0
    %292 = vmatmul.mubr.f32.gmra.mrb[0].mxu0 %v196
    %v293 = vpop.f32.mrb[0].mxu0
    %v294 = vadd.f32 0.0, %v293
    %v295 = vpop.f32.mrb[0].mxu0
    %296 = vmatprep.mubr.f32.mxu0 0.0
    %297 = vmatmul.mubr.f32.gmra.mrb[0].mxu0 %v199
    %v298 = vpop.f32.mrb[0].mxu0
    %v299 = vadd.f32 0.0, %v298
    %v300 = vpop.f32.mrb[0].mxu0
    %301 = vmatprep.mubr.f32.mxu0 0.0
    %302 = vmatmul.mubr.f32.gmra.mrb[0].mxu0 %v202
    %v303 = vpop.f32.mrb[0].mxu0
    %v304 = vadd.f32 0.0, %v303
    %v305 = vpop.f32.mrb[0].mxu0
    %306 = vmatprep.mubr.f32.mxu0 0.0
    %307 = vmatmul.mubr.f32.gmra.mrb[0].mxu0 %v205
    %v308 = vpop.f32.mrb[0].mxu0
    %v309 = vadd.f32 0.0, %v308
    %v310 = vpop.f32.mrb[0].mxu0
    %311 = vdwg.mxu0
    %v312 = vmul.f32 %v274, %v274
    %v313 = vmul.f32 %v279, %v279
    %v314 = vmul.f32 %v284, %v284
    %v315 = vmul.f32 %v289, %v289
    %v316 = vmul.f32 %v294, %v294
    %v317 = vmul.f32 %v299, %v299
    %v318 = vmul.f32 %v304, %v304
    %v319 = vmul.f32 %v309, %v309
    %328 = vrot.lane.b32.xlu0 %v312, 1
    %v329 = vpop.permute.xlu0 %328
    %330 = vrot.lane.b32.xlu0 %v313, 1
    %v331 = vpop.permute.xlu0 %330
    %332 = vrot.lane.b32.xlu0 %v314, 1
    %v333 = vpop.permute.xlu0 %332
    %334 = vrot.lane.b32.xlu0 %v315, 1
    %v335 = vpop.permute.xlu0 %334
    %336 = vrot.lane.b32.xlu0 %v316, 1
    %v337 = vpop.permute.xlu0 %336
    %338 = vrot.lane.b32.xlu0 %v317, 1
    %v339 = vpop.permute.xlu0 %338
    %340 = vrot.lane.b32.xlu0 %v318, 1
    %v341 = vpop.permute.xlu0 %340
    %342 = vrot.lane.b32.xlu0 %v319, 1
    %v343 = vpop.permute.xlu0 %342
    %v352 = vsub.f32 %v274, %v329
    %v353 = vsub.f32 %v279, %v331
    %v354 = vsub.f32 %v284, %v333
    %v355 = vsub.f32 %v289, %v335
    %v356 = vsub.f32 %v294, %v337
    %v357 = vsub.f32 %v299, %v339
    %v358 = vsub.f32 %v304, %v341
    %v359 = vsub.f32 %v309, %v343
    %361 = vset.pattern.permute.xlu0 0
    %362 = vperm.xlu0 %361, %v274
    %v363 = vpop.permute.xlu0 %362
    %366 = vset.pattern.permute.xlu0 0
    %367 = vperm.xlu0 %366, %v279
    %v368 = vpop.permute.xlu0 %367
    %371 = vset.pattern.permute.xlu0 0
    %372 = vperm.xlu0 %371, %v284
    %v373 = vpop.permute.xlu0 %372
    %376 = vset.pattern.permute.xlu0 0
    %377 = vperm.xlu0 %376, %v289
    %v378 = vpop.permute.xlu0 %377
    %381 = vset.pattern.permute.xlu0 0
    %382 = vperm.xlu0 %381, %v294
    %v383 = vpop.permute.xlu0 %382
    %386 = vset.pattern.permute.xlu0 0
    %387 = vperm.xlu0 %386, %v299
    %v388 = vpop.permute.xlu0 %387
    %391 = vset.pattern.permute.xlu0 0
    %392 = vperm.xlu0 %391, %v304
    %v393 = vpop.permute.xlu0 %392
    %396 = vset.pattern.permute.xlu0 0
    %397 = vperm.xlu0 %396, %v309
    %v398 = vpop.permute.xlu0 %397
    %v400 = vsub.f32 %v93, %v363
    %v401 = vsub.f32 %v94, %v363
    %v402 = vsub.f32 %v95, %v368
    %v403 = vsub.f32 %v96, %v368
    %v404 = vsub.f32 %v97, %v373
    %v405 = vsub.f32 %v98, %v373
    %v406 = vsub.f32 %v99, %v378
    %v407 = vsub.f32 %v100, %v378
    %v408 = vsub.f32 %v101, %v383
    %v409 = vsub.f32 %v102, %v383
    %v410 = vsub.f32 %v103, %v388
    %v411 = vsub.f32 %v104, %v388
    %v412 = vsub.f32 %v105, %v393
    %v413 = vsub.f32 %v106, %v393
    %v414 = vsub.f32 %v107, %v398
    %v415 = vsub.f32 %v108, %v398
    %v416 = vadd.f32 %v352, 1e-05
    %v417 = vadd.f32 %v353, 1e-05
    %v418 = vadd.f32 %v354, 1e-05
    %v419 = vadd.f32 %v355, 1e-05
    %v420 = vadd.f32 %v356, 1e-05
    %v421 = vadd.f32 %v357, 1e-05
    %v422 = vadd.f32 %v358, 1e-05
    %v423 = vadd.f32 %v359, 1e-05
    %v424 = vrsqrt.pop %v416
    %v425 = vrsqrt.pop %v417
    %v426 = vrsqrt.pop %v418
    %v427 = vrsqrt.pop %v419
    %v428 = vrsqrt.pop %v420
    %v429 = vrsqrt.pop %v421
    %v430 = vrsqrt.pop %v422
    %v431 = vrsqrt.pop %v423
    %440 = vrot.lane.b32.xlu0 %v29, 1
    %v441 = vpop.permute.xlu0 %440
    %442 = vrot.lane.b32.xlu0 %v30, 1
    %v443 = vpop.permute.xlu0 %442
    %444 = vrot.lane.b32.xlu0 %v31, 1
    %v445 = vpop.permute.xlu0 %444
    %446 = vrot.lane.b32.xlu0 %v32, 1
    %v447 = vpop.permute.xlu0 %446
    %448 = vrot.lane.b32.xlu0 %v33, 1
    %v449 = vpop.permute.xlu0 %448
    %450 = vrot.lane.b32.xlu0 %v34, 1
    %v451 = vpop.permute.xlu0 %450
    %452 = vrot.lane.b32.xlu0 %v35, 1
    %v453 = vpop.permute.xlu0 %452
    %454 = vrot.lane.b32.xlu0 %v36, 1
    %v455 = vpop.permute.xlu0 %454
    %v464 = vmul.f32 %v424, %v441
    %v465 = vmul.f32 %v425, %v443
    %v466 = vmul.f32 %v426, %v445
    %v467 = vmul.f32 %v427, %v447
    %v468 = vmul.f32 %v428, %v449
    %v469 = vmul.f32 %v429, %v451
    %v470 = vmul.f32 %v430, %v453
    %v471 = vmul.f32 %v431, %v455
    %473 = vset.pattern.permute.xlu0 1
    %474 = vperm.xlu0 %473, %v464
    %v475 = vpop.permute.xlu0 %474
    %478 = vset.pattern.permute.xlu0 1
    %479 = vperm.xlu0 %478, %v465
    %v480 = vpop.permute.xlu0 %479
    %483 = vset.pattern.permute.xlu0 1
    %484 = vperm.xlu0 %483, %v466
    %v485 = vpop.permute.xlu0 %484
    %488 = vset.pattern.permute.xlu0 1
    %489 = vperm.xlu0 %488, %v467
    %v490 = vpop.permute.xlu0 %489
    %493 = vset.pattern.permute.xlu0 1
    %494 = vperm.xlu0 %493, %v468
    %v495 = vpop.permute.xlu0 %494
    %498 = vset.pattern.permute.xlu0 1
    %499 = vperm.xlu0 %498, %v469
    %v500 = vpop.permute.xlu0 %499
    %503 = vset.pattern.permute.xlu0 1
    %504 = vperm.xlu0 %503, %v470
    %v505 = vpop.permute.xlu0 %504
    %508 = vset.pattern.permute.xlu0 1
    %509 = vperm.xlu0 %508, %v471
    %v510 = vpop.permute.xlu0 %509
    %v512 = vmul.f32 %v400, %v475
    %v513 = vmul.f32 %v401, %v475
    %v514 = vmul.f32 %v402, %v480
    %v515 = vmul.f32 %v403, %v480
    %v516 = vmul.f32 %v404, %v485
    %v517 = vmul.f32 %v405, %v485
    %v518 = vmul.f32 %v406, %v490
    %v519 = vmul.f32 %v407, %v490
    %v520 = vmul.f32 %v408, %v495
    %v521 = vmul.f32 %v409, %v495
    %v522 = vmul.f32 %v410, %v500
    %v523 = vmul.f32 %v411, %v500
    %v524 = vmul.f32 %v412, %v505
    %v525 = vmul.f32 %v413, %v505
    %v526 = vmul.f32 %v414, %v510
    %v527 = vmul.f32 %v415, %v510
    %529 = vset.pattern.permute.xlu0 0
    %530 = vperm.xlu0 %529, %v37
    %v531 = vpop.permute.xlu0 %530
    %534 = vset.pattern.permute.xlu0 0
    %535 = vperm.xlu0 %534, %v38
    %v536 = vpop.permute.xlu0 %535
    %539 = vset.pattern.permute.xlu0 0
    %540 = vperm.xlu0 %539, %v39
    %v541 = vpop.permute.xlu0 %540
    %544 = vset.pattern.permute.xlu0 0
    %545 = vperm.xlu0 %544, %v40
    %v546 = vpop.permute.xlu0 %545
    %549 = vset.pattern.permute.xlu0 0
    %550 = vperm.xlu0 %549, %v41
    %v551 = vpop.permute.xlu0 %550
    %554 = vset.pattern.permute.xlu0 0
    %555 = vperm.xlu0 %554, %v42
    %v556 = vpop.permute.xlu0 %555
    %559 = vset.pattern.permute.xlu0 0
    %560 = vperm.xlu0 %559, %v43
    %v561 = vpop.permute.xlu0 %560
    %564 = vset.pattern.permute.xlu0 0
    %565 = vperm.xlu0 %564, %v44
    %v566 = vpop.permute.xlu0 %565
    %v568 = vadd.f32 %v512, %v531
    %v569 = vadd.f32 %v513, %v531
    %v570 = vadd.f32 %v514, %v536
    %v571 = vadd.f32 %v515, %v536
    %v572 = vadd.f32 %v516, %v541
    %v573 = vadd.f32 %v517, %v541
    %v574 = vadd.f32 %v518, %v546
    %v575 = vadd.f32 %v519, %v546
    %v576 = vadd.f32 %v520, %v551
    %v577 = vadd.f32 %v521, %v551
    %v578 = vadd.f32 %v522, %v556
    %v579 = vadd.f32 %v523, %v556
    %v580 = vadd.f32 %v524, %v561
    %v581 = vadd.f32 %v525, %v561
    %v582 = vadd.f32 %v526, %v566
    %v583 = vadd.f32 %v527, %v566
    %v584 = vpack.c.bf16 %v570, %v568
    %v585 = vpack.c.bf16 %v571, %v569
    %v586 = vpack.c.bf16 %v574, %v572
    %v587 = vpack.c.bf16 %v575, %v573
    %v588 = vpack.c.bf16 %v578, %v576
    %v589 = vpack.c.bf16 %v579, %v577
    %v590 = vpack.c.bf16 %v582, %v580
    %v591 = vpack.c.bf16 %v583, %v581
    %v616 = vunpack.c.l.b16 %v61
    %v617 = vunpack.c.l.b16 %v62
    %v618 = vunpack.c.l.b16 %v63
    %v619 = vunpack.c.l.b16 %v64
    %v620 = vunpack.c.l.b16 %v65
    %v621 = vunpack.c.l.b16 %v66
    %v622 = vunpack.c.l.b16 %v67
    %v623 = vunpack.c.l.b16 %v68
    %v624 = vunpack.c.l.b16 %v69
    %v625 = vunpack.c.l.b16 %v70
    %v626 = vunpack.c.l.b16 %v71
    %v627 = vunpack.c.l.b16 %v72
    %v628 = vunpack.c.l.b16 %v73
    %v629 = vunpack.c.l.b16 %v74
    %v630 = vunpack.c.l.b16 %v75
    %v631 = vunpack.c.l.b16 %v76
    %v632 = vunpack.c.l.b16 %v77
    %v633 = vunpack.c.l.b16 %v78
    %v634 = vunpack.c.l.b16 %v79
    %v635 = vunpack.c.l.b16 %v80
    %v636 = vunpack.c.l.b16 %v81
    %v637 = vunpack.c.l.b16 %v82
    %v638 = vunpack.c.l.b16 %v83
    %v639 = vunpack.c.l.b16 %v84
    %v640 = vpack.c.b16 %v617, %v616
    %v641 = vpack.c.b16 %v619, %v618
    %v642 = vpack.c.b16 %v621, %v620
    %v643 = vpack.c.b16 %v623, %v622
    %v644 = vpack.c.b16 %v625, %v624
    %v645 = vpack.c.b16 %v627, %v626
    %v646 = vpack.c.b16 %v629, %v628
    %v647 = vpack.c.b16 %v631, %v630
    %v648 = vpack.c.b16 %v633, %v632
    %v649 = vpack.c.b16 %v635, %v634
    %v650 = vpack.c.b16 %v637, %v636
    %v651 = vpack.c.b16 %v639, %v638
    %v653 = vsel %vm182, %v640, 0
    %v656 = vsel %vm182, %v641, 0
    %v659 = vsel %vm182, %v642, 0
    %v662 = vsel %vm182, %v643, 0
    %v665 = vsel %vm182, %v644, 0
    %v668 = vsel %vm182, %v645, 0
    %v671 = vsel %vm182, %v646, 0
    %v674 = vsel %vm182, %v647, 0
    %v677 = vsel %vm182, %v648, 0
    %v680 = vsel %vm182, %v649, 0
    %v683 = vsel %vm182, %v650, 0
    %v686 = vsel %vm182, %v651, 0
    %688 = vmatprep.subr.bf16.mxu0 %v585
    %689 = vmatpush1.bf16.msra.mxu0 %v584
    %690 = vmatprep.subr.bf16.mxu0 %v587
    %691 = vmatpush1.bf16.msra.mxu0 %v586
    %692 = vmatprep.subr.bf16.mxu0 %v589
    %693 = vmatpush1.bf16.msra.mxu0 %v588
    %694 = vmatprep.subr.bf16.mxu0 %v591
    %695 = vmatpush1.bf16.msra.mxu0 %v590
    %696 = vmatprep.subr.bf16.mxu0 0
    %697 = vmatpush1.bf16.msra.mxu0 0
    %698 = vmatprep.subr.bf16.mxu0 0
    %699 = vmatpush1.bf16.msra.mxu0 0
    %700 = vmatprep.subr.bf16.mxu0 0
    %701 = vmatpush1.bf16.msra.mxu0 0
    %702 = vmatprep.subr.bf16.mxu0 0
    %703 = vmatpush1.bf16.msra.mxu0 0
    %704 = vmatprep.subr.bf16.mxu0 0
    %705 = vmatpush1.bf16.msra.mxu0 0
    %706 = vmatprep.subr.bf16.mxu0 0
    %707 = vmatpush1.bf16.msra.mxu0 0
    %708 = vmatprep.subr.bf16.mxu0 0
    %709 = vmatpush1.bf16.msra.mxu0 0
    %710 = vmatprep.subr.bf16.mxu0 0
    %711 = vmatpush1.bf16.msra.mxu0 0
    %712 = vmatprep.subr.bf16.mxu0 0
    %713 = vmatpush1.bf16.msra.mxu0 0
    %714 = vmatprep.subr.bf16.mxu0 0
    %715 = vmatpush1.bf16.msra.mxu0 0
    %716 = vmatprep.subr.bf16.mxu0 0
    %717 = vmatpush1.bf16.msra.mxu0 0
    %718 = vmatprep.subr.bf16.mxu0 0
    %719 = vmatpush1.bf16.msra.mxu0 0
    %720 = vmatprep.mubr.bf16.mxu0 0
    %721 = vmatmul.mubr.bf16.gmra.mrb[0].mxu0 %v653
    %v722 = vpop.f32.mrb[0].mxu0
    %v723 = vadd.f32 0.0, %v722
    %v724 = vpop.f32.mrb[0].mxu0
    %v725 = vadd.f32 0.0, %v724
    %v726 = vpop.f32.mrb[0].mxu0
    %v727 = vadd.f32 0.0, %v726
    %v728 = vpop.f32.mrb[0].mxu0
    %v729 = vadd.f32 0.0, %v728
    %730 = vmatprep.mubr.bf16.mxu0 0
    %731 = vmatmul.mubr.bf16.gmra.mrb[0].mxu0 %v656
    %v732 = vpop.f32.mrb[0].mxu0
    %v733 = vadd.f32 0.0, %v732
    %v734 = vpop.f32.mrb[0].mxu0
    %v735 = vadd.f32 0.0, %v734
    %v736 = vpop.f32.mrb[0].mxu0
    %v737 = vadd.f32 0.0, %v736
    %v738 = vpop.f32.mrb[0].mxu0
    %v739 = vadd.f32 0.0, %v738
    %740 = vmatprep.mubr.bf16.mxu0 0
    %741 = vmatmul.mubr.bf16.gmra.mrb[0].mxu0 %v659
    %v742 = vpop.f32.mrb[0].mxu0
    %v743 = vadd.f32 0.0, %v742
    %v744 = vpop.f32.mrb[0].mxu0
    %v745 = vadd.f32 0.0, %v744
    %v746 = vpop.f32.mrb[0].mxu0
    %v747 = vadd.f32 0.0, %v746
    %v748 = vpop.f32.mrb[0].mxu0
    %v749 = vadd.f32 0.0, %v748
    %750 = vmatprep.mubr.bf16.mxu0 0
    %751 = vmatmul.mubr.bf16.gmra.mrb[0].mxu0 %v662
    %v752 = vpop.f32.mrb[0].mxu0
    %v753 = vadd.f32 0.0, %v752
    %v754 = vpop.f32.mrb[0].mxu0
    %v755 = vadd.f32 0.0, %v754
    %v756 = vpop.f32.mrb[0].mxu0
    %v757 = vadd.f32 0.0, %v756
    %v758 = vpop.f32.mrb[0].mxu0
    %v759 = vadd.f32 0.0, %v758
    %760 = vmatprep.mubr.bf16.mxu0 0
    %761 = vmatmul.mubr.bf16.gmra.mrb[0].mxu0 %v665
    %v762 = vpop.f32.mrb[0].mxu0
    %v763 = vadd.f32 0.0, %v762
    %v764 = vpop.f32.mrb[0].mxu0
    %v765 = vadd.f32 0.0, %v764
    %v766 = vpop.f32.mrb[0].mxu0
    %v767 = vadd.f32 0.0, %v766
    %v768 = vpop.f32.mrb[0].mxu0
    %v769 = vadd.f32 0.0, %v768
    %770 = vmatprep.mubr.bf16.mxu0 0
    %771 = vmatmul.mubr.bf16.gmra.mrb[0].mxu0 %v668
    %v772 = vpop.f32.mrb[0].mxu0
    %v773 = vadd.f32 0.0, %v772
    %v774 = vpop.f32.mrb[0].mxu0
    %v775 = vadd.f32 0.0, %v774
    %v776 = vpop.f32.mrb[0].mxu0
    %v777 = vadd.f32 0.0, %v776
    %v778 = vpop.f32.mrb[0].mxu0
    %v779 = vadd.f32 0.0, %v778
    %780 = vmatprep.mubr.bf16.mxu0 0
    %781 = vmatmul.mubr.bf16.gmra.mrb[0].mxu0 %v671
    %v782 = vpop.f32.mrb[0].mxu0
    %v783 = vadd.f32 0.0, %v782
    %v784 = vpop.f32.mrb[0].mxu0
    %v785 = vadd.f32 0.0, %v784
    %v786 = vpop.f32.mrb[0].mxu0
    %v787 = vadd.f32 0.0, %v786
    %v788 = vpop.f32.mrb[0].mxu0
    %v789 = vadd.f32 0.0, %v788
    %790 = vmatprep.mubr.bf16.mxu0 0
    %791 = vmatmul.mubr.bf16.gmra.mrb[0].mxu0 %v674
    %v792 = vpop.f32.mrb[0].mxu0
    %v793 = vadd.f32 0.0, %v792
    %v794 = vpop.f32.mrb[0].mxu0
    %v795 = vadd.f32 0.0, %v794
    %v796 = vpop.f32.mrb[0].mxu0
    %v797 = vadd.f32 0.0, %v796
    %v798 = vpop.f32.mrb[0].mxu0
    %v799 = vadd.f32 0.0, %v798
    %800 = vmatprep.mubr.bf16.mxu0 0
    %801 = vmatmul.mubr.bf16.gmra.mrb[0].mxu0 %v677
    %v802 = vpop.f32.mrb[0].mxu0
    %v803 = vadd.f32 0.0, %v802
    %v804 = vpop.f32.mrb[0].mxu0
    %v805 = vadd.f32 0.0, %v804
    %v806 = vpop.f32.mrb[0].mxu0
    %v807 = vadd.f32 0.0, %v806
    %v808 = vpop.f32.mrb[0].mxu0
    %v809 = vadd.f32 0.0, %v808
    %810 = vmatprep.mubr.bf16.mxu0 0
    %811 = vmatmul.mubr.bf16.gmra.mrb[0].mxu0 %v680
    %v812 = vpop.f32.mrb[0].mxu0
    %v813 = vadd.f32 0.0, %v812
    %v814 = vpop.f32.mrb[0].mxu0
    %v815 = vadd.f32 0.0, %v814
    %v816 = vpop.f32.mrb[0].mxu0
    %v817 = vadd.f32 0.0, %v816
    %v818 = vpop.f32.mrb[0].mxu0
    %v819 = vadd.f32 0.0, %v818
    %820 = vmatprep.mubr.bf16.mxu0 0
    %821 = vmatmul.mubr.bf16.gmra.mrb[0].mxu0 %v683
    %v822 = vpop.f32.mrb[0].mxu0
    %v823 = vadd.f32 0.0, %v822
    %v824 = vpop.f32.mrb[0].mxu0
    %v825 = vadd.f32 0.0, %v824
    %v826 = vpop.f32.mrb[0].mxu0
    %v827 = vadd.f32 0.0, %v826
    %v828 = vpop.f32.mrb[0].mxu0
    %v829 = vadd.f32 0.0, %v828
    %830 = vmatprep.mubr.bf16.mxu0 0
    %831 = vmatmul.mubr.bf16.gmra.mrb[0].mxu0 %v686
    %v832 = vpop.f32.mrb[0].mxu0
    %v833 = vadd.f32 0.0, %v832
    %v834 = vpop.f32.mrb[0].mxu0
    %v835 = vadd.f32 0.0, %v834
    %v836 = vpop.f32.mrb[0].mxu0
    %v837 = vadd.f32 0.0, %v836
    %v838 = vpop.f32.mrb[0].mxu0
    %v839 = vadd.f32 0.0, %v838
    %840 = vdwg.mxu0
    %v841 = vpack.c.bf16 %v727, %v723
    %v842 = vpack.c.bf16 %v729, %v725
    %v843 = vpack.c.bf16 %v737, %v733
    %v844 = vpack.c.bf16 %v739, %v735
    %v845 = vpack.c.bf16 %v747, %v743
    %v846 = vpack.c.bf16 %v749, %v745
    %v847 = vpack.c.bf16 %v757, %v753
    %v848 = vpack.c.bf16 %v759, %v755
    %v849 = vpack.c.bf16 %v767, %v763
    %v850 = vpack.c.bf16 %v769, %v765
    %v851 = vpack.c.bf16 %v777, %v773
    %v852 = vpack.c.bf16 %v779, %v775
    %v853 = vpack.c.bf16 %v787, %v783
    %v854 = vpack.c.bf16 %v789, %v785
    %v855 = vpack.c.bf16 %v797, %v793
    %v856 = vpack.c.bf16 %v799, %v795
    %v857 = vpack.c.bf16 %v807, %v803
    %v858 = vpack.c.bf16 %v809, %v805
    %v859 = vpack.c.bf16 %v817, %v813
    %v860 = vpack.c.bf16 %v819, %v815
    %v861 = vpack.c.bf16 %v827, %v823
    %v862 = vpack.c.bf16 %v829, %v825
    %v863 = vpack.c.bf16 %v837, %v833
    %v864 = vpack.c.bf16 %v839, %v835
    %865 = vxpose.xlu0.c.b16.start [1/8] %v841, 128
    %866 = vxpose.xlu0.c.b16.cont [2/8] %v843, 128
    %867 = vxpose.xlu0.c.b16.cont [3/8] %v845, 128
    %868 = vxpose.xlu0.c.b16.cont [4/8] %v847, 128
    %869 = vxpose.xlu0.c.b16.cont [5/8] 0, 128
    %870 = vxpose.xlu0.c.b16.cont [6/8] 0, 128
    %871 = vxpose.xlu0.c.b16.cont [7/8] 0, 128
    %872 = vxpose.xlu0.c.b16.end [8/8] 0, 128
    %v873 = vpop.trf.xlu0
    %v874 = vpop.trf.xlu0
    %v875 = vpop.trf.xlu0
    %v876 = vpop.trf.xlu0
    %v877 = vpop.trf.xlu0
    %v878 = vpop.trf.xlu0
    %v879 = vpop.trf.xlu0
    %v880 = vpop.trf.xlu0
    %881 = vxpose.xlu0.c.b16.start [1/8] %v842, 128
    %882 = vxpose.xlu0.c.b16.cont [2/8] %v844, 128
    %883 = vxpose.xlu0.c.b16.cont [3/8] %v846, 128
    %884 = vxpose.xlu0.c.b16.cont [4/8] %v848, 128
    %885 = vxpose.xlu0.c.b16.cont [5/8] 0, 128
    %886 = vxpose.xlu0.c.b16.cont [6/8] 0, 128
    %887 = vxpose.xlu0.c.b16.cont [7/8] 0, 128
    %888 = vxpose.xlu0.c.b16.end [8/8] 0, 128
    %v889 = vpop.trf.xlu0
    %v890 = vpop.trf.xlu0
    %v891 = vpop.trf.xlu0
    %v892 = vpop.trf.xlu0
    %v893 = vpop.trf.xlu0
    %v894 = vpop.trf.xlu0
    %v895 = vpop.trf.xlu0
    %v896 = vpop.trf.xlu0
    %v898 = vsel %vm182, %v873, 0
    %v901 = vsel %vm182, %v874, 0
    %v904 = vsel %vm182, %v875, 0
    %v907 = vsel %vm182, %v876, 0
    %v910 = vsel %vm182, %v877, 0
    %v913 = vsel %vm182, %v878, 0
    %v916 = vsel %vm182, %v879, 0
    %v919 = vsel %vm182, %v880, 0
    %v922 = vsel %vm182, %v889, 0
    %v925 = vsel %vm182, %v890, 0
    %v928 = vsel %vm182, %v891, 0
    %v931 = vsel %vm182, %v892, 0
    %v934 = vsel %vm182, %v893, 0
    %v937 = vsel %vm182, %v894, 0
    %v940 = vsel %vm182, %v895, 0
    %v943 = vsel %vm182, %v896, 0
    %945 = vmatprep.subr.bf16.mxu0 %v850
    %946 = vmatpush1.bf16.msra.mxu0 %v849
    %947 = vmatprep.subr.bf16.mxu0 %v852
    %948 = vmatpush1.bf16.msra.mxu0 %v851
    %949 = vmatprep.subr.bf16.mxu0 %v854
    %950 = vmatpush1.bf16.msra.mxu0 %v853
    %951 = vmatprep.subr.bf16.mxu0 %v856
    %952 = vmatpush1.bf16.msra.mxu0 %v855
    %953 = vmatprep.subr.bf16.mxu0 0
    %954 = vmatpush1.bf16.msra.mxu0 0
    %955 = vmatprep.subr.bf16.mxu0 0
    %956 = vmatpush1.bf16.msra.mxu0 0
    %957 = vmatprep.subr.bf16.mxu0 0
    %958 = vmatpush1.bf16.msra.mxu0 0
    %959 = vmatprep.subr.bf16.mxu0 0
    %960 = vmatpush1.bf16.msra.mxu0 0
    %961 = vmatprep.subr.bf16.mxu0 0
    %962 = vmatpush1.bf16.msra.mxu0 0
    %963 = vmatprep.subr.bf16.mxu0 0
    %964 = vmatpush1.bf16.msra.mxu0 0
    %965 = vmatprep.subr.bf16.mxu0 0
    %966 = vmatpush1.bf16.msra.mxu0 0
    %967 = vmatprep.subr.bf16.mxu0 0
    %968 = vmatpush1.bf16.msra.mxu0 0
    %969 = vmatprep.subr.bf16.mxu0 0
    %970 = vmatpush1.bf16.msra.mxu0 0
    %971 = vmatprep.subr.bf16.mxu0 0
    %972 = vmatpush1.bf16.msra.mxu0 0
    %973 = vmatprep.subr.bf16.mxu0 0
    %974 = vmatpush1.bf16.msra.mxu0 0
    %975 = vmatprep.subr.bf16.mxu0 0
    %976 = vmatpush1.bf16.msra.mxu0 0
    %977 = vmatprep.mubr.bf16.mxu0 0
    %978 = vmatmul.mubr.bf16.gmra.mrb[0].mxu0 %v898
    %v979 = vpop.f32.mrb[0].mxu0
    %v980 = vadd.f32 0.0, %v979
    %v981 = vpop.f32.mrb[0].mxu0
    %v982 = vadd.f32 0.0, %v981
    %v983 = vpop.f32.mrb[0].mxu0
    %v984 = vadd.f32 0.0, %v983
    %v985 = vpop.f32.mrb[0].mxu0
    %v986 = vadd.f32 0.0, %v985
    %987 = vmatprep.mubr.bf16.mxu0 0
    %988 = vmatmul.mubr.bf16.gmra.mrb[0].mxu0 %v901
    %v989 = vpop.f32.mrb[0].mxu0
    %v990 = vadd.f32 0.0, %v989
    %v991 = vpop.f32.mrb[0].mxu0
    %v992 = vadd.f32 0.0, %v991
    %v993 = vpop.f32.mrb[0].mxu0
    %v994 = vadd.f32 0.0, %v993
    %v995 = vpop.f32.mrb[0].mxu0
    %v996 = vadd.f32 0.0, %v995
    %997 = vmatprep.mubr.bf16.mxu0 0
    %998 = vmatmul.mubr.bf16.gmra.mrb[0].mxu0 %v904
    %v999 = vpop.f32.mrb[0].mxu0
    %v1000 = vadd.f32 0.0, %v999
    %v1001 = vpop.f32.mrb[0].mxu0
    %v1002 = vadd.f32 0.0, %v1001
    %v1003 = vpop.f32.mrb[0].mxu0
    %v1004 = vadd.f32 0.0, %v1003
    %v1005 = vpop.f32.mrb[0].mxu0
    %v1006 = vadd.f32 0.0, %v1005
    %1007 = vmatprep.mubr.bf16.mxu0 0
    %1008 = vmatmul.mubr.bf16.gmra.mrb[0].mxu0 %v907
    %v1009 = vpop.f32.mrb[0].mxu0
    %v1010 = vadd.f32 0.0, %v1009
    %v1011 = vpop.f32.mrb[0].mxu0
    %v1012 = vadd.f32 0.0, %v1011
    %v1013 = vpop.f32.mrb[0].mxu0
    %v1014 = vadd.f32 0.0, %v1013
    %v1015 = vpop.f32.mrb[0].mxu0
    %v1016 = vadd.f32 0.0, %v1015
    %1017 = vmatprep.mubr.bf16.mxu0 0
    %1018 = vmatmul.mubr.bf16.gmra.mrb[0].mxu0 %v910
    %v1019 = vpop.f32.mrb[0].mxu0
    %v1020 = vadd.f32 0.0, %v1019
    %v1021 = vpop.f32.mrb[0].mxu0
    %v1022 = vadd.f32 0.0, %v1021
    %v1023 = vpop.f32.mrb[0].mxu0
    %v1024 = vadd.f32 0.0, %v1023
    %v1025 = vpop.f32.mrb[0].mxu0
    %v1026 = vadd.f32 0.0, %v1025
    %1027 = vmatprep.mubr.bf16.mxu0 0
    %1028 = vmatmul.mubr.bf16.gmra.mrb[0].mxu0 %v913
    %v1029 = vpop.f32.mrb[0].mxu0
    %v1030 = vadd.f32 0.0, %v1029
    %v1031 = vpop.f32.mrb[0].mxu0
    %v1032 = vadd.f32 0.0, %v1031
    %v1033 = vpop.f32.mrb[0].mxu0
    %v1034 = vadd.f32 0.0, %v1033
    %v1035 = vpop.f32.mrb[0].mxu0
    %v1036 = vadd.f32 0.0, %v1035
    %1037 = vmatprep.mubr.bf16.mxu0 0
    %1038 = vmatmul.mubr.bf16.gmra.mrb[0].mxu0 %v916
    %v1039 = vpop.f32.mrb[0].mxu0
    %v1040 = vadd.f32 0.0, %v1039
    %v1041 = vpop.f32.mrb[0].mxu0
    %v1042 = vadd.f32 0.0, %v1041
    %v1043 = vpop.f32.mrb[0].mxu0
    %v1044 = vadd.f32 0.0, %v1043
    %v1045 = vpop.f32.mrb[0].mxu0
    %v1046 = vadd.f32 0.0, %v1045
    %1047 = vmatprep.mubr.bf16.mxu0 0
    %1048 = vmatmul.mubr.bf16.gmra.mrb[0].mxu0 %v919
    %v1049 = vpop.f32.mrb[0].mxu0
    %v1050 = vadd.f32 0.0, %v1049
    %v1051 = vpop.f32.mrb[0].mxu0
    %v1052 = vadd.f32 0.0, %v1051
    %v1053 = vpop.f32.mrb[0].mxu0
    %v1054 = vadd.f32 0.0, %v1053
    %v1055 = vpop.f32.mrb[0].mxu0
    %v1056 = vadd.f32 0.0, %v1055
    %1057 = vmatprep.mubr.bf16.mxu0 0
    %1058 = vmatmul.mubr.bf16.gmra.mrb[0].mxu0 %v922
    %v1059 = vpop.f32.mrb[0].mxu0
    %v1060 = vadd.f32 0.0, %v1059
    %v1061 = vpop.f32.mrb[0].mxu0
    %v1062 = vadd.f32 0.0, %v1061
    %v1063 = vpop.f32.mrb[0].mxu0
    %v1064 = vadd.f32 0.0, %v1063
    %v1065 = vpop.f32.mrb[0].mxu0
    %v1066 = vadd.f32 0.0, %v1065
    %1067 = vmatprep.mubr.bf16.mxu0 0
    %1068 = vmatmul.mubr.bf16.gmra.mrb[0].mxu0 %v925
    %v1069 = vpop.f32.mrb[0].mxu0
    %v1070 = vadd.f32 0.0, %v1069
    %v1071 = vpop.f32.mrb[0].mxu0
    %v1072 = vadd.f32 0.0, %v1071
    %v1073 = vpop.f32.mrb[0].mxu0
    %v1074 = vadd.f32 0.0, %v1073
    %v1075 = vpop.f32.mrb[0].mxu0
    %v1076 = vadd.f32 0.0, %v1075
    %1077 = vmatprep.mubr.bf16.mxu0 0
    %1078 = vmatmul.mubr.bf16.gmra.mrb[0].mxu0 %v928
    %v1079 = vpop.f32.mrb[0].mxu0
    %v1080 = vadd.f32 0.0, %v1079
    %v1081 = vpop.f32.mrb[0].mxu0
    %v1082 = vadd.f32 0.0, %v1081
    %v1083 = vpop.f32.mrb[0].mxu0
    %v1084 = vadd.f32 0.0, %v1083
    %v1085 = vpop.f32.mrb[0].mxu0
    %v1086 = vadd.f32 0.0, %v1085
    %1087 = vmatprep.mubr.bf16.mxu0 0
    %1088 = vmatmul.mubr.bf16.gmra.mrb[0].mxu0 %v931
    %v1089 = vpop.f32.mrb[0].mxu0
    %v1090 = vadd.f32 0.0, %v1089
    %v1091 = vpop.f32.mrb[0].mxu0
    %v1092 = vadd.f32 0.0, %v1091
    %v1093 = vpop.f32.mrb[0].mxu0
    %v1094 = vadd.f32 0.0, %v1093
    %v1095 = vpop.f32.mrb[0].mxu0
    %v1096 = vadd.f32 0.0, %v1095
    %1097 = vmatprep.mubr.bf16.mxu0 0
    %1098 = vmatmul.mubr.bf16.gmra.mrb[0].mxu0 %v934
    %v1099 = vpop.f32.mrb[0].mxu0
    %v1100 = vadd.f32 0.0, %v1099
    %v1101 = vpop.f32.mrb[0].mxu0
    %v1102 = vadd.f32 0.0, %v1101
    %v1103 = vpop.f32.mrb[0].mxu0
    %v1104 = vadd.f32 0.0, %v1103
    %v1105 = vpop.f32.mrb[0].mxu0
    %v1106 = vadd.f32 0.0, %v1105
    %1107 = vmatprep.mubr.bf16.mxu0 0
    %1108 = vmatmul.mubr.bf16.gmra.mrb[0].mxu0 %v937
    %v1109 = vpop.f32.mrb[0].mxu0
    %v1110 = vadd.f32 0.0, %v1109
    %v1111 = vpop.f32.mrb[0].mxu0
    %v1112 = vadd.f32 0.0, %v1111
    %v1113 = vpop.f32.mrb[0].mxu0
    %v1114 = vadd.f32 0.0, %v1113
    %v1115 = vpop.f32.mrb[0].mxu0
    %v1116 = vadd.f32 0.0, %v1115
    %1117 = vmatprep.mubr.bf16.mxu0 0
    %1118 = vmatmul.mubr.bf16.gmra.mrb[0].mxu0 %v940
    %v1119 = vpop.f32.mrb[0].mxu0
    %v1120 = vadd.f32 0.0, %v1119
    %v1121 = vpop.f32.mrb[0].mxu0
    %v1122 = vadd.f32 0.0, %v1121
    %v1123 = vpop.f32.mrb[0].mxu0
    %v1124 = vadd.f32 0.0, %v1123
    %v1125 = vpop.f32.mrb[0].mxu0
    %v1126 = vadd.f32 0.0, %v1125
    %1127 = vmatprep.mubr.bf16.mxu0 0
    %1128 = vmatmul.mubr.bf16.gmra.mrb[0].mxu0 %v943
    %v1129 = vpop.f32.mrb[0].mxu0
    %v1130 = vadd.f32 0.0, %v1129
    %v1131 = vpop.f32.mrb[0].mxu0
    %v1132 = vadd.f32 0.0, %v1131
    %v1133 = vpop.f32.mrb[0].mxu0
    %v1134 = vadd.f32 0.0, %v1133
    %v1135 = vpop.f32.mrb[0].mxu0
    %v1136 = vadd.f32 0.0, %v1135
    %1137 = vdwg.mxu0
    %v1138 = vmax.f32 %v980, %v982
    %1139 = vmax.xlane.f32.xlu0 %v1138
    %v1140 = vpop.xlane.xlu0 %1139
    %v1141 = vmax.f32 %v984, %v986
    %1142 = vmax.xlane.f32.xlu0 %v1141
    %v1143 = vpop.xlane.xlu0 %1142
    %v1144 = vmax.f32 %v990, %v992
    %1145 = vmax.xlane.f32.xlu0 %v1144
    %v1146 = vpop.xlane.xlu0 %1145
    %v1147 = vmax.f32 %v994, %v996
    %1148 = vmax.xlane.f32.xlu0 %v1147
    %v1149 = vpop.xlane.xlu0 %1148
    %v1150 = vmax.f32 %v1000, %v1002
    %1151 = vmax.xlane.f32.xlu0 %v1150
    %v1152 = vpop.xlane.xlu0 %1151
    %v1153 = vmax.f32 %v1004, %v1006
    %1154 = vmax.xlane.f32.xlu0 %v1153
    %v1155 = vpop.xlane.xlu0 %1154
    %v1156 = vmax.f32 %v1010, %v1012
    %1157 = vmax.xlane.f32.xlu0 %v1156
    %v1158 = vpop.xlane.xlu0 %1157
    %v1159 = vmax.f32 %v1014, %v1016
    %1160 = vmax.xlane.f32.xlu0 %v1159
    %v1161 = vpop.xlane.xlu0 %1160
    %v1162 = vmax.f32 %v1020, %v1022
    %1163 = vmax.xlane.f32.xlu0 %v1162
    %v1164 = vpop.xlane.xlu0 %1163
    %v1165 = vmax.f32 %v1024, %v1026
    %1166 = vmax.xlane.f32.xlu0 %v1165
    %v1167 = vpop.xlane.xlu0 %1166
    %v1168 = vmax.f32 %v1030, %v1032
    %1169 = vmax.xlane.f32.xlu0 %v1168
    %v1170 = vpop.xlane.xlu0 %1169
    %v1171 = vmax.f32 %v1034, %v1036
    %1172 = vmax.xlane.f32.xlu0 %v1171
    %v1173 = vpop.xlane.xlu0 %1172
    %v1174 = vmax.f32 %v1040, %v1042
    %1175 = vmax.xlane.f32.xlu0 %v1174
    %v1176 = vpop.xlane.xlu0 %1175
    %v1177 = vmax.f32 %v1044, %v1046
    %1178 = vmax.xlane.f32.xlu0 %v1177
    %v1179 = vpop.xlane.xlu0 %1178
    %v1180 = vmax.f32 %v1050, %v1052
    %1181 = vmax.xlane.f32.xlu0 %v1180
    %v1182 = vpop.xlane.xlu0 %1181
    %v1183 = vmax.f32 %v1054, %v1056
    %1184 = vmax.xlane.f32.xlu0 %v1183
    %v1185 = vpop.xlane.xlu0 %1184
    %v1186 = vmax.f32 %v1060, %v1062
    %1187 = vmax.xlane.f32.xlu0 %v1186
    %v1188 = vpop.xlane.xlu0 %1187
    %v1189 = vmax.f32 %v1064, %v1066
    %1190 = vmax.xlane.f32.xlu0 %v1189
    %v1191 = vpop.xlane.xlu0 %1190
    %v1192 = vmax.f32 %v1070, %v1072
    %1193 = vmax.xlane.f32.xlu0 %v1192
    %v1194 = vpop.xlane.xlu0 %1193
    %v1195 = vmax.f32 %v1074, %v1076
    %1196 = vmax.xlane.f32.xlu0 %v1195
    %v1197 = vpop.xlane.xlu0 %1196
    %v1198 = vmax.f32 %v1080, %v1082
    %1199 = vmax.xlane.f32.xlu0 %v1198
    %v1200 = vpop.xlane.xlu0 %1199
    %v1201 = vmax.f32 %v1084, %v1086
    %1202 = vmax.xlane.f32.xlu0 %v1201
    %v1203 = vpop.xlane.xlu0 %1202
    %v1204 = vmax.f32 %v1090, %v1092
    %1205 = vmax.xlane.f32.xlu0 %v1204
    %v1206 = vpop.xlane.xlu0 %1205
    %v1207 = vmax.f32 %v1094, %v1096
    %1208 = vmax.xlane.f32.xlu0 %v1207
    %v1209 = vpop.xlane.xlu0 %1208
    %v1210 = vmax.f32 %v1100, %v1102
    %1211 = vmax.xlane.f32.xlu0 %v1210
    %v1212 = vpop.xlane.xlu0 %1211
    %v1213 = vmax.f32 %v1104, %v1106
    %1214 = vmax.xlane.f32.xlu0 %v1213
    %v1215 = vpop.xlane.xlu0 %1214
    %v1216 = vmax.f32 %v1110, %v1112
    %1217 = vmax.xlane.f32.xlu0 %v1216
    %v1218 = vpop.xlane.xlu0 %1217
    %v1219 = vmax.f32 %v1114, %v1116
    %1220 = vmax.xlane.f32.xlu0 %v1219
    %v1221 = vpop.xlane.xlu0 %1220
    %v1222 = vmax.f32 %v1120, %v1122
    %1223 = vmax.xlane.f32.xlu0 %v1222
    %v1224 = vpop.xlane.xlu0 %1223
    %v1225 = vmax.f32 %v1124, %v1126
    %1226 = vmax.xlane.f32.xlu0 %v1225
    %v1227 = vpop.xlane.xlu0 %1226
    %v1228 = vmax.f32 %v1130, %v1132
    %1229 = vmax.xlane.f32.xlu0 %v1228
    %v1230 = vpop.xlane.xlu0 %1229
    %v1231 = vmax.f32 %v1134, %v1136
    %1232 = vmax.xlane.f32.xlu0 %v1231
    %v1233 = vpop.xlane.xlu0 %1232
    %v1234 = vsub.f32 %v980, %v1140
    %v1235 = vsub.f32 %v982, %v1140
    %v1236 = vsub.f32 %v984, %v1143
    %v1237 = vsub.f32 %v986, %v1143
    %v1238 = vsub.f32 %v990, %v1146
    %v1239 = vsub.f32 %v992, %v1146
    %v1240 = vsub.f32 %v994, %v1149
    %v1241 = vsub.f32 %v996, %v1149
    %v1242 = vsub.f32 %v1000, %v1152
    %v1243 = vsub.f32 %v1002, %v1152
    %v1244 = vsub.f32 %v1004, %v1155
    %v1245 = vsub.f32 %v1006, %v1155
    %v1246 = vsub.f32 %v1010, %v1158
    %v1247 = vsub.f32 %v1012, %v1158
    %v1248 = vsub.f32 %v1014, %v1161
    %v1249 = vsub.f32 %v1016, %v1161
    %v1250 = vsub.f32 %v1020, %v1164
    %v1251 = vsub.f32 %v1022, %v1164
    %v1252 = vsub.f32 %v1024, %v1167
    %v1253 = vsub.f32 %v1026, %v1167
    %v1254 = vsub.f32 %v1030, %v1170
    %v1255 = vsub.f32 %v1032, %v1170
    %v1256 = vsub.f32 %v1034, %v1173
    %v1257 = vsub.f32 %v1036, %v1173
    %v1258 = vsub.f32 %v1040, %v1176
    %v1259 = vsub.f32 %v1042, %v1176
    %v1260 = vsub.f32 %v1044, %v1179
    %v1261 = vsub.f32 %v1046, %v1179
    %v1262 = vsub.f32 %v1050, %v1182
    %v1263 = vsub.f32 %v1052, %v1182
    %v1264 = vsub.f32 %v1054, %v1185
    %v1265 = vsub.f32 %v1056, %v1185
    %v1266 = vsub.f32 %v1060, %v1188
    %v1267 = vsub.f32 %v1062, %v1188
    %v1268 = vsub.f32 %v1064, %v1191
    %v1269 = vsub.f32 %v1066, %v1191
    %v1270 = vsub.f32 %v1070, %v1194
    %v1271 = vsub.f32 %v1072, %v1194
    %v1272 = vsub.f32 %v1074, %v1197
    %v1273 = vsub.f32 %v1076, %v1197
    %v1274 = vsub.f32 %v1080, %v1200
    %v1275 = vsub.f32 %v1082, %v1200
    %v1276 = vsub.f32 %v1084, %v1203
    %v1277 = vsub.f32 %v1086, %v1203
    %v1278 = vsub.f32 %v1090, %v1206
    %v1279 = vsub.f32 %v1092, %v1206
    %v1280 = vsub.f32 %v1094, %v1209
    %v1281 = vsub.f32 %v1096, %v1209
    %v1282 = vsub.f32 %v1100, %v1212
    %v1283 = vsub.f32 %v1102, %v1212
    %v1284 = vsub.f32 %v1104, %v1215
    %v1285 = vsub.f32 %v1106, %v1215
    %v1286 = vsub.f32 %v1110, %v1218
    %v1287 = vsub.f32 %v1112, %v1218
    %v1288 = vsub.f32 %v1114, %v1221
    %v1289 = vsub.f32 %v1116, %v1221
    %v1290 = vsub.f32 %v1120, %v1224
    %v1291 = vsub.f32 %v1122, %v1224
    %v1292 = vsub.f32 %v1124, %v1227
    %v1293 = vsub.f32 %v1126, %v1227
    %v1294 = vsub.f32 %v1130, %v1230
    %v1295 = vsub.f32 %v1132, %v1230
    %v1296 = vsub.f32 %v1134, %v1233
    %v1297 = vsub.f32 %v1136, %v1233
    %v1298 = vmul.f32 %v1234, 1.442695
    %v1299 = vpow.pop %v1298
    %v1300 = vmul.f32 %v1235, 1.442695
    %v1301 = vpow.pop %v1300
    %v1302 = vmul.f32 %v1236, 1.442695
    %v1303 = vpow.pop %v1302
    %v1304 = vmul.f32 %v1237, 1.442695
    %v1305 = vpow.pop %v1304
    %v1306 = vmul.f32 %v1238, 1.442695
    %v1307 = vpow.pop %v1306
    %v1308 = vmul.f32 %v1239, 1.442695
    %v1309 = vpow.pop %v1308
    %v1310 = vmul.f32 %v1240, 1.442695
    %v1311 = vpow.pop %v1310
    %v1312 = vmul.f32 %v1241, 1.442695
    %v1313 = vpow.pop %v1312
    %v1314 = vmul.f32 %v1242, 1.442695
    %v1315 = vpow.pop %v1314
    %v1316 = vmul.f32 %v1243, 1.442695
    %v1317 = vpow.pop %v1316
    %v1318 = vmul.f32 %v1244, 1.442695
    %v1319 = vpow.pop %v1318
    %v1320 = vmul.f32 %v1245, 1.442695
    %v1321 = vpow.pop %v1320
    %v1322 = vmul.f32 %v1246, 1.442695
    %v1323 = vpow.pop %v1322
    %v1324 = vmul.f32 %v1247, 1.442695
    %v1325 = vpow.pop %v1324
    %v1326 = vmul.f32 %v1248, 1.442695
    %v1327 = vpow.pop %v1326
    %v1328 = vmul.f32 %v1249, 1.442695
    %v1329 = vpow.pop %v1328
    %v1330 = vmul.f32 %v1250, 1.442695
    %v1331 = vpow.pop %v1330
    %v1332 = vmul.f32 %v1251, 1.442695
    %v1333 = vpow.pop %v1332
    %v1334 = vmul.f32 %v1252, 1.442695
    %v1335 = vpow.pop %v1334
    %v1336 = vmul.f32 %v1253, 1.442695
    %v1337 = vpow.pop %v1336
    %v1338 = vmul.f32 %v1254, 1.442695
    %v1339 = vpow.pop %v1338
    %v1340 = vmul.f32 %v1255, 1.442695
    %v1341 = vpow.pop %v1340
    %v1342 = vmul.f32 %v1256, 1.442695
    %v1343 = vpow.pop %v1342
    %v1344 = vmul.f32 %v1257, 1.442695
    %v1345 = vpow.pop %v1344
    %v1346 = vmul.f32 %v1258, 1.442695
    %v1347 = vpow.pop %v1346
    %v1348 = vmul.f32 %v1259, 1.442695
    %v1349 = vpow.pop %v1348
    %v1350 = vmul.f32 %v1260, 1.442695
    %v1351 = vpow.pop %v1350
    %v1352 = vmul.f32 %v1261, 1.442695
    %v1353 = vpow.pop %v1352
    %v1354 = vmul.f32 %v1262, 1.442695
    %v1355 = vpow.pop %v1354
    %v1356 = vmul.f32 %v1263, 1.442695
    %v1357 = vpow.pop %v1356
    %v1358 = vmul.f32 %v1264, 1.442695
    %v1359 = vpow.pop %v1358
    %v1360 = vmul.f32 %v1265, 1.442695
    %v1361 = vpow.pop %v1360
    %v1362 = vmul.f32 %v1266, 1.442695
    %v1363 = vpow.pop %v1362
    %v1364 = vmul.f32 %v1267, 1.442695
    %v1365 = vpow.pop %v1364
    %v1366 = vmul.f32 %v1268, 1.442695
    %v1367 = vpow.pop %v1366
    %v1368 = vmul.f32 %v1269, 1.442695
    %v1369 = vpow.pop %v1368
    %v1370 = vmul.f32 %v1270, 1.442695
    %v1371 = vpow.pop %v1370
    %v1372 = vmul.f32 %v1271, 1.442695
    %v1373 = vpow.pop %v1372
    %v1374 = vmul.f32 %v1272, 1.442695
    %v1375 = vpow.pop %v1374
    %v1376 = vmul.f32 %v1273, 1.442695
    %v1377 = vpow.pop %v1376
    %v1378 = vmul.f32 %v1274, 1.442695
    %v1379 = vpow.pop %v1378
    %v1380 = vmul.f32 %v1275, 1.442695
    %v1381 = vpow.pop %v1380
    %v1382 = vmul.f32 %v1276, 1.442695
    %v1383 = vpow.pop %v1382
    %v1384 = vmul.f32 %v1277, 1.442695
    %v1385 = vpow.pop %v1384
    %v1386 = vmul.f32 %v1278, 1.442695
    %v1387 = vpow.pop %v1386
    %v1388 = vmul.f32 %v1279, 1.442695
    %v1389 = vpow.pop %v1388
    %v1390 = vmul.f32 %v1280, 1.442695
    %v1391 = vpow.pop %v1390
    %v1392 = vmul.f32 %v1281, 1.442695
    %v1393 = vpow.pop %v1392
    %v1394 = vmul.f32 %v1282, 1.442695
    %v1395 = vpow.pop %v1394
    %v1396 = vmul.f32 %v1283, 1.442695
    %v1397 = vpow.pop %v1396
    %v1398 = vmul.f32 %v1284, 1.442695
    %v1399 = vpow.pop %v1398
    %v1400 = vmul.f32 %v1285, 1.442695
    %v1401 = vpow.pop %v1400
    %v1402 = vmul.f32 %v1286, 1.442695
    %v1403 = vpow.pop %v1402
    %v1404 = vmul.f32 %v1287, 1.442695
    %v1405 = vpow.pop %v1404
    %v1406 = vmul.f32 %v1288, 1.442695
    %v1407 = vpow.pop %v1406
    %v1408 = vmul.f32 %v1289, 1.442695
    %v1409 = vpow.pop %v1408
    %v1410 = vmul.f32 %v1290, 1.442695
    %v1411 = vpow.pop %v1410
    %v1412 = vmul.f32 %v1291, 1.442695
    %v1413 = vpow.pop %v1412
    %v1414 = vmul.f32 %v1292, 1.442695
    %v1415 = vpow.pop %v1414
    %v1416 = vmul.f32 %v1293, 1.442695
    %v1417 = vpow.pop %v1416
    %v1418 = vmul.f32 %v1294, 1.442695
    %v1419 = vpow.pop %v1418
    %v1420 = vmul.f32 %v1295, 1.442695
    %v1421 = vpow.pop %v1420
    %v1422 = vmul.f32 %v1296, 1.442695
    %v1423 = vpow.pop %v1422
    %v1424 = vmul.f32 %v1297, 1.442695
    %v1425 = vpow.pop %v1424
    %v1426 = vpack.c.bf16 %v1303, %v1299
    %v1427 = vpack.c.bf16 %v1305, %v1301
    %v1428 = vpack.c.bf16 %v1311, %v1307
    %v1429 = vpack.c.bf16 %v1313, %v1309
    %v1430 = vpack.c.bf16 %v1319, %v1315
    %v1431 = vpack.c.bf16 %v1321, %v1317
    %v1432 = vpack.c.bf16 %v1327, %v1323
    %v1433 = vpack.c.bf16 %v1329, %v1325
    %v1434 = vpack.c.bf16 %v1335, %v1331
    %v1435 = vpack.c.bf16 %v1337, %v1333
    %v1436 = vpack.c.bf16 %v1343, %v1339
    %v1437 = vpack.c.bf16 %v1345, %v1341
    %v1438 = vpack.c.bf16 %v1351, %v1347
    %v1439 = vpack.c.bf16 %v1353, %v1349
    %v1440 = vpack.c.bf16 %v1359, %v1355
    %v1441 = vpack.c.bf16 %v1361, %v1357
    %v1442 = vpack.c.bf16 %v1367, %v1363
    %v1443 = vpack.c.bf16 %v1369, %v1365
    %v1444 = vpack.c.bf16 %v1375, %v1371
    %v1445 = vpack.c.bf16 %v1377, %v1373
    %v1446 = vpack.c.bf16 %v1383, %v1379
    %v1447 = vpack.c.bf16 %v1385, %v1381
    %v1448 = vpack.c.bf16 %v1391, %v1387
    %v1449 = vpack.c.bf16 %v1393, %v1389
    %v1450 = vpack.c.bf16 %v1399, %v1395
    %v1451 = vpack.c.bf16 %v1401, %v1397
    %v1452 = vpack.c.bf16 %v1407, %v1403
    %v1453 = vpack.c.bf16 %v1409, %v1405
    %v1454 = vpack.c.bf16 %v1415, %v1411
    %v1455 = vpack.c.bf16 %v1417, %v1413
    %v1456 = vpack.c.bf16 %v1423, %v1419
    %v1457 = vpack.c.bf16 %v1425, %v1421
    %1458 = vmatprep.subr.bf16.mxu0 %v1427
    %1459 = vmatpush1.bf16.xpose.msra.mxu0 %v1426
    %1460 = vmatprep.subr.bf16.mxu0 %v1429
    %1461 = vmatpush1.bf16.xpose.msra.mxu0 %v1428
    %1462 = vmatprep.subr.bf16.mxu0 %v1431
    %1463 = vmatpush1.bf16.xpose.msra.mxu0 %v1430
    %1464 = vmatprep.subr.bf16.mxu0 %v1433
    %1465 = vmatpush1.bf16.xpose.msra.mxu0 %v1432
    %1466 = vmatprep.subr.bf16.mxu0 %v1435
    %1467 = vmatpush1.bf16.xpose.msra.mxu0 %v1434
    %1468 = vmatprep.subr.bf16.mxu0 %v1437
    %1469 = vmatpush1.bf16.xpose.msra.mxu0 %v1436
    %1470 = vmatprep.subr.bf16.mxu0 %v1439
    %1471 = vmatpush1.bf16.xpose.msra.mxu0 %v1438
    %1472 = vmatprep.subr.bf16.mxu0 %v1441
    %1473 = vmatpush1.bf16.xpose.msra.mxu0 %v1440
    %1474 = vmatprep.subr.bf16.mxu0 %v1443
    %1475 = vmatpush1.bf16.xpose.msra.mxu0 %v1442
    %1476 = vmatprep.subr.bf16.mxu0 %v1445
    %1477 = vmatpush1.bf16.xpose.msra.mxu0 %v1444
    %1478 = vmatprep.subr.bf16.mxu0 %v1447
    %1479 = vmatpush1.bf16.xpose.msra.mxu0 %v1446
    %1480 = vmatprep.subr.bf16.mxu0 %v1449
    %1481 = vmatpush1.bf16.xpose.msra.mxu0 %v1448
    %1482 = vmatprep.subr.bf16.mxu0 %v1451
    %1483 = vmatpush1.bf16.xpose.msra.mxu0 %v1450
    %1484 = vmatprep.subr.bf16.mxu0 %v1453
    %1485 = vmatpush1.bf16.xpose.msra.mxu0 %v1452
    %1486 = vmatprep.subr.bf16.mxu0 %v1455
    %1487 = vmatpush1.bf16.xpose.msra.mxu0 %v1454
    %1488 = vmatprep.subr.bf16.mxu0 %v1457
    %1489 = vmatpush1.bf16.xpose.msra.mxu0 %v1456
    %1490 = vmatprep.mubr.bf16.mxu0 %v858
    %1491 = vmatmul.mubr.bf16.gmra.mrb[0].mxu0 %v857
    %v1492 = vpop.f32.mrb[0].mxu0
    %v1493 = vadd.f32 0.0, %v1492
    %v1494 = vpop.f32.mrb[0].mxu0
    %v1495 = vadd.f32 0.0, %v1494
    %v1496 = vpop.f32.mrb[0].mxu0
    %v1497 = vadd.f32 0.0, %v1496
    %v1498 = vpop.f32.mrb[0].mxu0
    %v1499 = vadd.f32 0.0, %v1498
    %1500 = vmatprep.mubr.bf16.mxu0 %v860
    %1501 = vmatmul.mubr.bf16.gmra.mrb[0].mxu0 %v859
    %v1502 = vpop.f32.mrb[0].mxu0
    %v1503 = vadd.f32 0.0, %v1502
    %v1504 = vpop.f32.mrb[0].mxu0
    %v1505 = vadd.f32 0.0, %v1504
    %v1506 = vpop.f32.mrb[0].mxu0
    %v1507 = vadd.f32 0.0, %v1506
    %v1508 = vpop.f32.mrb[0].mxu0
    %v1509 = vadd.f32 0.0, %v1508
    %1510 = vmatprep.mubr.bf16.mxu0 %v862
    %1511 = vmatmul.mubr.bf16.gmra.mrb[0].mxu0 %v861
    %v1512 = vpop.f32.mrb[0].mxu0
    %v1513 = vadd.f32 0.0, %v1512
    %v1514 = vpop.f32.mrb[0].mxu0
    %v1515 = vadd.f32 0.0, %v1514
    %v1516 = vpop.f32.mrb[0].mxu0
    %v1517 = vadd.f32 0.0, %v1516
    %v1518 = vpop.f32.mrb[0].mxu0
    %v1519 = vadd.f32 0.0, %v1518
    %1520 = vmatprep.mubr.bf16.mxu0 %v864
    %1521 = vmatmul.mubr.bf16.gmra.mrb[0].mxu0 %v863
    %v1522 = vpop.f32.mrb[0].mxu0
    %v1523 = vadd.f32 0.0, %v1522
    %v1524 = vpop.f32.mrb[0].mxu0
    %v1525 = vadd.f32 0.0, %v1524
    %v1526 = vpop.f32.mrb[0].mxu0
    %v1527 = vadd.f32 0.0, %v1526
    %v1528 = vpop.f32.mrb[0].mxu0
    %v1529 = vadd.f32 0.0, %v1528
    %1530 = vdwg.mxu0
    %1531 = vmatprep.subr.bf16.mxu0 %v1427
    %1532 = vmatpush1.bf16.xpose.msra.mxu0 %v1426
    %1533 = vmatprep.subr.bf16.mxu0 %v1429
    %1534 = vmatpush1.bf16.xpose.msra.mxu0 %v1428
    %1535 = vmatprep.subr.bf16.mxu0 %v1431
    %1536 = vmatpush1.bf16.xpose.msra.mxu0 %v1430
    %1537 = vmatprep.subr.bf16.mxu0 %v1433
    %1538 = vmatpush1.bf16.xpose.msra.mxu0 %v1432
    %1539 = vmatprep.subr.bf16.mxu0 %v1435
    %1540 = vmatpush1.bf16.xpose.msra.mxu0 %v1434
    %1541 = vmatprep.subr.bf16.mxu0 %v1437
    %1542 = vmatpush1.bf16.xpose.msra.mxu0 %v1436
    %1543 = vmatprep.subr.bf16.mxu0 %v1439
    %1544 = vmatpush1.bf16.xpose.msra.mxu0 %v1438
    %1545 = vmatprep.subr.bf16.mxu0 %v1441
    %1546 = vmatpush1.bf16.xpose.msra.mxu0 %v1440
    %1547 = vmatprep.subr.bf16.mxu0 %v1443
    %1548 = vmatpush1.bf16.xpose.msra.mxu0 %v1442
    %1549 = vmatprep.subr.bf16.mxu0 %v1445
    %1550 = vmatpush1.bf16.xpose.msra.mxu0 %v1444
    %1551 = vmatprep.subr.bf16.mxu0 %v1447
    %1552 = vmatpush1.bf16.xpose.msra.mxu0 %v1446
    %1553 = vmatprep.subr.bf16.mxu0 %v1449
    %1554 = vmatpush1.bf16.xpose.msra.mxu0 %v1448
    %1555 = vmatprep.subr.bf16.mxu0 %v1451
    %1556 = vmatpush1.bf16.xpose.msra.mxu0 %v1450
    %1557 = vmatprep.subr.bf16.mxu0 %v1453
    %1558 = vmatpush1.bf16.xpose.msra.mxu0 %v1452
    %1559 = vmatprep.subr.bf16.mxu0 %v1455
    %1560 = vmatpush1.bf16.xpose.msra.mxu0 %v1454
    %1561 = vmatprep.subr.bf16.mxu0 %v1457
    %1562 = vmatpush1.bf16.xpose.msra.mxu0 %v1456
    %1563 = vmatprep.mubr.bf16.mxu0 1065369472
    %1564 = vmatmul.mubr.bf16.gmra.mrb[0].mxu0 1065369472
    %v1565 = vpop.f32.mrb[0].mxu0
    %v1566 = vadd.f32 0.0, %v1565
    %v1567 = vpop.f32.mrb[0].mxu0
    %v1568 = vadd.f32 0.0, %v1567
    %v1569 = vpop.f32.mrb[0].mxu0
    %v1570 = vpop.f32.mrb[0].mxu0
    %1571 = vdwg.mxu0
    %v1572 = vrcp.pop %v1566
    %v1573 = vrcp.pop %v1568
    %v1574 = vlaneseq
    %v1575 = vshrl.u32 %v1574, 7
    %v1576 = vsub.s32 0, %v1575
    %v1577 = vrot.slane %v1572, %v1576
    %v1578 = vlaneseq
    %v1579 = vshrl.u32 %v1578, 7
    %v1580 = vsub.s32 0, %v1579
    %v1581 = vrot.slane %v1573, %v1580
    %v1582 = vmul.f32 %v1493, %v1577
    %v1583 = vmul.f32 %v1495, %v1581
    %v1584 = vmul.f32 %v1497, %v1577
    %v1585 = vmul.f32 %v1499, %v1581
    %v1586 = vmul.f32 %v1503, %v1577
    %v1587 = vmul.f32 %v1505, %v1581
    %v1588 = vmul.f32 %v1507, %v1577
    %v1589 = vmul.f32 %v1509, %v1581
    %v1590 = vmul.f32 %v1513, %v1577
    %v1591 = vmul.f32 %v1515, %v1581
    %v1592 = vmul.f32 %v1517, %v1577
    %v1593 = vmul.f32 %v1519, %v1581
    %v1594 = vmul.f32 %v1523, %v1577
    %v1595 = vmul.f32 %v1525, %v1581
    %v1596 = vmul.f32 %v1527, %v1577
    %v1597 = vmul.f32 %v1529, %v1581
    %v1598 = vpack.c.bf16 %v1584, %v1582
    %v1599 = vpack.c.bf16 %v1585, %v1583
    %v1600 = vpack.c.bf16 %v1588, %v1586
    %v1601 = vpack.c.bf16 %v1589, %v1587
    %v1602 = vpack.c.bf16 %v1592, %v1590
    %v1603 = vpack.c.bf16 %v1593, %v1591
    %v1604 = vpack.c.bf16 %v1596, %v1594
    %v1605 = vpack.c.bf16 %v1597, %v1595
    %1607 = vset.pattern.permute.xlu0 0
    %1608 = vperm.xlu0 %1607, %v45
    %v1609 = vpop.permute.xlu0 %1608
    %1612 = vset.pattern.permute.xlu0 0
    %1613 = vperm.xlu0 %1612, %v46
    %v1614 = vpop.permute.xlu0 %1613
    %1617 = vset.pattern.permute.xlu0 0
    %1618 = vperm.xlu0 %1617, %v47
    %v1619 = vpop.permute.xlu0 %1618
    %1622 = vset.pattern.permute.xlu0 0
    %1623 = vperm.xlu0 %1622, %v48
    %v1624 = vpop.permute.xlu0 %1623
    %1627 = vset.pattern.permute.xlu0 0
    %1628 = vperm.xlu0 %1627, %v49
    %v1629 = vpop.permute.xlu0 %1628
    %1632 = vset.pattern.permute.xlu0 0
    %1633 = vperm.xlu0 %1632, %v50
    %v1634 = vpop.permute.xlu0 %1633
    %1637 = vset.pattern.permute.xlu0 0
    %1638 = vperm.xlu0 %1637, %v51
    %v1639 = vpop.permute.xlu0 %1638
    %1642 = vset.pattern.permute.xlu0 0
    %1643 = vperm.xlu0 %1642, %v52
    %v1644 = vpop.permute.xlu0 %1643
    %v1654 = vunpack.c.l.b16 %v85
    %v1655 = vunpack.c.l.b16 %v86
    %v1656 = vunpack.c.l.b16 %v87
    %v1657 = vunpack.c.l.b16 %v88
    %v1658 = vunpack.c.l.b16 %v89
    %v1659 = vunpack.c.l.b16 %v90
    %v1660 = vunpack.c.l.b16 %v91
    %v1661 = vunpack.c.l.b16 %v92
    %v1662 = vpack.c.b16 %v1655, %v1654
    %v1663 = vpack.c.b16 %v1657, %v1656
    %v1664 = vpack.c.b16 %v1659, %v1658
    %v1665 = vpack.c.b16 %v1661, %v1660
    %v1667 = vsel %vm182, %v1662, 0
    %v1670 = vsel %vm182, %v1663, 0
    %v1673 = vsel %vm182, %v1664, 0
    %v1676 = vsel %vm182, %v1665, 0
    %1678 = vmatprep.subr.bf16.mxu0 %v1599
    %1679 = vmatpush1.bf16.msra.mxu0 %v1598
    %1680 = vmatprep.subr.bf16.mxu0 %v1601
    %1681 = vmatpush1.bf16.msra.mxu0 %v1600
    %1682 = vmatprep.subr.bf16.mxu0 %v1603
    %1683 = vmatpush1.bf16.msra.mxu0 %v1602
    %1684 = vmatprep.subr.bf16.mxu0 %v1605
    %1685 = vmatpush1.bf16.msra.mxu0 %v1604
    %1686 = vmatprep.subr.bf16.mxu0 0
    %1687 = vmatpush1.bf16.msra.mxu0 0
    %1688 = vmatprep.subr.bf16.mxu0 0
    %1689 = vmatpush1.bf16.msra.mxu0 0
    %1690 = vmatprep.subr.bf16.mxu0 0
    %1691 = vmatpush1.bf16.msra.mxu0 0
    %1692 = vmatprep.subr.bf16.mxu0 0
    %1693 = vmatpush1.bf16.msra.mxu0 0
    %1694 = vmatprep.subr.bf16.mxu0 0
    %1695 = vmatpush1.bf16.msra.mxu0 0
    %1696 = vmatprep.subr.bf16.mxu0 0
    %1697 = vmatpush1.bf16.msra.mxu0 0
    %1698 = vmatprep.subr.bf16.mxu0 0
    %1699 = vmatpush1.bf16.msra.mxu0 0
    %1700 = vmatprep.subr.bf16.mxu0 0
    %1701 = vmatpush1.bf16.msra.mxu0 0
    %1702 = vmatprep.subr.bf16.mxu0 0
    %1703 = vmatpush1.bf16.msra.mxu0 0
    %1704 = vmatprep.subr.bf16.mxu0 0
    %1705 = vmatpush1.bf16.msra.mxu0 0
    %1706 = vmatprep.subr.bf16.mxu0 0
    %1707 = vmatpush1.bf16.msra.mxu0 0
    %1708 = vmatprep.subr.bf16.mxu0 0
    %1709 = vmatpush1.bf16.msra.mxu0 0
    %1710 = vmatprep.mubr.bf16.mxu0 0
    %1711 = vmatmul.mubr.bf16.gmra.mrb[0].mxu0 %v1667
    %v1712 = vpop.f32.mrb[0].mxu0
    %v1713 = vadd.f32 %v1609, %v1712
    %v1714 = vpop.f32.mrb[0].mxu0
    %v1715 = vadd.f32 %v1609, %v1714
    %v1716 = vpop.f32.mrb[0].mxu0
    %v1717 = vadd.f32 %v1614, %v1716
    %v1718 = vpop.f32.mrb[0].mxu0
    %v1719 = vadd.f32 %v1614, %v1718
    %1720 = vmatprep.mubr.bf16.mxu0 0
    %1721 = vmatmul.mubr.bf16.gmra.mrb[0].mxu0 %v1670
    %v1722 = vpop.f32.mrb[0].mxu0
    %v1723 = vadd.f32 %v1619, %v1722
    %v1724 = vpop.f32.mrb[0].mxu0
    %v1725 = vadd.f32 %v1619, %v1724
    %v1726 = vpop.f32.mrb[0].mxu0
    %v1727 = vadd.f32 %v1624, %v1726
    %v1728 = vpop.f32.mrb[0].mxu0
    %v1729 = vadd.f32 %v1624, %v1728
    %1730 = vmatprep.mubr.bf16.mxu0 0
    %1731 = vmatmul.mubr.bf16.gmra.mrb[0].mxu0 %v1673
    %v1732 = vpop.f32.mrb[0].mxu0
    %v1733 = vadd.f32 %v1629, %v1732
    %v1734 = vpop.f32.mrb[0].mxu0
    %v1735 = vadd.f32 %v1629, %v1734
    %v1736 = vpop.f32.mrb[0].mxu0
    %v1737 = vadd.f32 %v1634, %v1736
    %v1738 = vpop.f32.mrb[0].mxu0
    %v1739 = vadd.f32 %v1634, %v1738
    %1740 = vmatprep.mubr.bf16.mxu0 0
    %1741 = vmatmul.mubr.bf16.gmra.mrb[0].mxu0 %v1676
    %v1742 = vpop.f32.mrb[0].mxu0
    %v1743 = vadd.f32 %v1639, %v1742
    %v1744 = vpop.f32.mrb[0].mxu0
    %v1745 = vadd.f32 %v1639, %v1744
    %v1746 = vpop.f32.mrb[0].mxu0
    %v1747 = vadd.f32 %v1644, %v1746
    %v1748 = vpop.f32.mrb[0].mxu0
    %v1749 = vadd.f32 %v1644, %v1748
    %1750 = vdwg.mxu0
    %v1751 = vadd.f32 %v1713, %v93
    %v1752 = vadd.f32 %v1715, %v94
    %v1753 = vadd.f32 %v1717, %v95
    %v1754 = vadd.f32 %v1719, %v96
    %v1755 = vadd.f32 %v1723, %v97
    %v1756 = vadd.f32 %v1725, %v98
    %v1757 = vadd.f32 %v1727, %v99
    %v1758 = vadd.f32 %v1729, %v100
    %v1759 = vadd.f32 %v1733, %v101
    %v1760 = vadd.f32 %v1735, %v102
    %v1761 = vadd.f32 %v1737, %v103
    %v1762 = vadd.f32 %v1739, %v104
    %v1763 = vadd.f32 %v1743, %v105
    %v1764 = vadd.f32 %v1745, %v106
    %v1765 = vadd.f32 %v1747, %v107
    %v1766 = vadd.f32 %v1749, %v108
    %1767 = vst [vmem:[#allocation2] sm:$0xff] %v1751
    %1768 = vst [vmem:[#allocation2 + $0x8] sm:$0xff] %v1752
    %1769 = vst [vmem:[#allocation2 + $0x10] sm:$0xff] %v1753
    %1770 = vst [vmem:[#allocation2 + $0x18] sm:$0xff] %v1754
    %1771 = vst [vmem:[#allocation2 + $0x20] sm:$0xff] %v1755
    %1772 = vst [vmem:[#allocation2 + $0x28] sm:$0xff] %v1756
    %1773 = vst [vmem:[#allocation2 + $0x30] sm:$0xff] %v1757
    %1774 = vst [vmem:[#allocation2 + $0x38] sm:$0xff] %v1758
    %1775 = vst [vmem:[#allocation2 + $0x40] sm:$0xff] %v1759
    %1776 = vst [vmem:[#allocation2 + $0x48] sm:$0xff] %v1760
    %1777 = vst [vmem:[#allocation2 + $0x50] sm:$0xff] %v1761
    %1778 = vst [vmem:[#allocation2 + $0x58] sm:$0xff] %v1762
    %1779 = vst [vmem:[#allocation2 + $0x60] sm:$0xff] %v1763
    %1780 = vst [vmem:[#allocation2 + $0x68] sm:$0xff] %v1764
    %1781 = vst [vmem:[#allocation2 + $0x70] sm:$0xff] %v1765
    %1782 = vst [vmem:[#allocation2 + $0x78] sm:$0xff] %v1766
    %s1783 = scalar_lea.vmem %s0, 128
    %v1784 = vld [vmem:[%s1783] sm:$0xff]
    %v1785 = vld [vmem:[%s1783 + $0x8] sm:$0xff]
    %v1786 = vld [vmem:[%s1783 + $0x10] sm:$0xff]
    %v1787 = vld [vmem:[%s1783 + $0x18] sm:$0xff]
    %v1788 = vld [vmem:[%s1783 + $0x20] sm:$0xff]
    %v1789 = vld [vmem:[%s1783 + $0x28] sm:$0xff]
    %v1790 = vld [vmem:[%s1783 + $0x30] sm:$0xff]
    %v1791 = vld [vmem:[%s1783 + $0x38] sm:$0xff]
    %v1792 = vld [vmem:[%s1783 + $0x40] sm:$0xff]
    %v1793 = vld [vmem:[%s1783 + $0x48] sm:$0xff]
    %v1794 = vld [vmem:[%s1783 + $0x50] sm:$0xff]
    %v1795 = vld [vmem:[%s1783 + $0x58] sm:$0xff]
    %v1796 = vld [vmem:[%s1783 + $0x60] sm:$0xff]
    %v1797 = vld [vmem:[%s1783 + $0x68] sm:$0xff]
    %v1798 = vld [vmem:[%s1783 + $0x70] sm:$0xff]
    %v1799 = vld [vmem:[%s1783 + $0x78] sm:$0xff]
    %v1800 = vadd.f32 %v1784, %v1785
    %1801 = vadd.xlane.f32.xlu0 %v1800
    %v1802 = vpop.xlane.xlu0 %1801
    %v1803 = vadd.f32 %v1786, %v1787
    %1804 = vadd.xlane.f32.xlu0 %v1803
    %v1805 = vpop.xlane.xlu0 %1804
    %v1806 = vadd.f32 %v1788, %v1789
    %1807 = vadd.xlane.f32.xlu0 %v1806
    %v1808 = vpop.xlane.xlu0 %1807
    %v1809 = vadd.f32 %v1790, %v1791
    %1810 = vadd.xlane.f32.xlu0 %v1809
    %v1811 = vpop.xlane.xlu0 %1810
    %v1812 = vadd.f32 %v1792, %v1793
    %1813 = vadd.xlane.f32.xlu0 %v1812
    %v1814 = vpop.xlane.xlu0 %1813
    %v1815 = vadd.f32 %v1794, %v1795
    %1816 = vadd.xlane.f32.xlu0 %v1815
    %v1817 = vpop.xlane.xlu0 %1816
    %v1818 = vadd.f32 %v1796, %v1797
    %1819 = vadd.xlane.f32.xlu0 %v1818
    %v1820 = vpop.xlane.xlu0 %1819
    %v1821 = vadd.f32 %v1798, %v1799
    %1822 = vadd.xlane.f32.xlu0 %v1821
    %v1823 = vpop.xlane.xlu0 %1822
    %v1824 = vmul.f32 %v1784, %v1784
    %v1825 = vmul.f32 %v1785, %v1785
    %v1826 = vmul.f32 %v1786, %v1786
    %v1827 = vmul.f32 %v1787, %v1787
    %v1828 = vmul.f32 %v1788, %v1788
    %v1829 = vmul.f32 %v1789, %v1789
    %v1830 = vmul.f32 %v1790, %v1790
    %v1831 = vmul.f32 %v1791, %v1791
    %v1832 = vmul.f32 %v1792, %v1792
    %v1833 = vmul.f32 %v1793, %v1793
    %v1834 = vmul.f32 %v1794, %v1794
    %v1835 = vmul.f32 %v1795, %v1795
    %v1836 = vmul.f32 %v1796, %v1796
    %v1837 = vmul.f32 %v1797, %v1797
    %v1838 = vmul.f32 %v1798, %v1798
    %v1839 = vmul.f32 %v1799, %v1799
    %v1840 = vadd.f32 %v1824, %v1825
    %1841 = vadd.xlane.f32.xlu0 %v1840
    %v1842 = vpop.xlane.xlu0 %1841
    %v1843 = vadd.f32 %v1826, %v1827
    %1844 = vadd.xlane.f32.xlu0 %v1843
    %v1845 = vpop.xlane.xlu0 %1844
    %v1846 = vadd.f32 %v1828, %v1829
    %1847 = vadd.xlane.f32.xlu0 %v1846
    %v1848 = vpop.xlane.xlu0 %1847
    %v1849 = vadd.f32 %v1830, %v1831
    %1850 = vadd.xlane.f32.xlu0 %v1849
    %v1851 = vpop.xlane.xlu0 %1850
    %v1852 = vadd.f32 %v1832, %v1833
    %1853 = vadd.xlane.f32.xlu0 %v1852
    %v1854 = vpop.xlane.xlu0 %1853
    %v1855 = vadd.f32 %v1834, %v1835
    %1856 = vadd.xlane.f32.xlu0 %v1855
    %v1857 = vpop.xlane.xlu0 %1856
    %v1858 = vadd.f32 %v1836, %v1837
    %1859 = vadd.xlane.f32.xlu0 %v1858
    %v1860 = vpop.xlane.xlu0 %1859
    %v1861 = vadd.f32 %v1838, %v1839
    %1862 = vadd.xlane.f32.xlu0 %v1861
    %v1863 = vpop.xlane.xlu0 %1862
    %v1864 = vsel %vm173, %v1802, %v1842
    %v1865 = vsel %vm173, %v1805, %v1845
    %v1866 = vsel %vm173, %v1808, %v1848
    %v1867 = vsel %vm173, %v1811, %v1851
    %v1868 = vsel %vm173, %v1814, %v1854
    %v1869 = vsel %vm173, %v1817, %v1857
    %v1870 = vsel %vm173, %v1820, %v1860
    %v1871 = vsel %vm173, %v1823, %v1863
    %1872 = vmatprep.subr.mxu0 0.0
    %1873 = vmatpush1.msra.mxu0 %v1864
    %1874 = vmatprep.subr.mxu0 0.0
    %1875 = vmatpush1.msra.mxu0 %v1865
    %1876 = vmatprep.subr.mxu0 0.0
    %1877 = vmatpush1.msra.mxu0 %v1866
    %1878 = vmatprep.subr.mxu0 0.0
    %1879 = vmatpush1.msra.mxu0 %v1867
    %1880 = vmatprep.subr.mxu0 0.0
    %1881 = vmatpush1.msra.mxu0 %v1868
    %1882 = vmatprep.subr.mxu0 0.0
    %1883 = vmatpush1.msra.mxu0 %v1869
    %1884 = vmatprep.subr.mxu0 0.0
    %1885 = vmatpush1.msra.mxu0 %v1870
    %1886 = vmatprep.subr.mxu0 0.0
    %1887 = vmatpush1.msra.mxu0 %v1871
    %1888 = vmatprep.subr.mxu0 0.0
    %1889 = vmatpush1.msra.mxu0 0.0
    %1890 = vmatprep.subr.mxu0 0.0
    %1891 = vmatpush1.msra.mxu0 0.0
    %1892 = vmatprep.subr.mxu0 0.0
    %1893 = vmatpush1.msra.mxu0 0.0
    %1894 = vmatprep.subr.mxu0 0.0
    %1895 = vmatpush1.msra.mxu0 0.0
    %1896 = vmatprep.subr.mxu0 0.0
    %1897 = vmatpush1.msra.mxu0 0.0
    %1898 = vmatprep.subr.mxu0 0.0
    %1899 = vmatpush1.msra.mxu0 0.0
    %1900 = vmatprep.subr.mxu0 0.0
    %1901 = vmatpush1.msra.mxu0 0.0
    %1902 = vmatprep.subr.mxu0 0.0
    %1903 = vmatpush1.msra.mxu0 0.0
    %1904 = vmatprep.subr.mxu0 0.0
    %1905 = vmatpush1.msra.mxu0 0.0
    %1906 = vmatprep.subr.mxu0 0.0
    %1907 = vmatpush1.msra.mxu0 0.0
    %1908 = vmatprep.subr.mxu0 0.0
    %1909 = vmatpush1.msra.mxu0 0.0
    %1910 = vmatprep.subr.mxu0 0.0
    %1911 = vmatpush1.msra.mxu0 0.0
    %1912 = vmatprep.subr.mxu0 0.0
    %1913 = vmatpush1.msra.mxu0 0.0
    %1914 = vmatprep.subr.mxu0 0.0
    %1915 = vmatpush1.msra.mxu0 0.0
    %1916 = vmatprep.subr.mxu0 0.0
    %1917 = vmatpush1.msra.mxu0 0.0
    %1918 = vmatprep.subr.mxu0 0.0
    %1919 = vmatpush1.msra.mxu0 0.0
    %1920 = vmatprep.subr.mxu0 0.0
    %1921 = vmatpush1.msra.mxu0 0.0
    %1922 = vmatprep.subr.mxu0 0.0
    %1923 = vmatpush1.msra.mxu0 0.0
    %1924 = vmatprep.subr.mxu0 0.0
    %1925 = vmatpush1.msra.mxu0 0.0
    %1926 = vmatprep.subr.mxu0 0.0
    %1927 = vmatpush1.msra.mxu0 0.0
    %1928 = vmatprep.subr.mxu0 0.0
    %1929 = vmatpush1.msra.mxu0 0.0
    %1930 = vmatprep.subr.mxu0 0.0
    %1931 = vmatpush1.msra.mxu0 0.0
    %1932 = vmatprep.subr.mxu0 0.0
    %1933 = vmatpush1.msra.mxu0 0.0
    %1934 = vmatprep.subr.mxu0 0.0
    %1935 = vmatpush1.msra.mxu0 0.0
    %1936 = vmatprep.mubr.f32.mxu0 0.0
    %1937 = vmatmul.mubr.f32.gmra.mrb[0].mxu0 %v184
    %v1938 = vpop.f32.mrb[0].mxu0
    %v1939 = vadd.f32 0.0, %v1938
    %v1940 = vpop.f32.mrb[0].mxu0
    %1941 = vmatprep.mubr.f32.mxu0 0.0
    %1942 = vmatmul.mubr.f32.gmra.mrb[0].mxu0 %v187
    %v1943 = vpop.f32.mrb[0].mxu0
    %v1944 = vadd.f32 0.0, %v1943
    %v1945 = vpop.f32.mrb[0].mxu0
    %1946 = vmatprep.mubr.f32.mxu0 0.0
    %1947 = vmatmul.mubr.f32.gmra.mrb[0].mxu0 %v190
    %v1948 = vpop.f32.mrb[0].mxu0
    %v1949 = vadd.f32 0.0, %v1948
    %v1950 = vpop.f32.mrb[0].mxu0
    %1951 = vmatprep.mubr.f32.mxu0 0.0
    %1952 = vmatmul.mubr.f32.gmra.mrb[0].mxu0 %v193
    %v1953 = vpop.f32.mrb[0].mxu0
    %v1954 = vadd.f32 0.0, %v1953
    %v1955 = vpop.f32.mrb[0].mxu0
    %1956 = vmatprep.mubr.f32.mxu0 0.0
    %1957 = vmatmul.mubr.f32.gmra.mrb[0].mxu0 %v196
    %v1958 = vpop.f32.mrb[0].mxu0
    %v1959 = vadd.f32 0.0, %v1958
    %v1960 = vpop.f32.mrb[0].mxu0
    %1961 = vmatprep.mubr.f32.mxu0 0.0
    %1962 = vmatmul.mubr.f32.gmra.mrb[0].mxu0 %v199
    %v1963 = vpop.f32.mrb[0].mxu0
    %v1964 = vadd.f32 0.0, %v1963
    %v1965 = vpop.f32.mrb[0].mxu0
    %1966 = vmatprep.mubr.f32.mxu0 0.0
    %1967 = vmatmul.mubr.f32.gmra.mrb[0].mxu0 %v202
    %v1968 = vpop.f32.mrb[0].mxu0
    %v1969 = vadd.f32 0.0, %v1968
    %v1970 = vpop.f32.mrb[0].mxu0
    %1971 = vmatprep.mubr.f32.mxu0 0.0
    %1972 = vmatmul.mubr.f32.gmra.mrb[0].mxu0 %v205
    %v1973 = vpop.f32.mrb[0].mxu0
    %v1974 = vadd.f32 0.0, %v1973
    %v1975 = vpop.f32.mrb[0].mxu0
    %1976 = vdwg.mxu0
    %v1977 = vmul.f32 %v1939, %v1939
    %v1978 = vmul.f32 %v1944, %v1944
    %v1979 = vmul.f32 %v1949, %v1949
    %v1980 = vmul.f32 %v1954, %v1954
    %v1981 = vmul.f32 %v1959, %v1959
    %v1982 = vmul.f32 %v1964, %v1964
    %v1983 = vmul.f32 %v1969, %v1969
    %v1984 = vmul.f32 %v1974, %v1974
    %1993 = vrot.lane.b32.xlu0 %v1977, 1
    %v1994 = vpop.permute.xlu0 %1993
    %1995 = vrot.lane.b32.xlu0 %v1978, 1
    %v1996 = vpop.permute.xlu0 %1995
    %1997 = vrot.lane.b32.xlu0 %v1979, 1
    %v1998 = vpop.permute.xlu0 %1997
    %1999 = vrot.lane.b32.xlu0 %v1980, 1
    %v2000 = vpop.permute.xlu0 %1999
    %2001 = vrot.lane.b32.xlu0 %v1981, 1
    %v2002 = vpop.permute.xlu0 %2001
    %2003 = vrot.lane.b32.xlu0 %v1982, 1
    %v2004 = vpop.permute.xlu0 %2003
    %2005 = vrot.lane.b32.xlu0 %v1983, 1
    %v2006 = vpop.permute.xlu0 %2005
    %2007 = vrot.lane.b32.xlu0 %v1984, 1
    %v2008 = vpop.permute.xlu0 %2007
    %v2017 = vsub.f32 %v1939, %v1994
    %v2018 = vsub.f32 %v1944, %v1996
    %v2019 = vsub.f32 %v1949, %v1998
    %v2020 = vsub.f32 %v1954, %v2000
    %v2021 = vsub.f32 %v1959, %v2002
    %v2022 = vsub.f32 %v1964, %v2004
    %v2023 = vsub.f32 %v1969, %v2006
    %v2024 = vsub.f32 %v1974, %v2008
    %2026 = vset.pattern.permute.xlu0 0
    %2027 = vperm.xlu0 %2026, %v1939
    %v2028 = vpop.permute.xlu0 %2027
    %2031 = vset.pattern.permute.xlu0 0
    %2032 = vperm.xlu0 %2031, %v1944
    %v2033 = vpop.permute.xlu0 %2032
    %2036 = vset.pattern.permute.xlu0 0
    %2037 = vperm.xlu0 %2036, %v1949
    %v2038 = vpop.permute.xlu0 %2037
    %2041 = vset.pattern.permute.xlu0 0
    %2042 = vperm.xlu0 %2041, %v1954
    %v2043 = vpop.permute.xlu0 %2042
    %2046 = vset.pattern.permute.xlu0 0
    %2047 = vperm.xlu0 %2046, %v1959
    %v2048 = vpop.permute.xlu0 %2047
    %2051 = vset.pattern.permute.xlu0 0
    %2052 = vperm.xlu0 %2051, %v1964
    %v2053 = vpop.permute.xlu0 %2052
    %2056 = vset.pattern.permute.xlu0 0
    %2057 = vperm.xlu0 %2056, %v1969
    %v2058 = vpop.permute.xlu0 %2057
    %2061 = vset.pattern.permute.xlu0 0
    %2062 = vperm.xlu0 %2061, %v1974
    %v2063 = vpop.permute.xlu0 %2062
    %v2065 = vsub.f32 %v1784, %v2028
    %v2066 = vsub.f32 %v1785, %v2028
    %v2067 = vsub.f32 %v1786, %v2033
    %v2068 = vsub.f32 %v1787, %v2033
    %v2069 = vsub.f32 %v1788, %v2038
    %v2070 = vsub.f32 %v1789, %v2038
    %v2071 = vsub.f32 %v1790, %v2043
    %v2072 = vsub.f32 %v1791, %v2043
    %v2073 = vsub.f32 %v1792, %v2048
    %v2074 = vsub.f32 %v1793, %v2048
    %v2075 = vsub.f32 %v1794, %v2053
    %v2076 = vsub.f32 %v1795, %v2053
    %v2077 = vsub.f32 %v1796, %v2058
    %v2078 = vsub.f32 %v1797, %v2058
    %v2079 = vsub.f32 %v1798, %v2063
    %v2080 = vsub.f32 %v1799, %v2063
    %v2081 = vadd.f32 %v2017, 1e-05
    %v2082 = vadd.f32 %v2018, 1e-05
    %v2083 = vadd.f32 %v2019, 1e-05
    %v2084 = vadd.f32 %v2020, 1e-05
    %v2085 = vadd.f32 %v2021, 1e-05
    %v2086 = vadd.f32 %v2022, 1e-05
    %v2087 = vadd.f32 %v2023, 1e-05
    %v2088 = vadd.f32 %v2024, 1e-05
    %v2089 = vrsqrt.pop %v2081
    %v2090 = vrsqrt.pop %v2082
    %v2091 = vrsqrt.pop %v2083
    %v2092 = vrsqrt.pop %v2084
    %v2093 = vrsqrt.pop %v2085
    %v2094 = vrsqrt.pop %v2086
    %v2095 = vrsqrt.pop %v2087
    %v2096 = vrsqrt.pop %v2088
    %v2097 = vmul.f32 %v2089, %v441
    %v2098 = vmul.f32 %v2090, %v443
    %v2099 = vmul.f32 %v2091, %v445
    %v2100 = vmul.f32 %v2092, %v447
    %v2101 = vmul.f32 %v2093, %v449
    %v2102 = vmul.f32 %v2094, %v451
    %v2103 = vmul.f32 %v2095, %v453
    %v2104 = vmul.f32 %v2096, %v455
    %2106 = vset.pattern.permute.xlu0 1
    %2107 = vperm.xlu0 %2106, %v2097
    %v2108 = vpop.permute.xlu0 %2107
    %2111 = vset.pattern.permute.xlu0 1
    %2112 = vperm.xlu0 %2111, %v2098
    %v2113 = vpop.permute.xlu0 %2112
    %2116 = vset.pattern.permute.xlu0 1
    %2117 = vperm.xlu0 %2116, %v2099
    %v2118 = vpop.permute.xlu0 %2117
    %2121 = vset.pattern.permute.xlu0 1
    %2122 = vperm.xlu0 %2121, %v2100
    %v2123 = vpop.permute.xlu0 %2122
    %2126 = vset.pattern.permute.xlu0 1
    %2127 = vperm.xlu0 %2126, %v2101
    %v2128 = vpop.permute.xlu0 %2127
    %2131 = vset.pattern.permute.xlu0 1
    %2132 = vperm.xlu0 %2131, %v2102
    %v2133 = vpop.permute.xlu0 %2132
    %2136 = vset.pattern.permute.xlu0 1
    %2137 = vperm.xlu0 %2136, %v2103
    %v2138 = vpop.permute.xlu0 %2137
    %2141 = vset.pattern.permute.xlu0 1
    %2142 = vperm.xlu0 %2141, %v2104
    %v2143 = vpop.permute.xlu0 %2142
    %v2145 = vmul.f32 %v2065, %v2108
    %v2146 = vmul.f32 %v2066, %v2108
    %v2147 = vmul.f32 %v2067, %v2113
    %v2148 = vmul.f32 %v2068, %v2113
    %v2149 = vmul.f32 %v2069, %v2118
    %v2150 = vmul.f32 %v2070, %v2118
    %v2151 = vmul.f32 %v2071, %v2123
    %v2152 = vmul.f32 %v2072, %v2123
    %v2153 = vmul.f32 %v2073, %v2128
    %v2154 = vmul.f32 %v2074, %v2128
    %v2155 = vmul.f32 %v2075, %v2133
    %v2156 = vmul.f32 %v2076, %v2133
    %v2157 = vmul.f32 %v2077, %v2138
    %v2158 = vmul.f32 %v2078, %v2138
    %v2159 = vmul.f32 %v2079, %v2143
    %v2160 = vmul.f32 %v2080, %v2143
    %v2161 = vadd.f32 %v2145, %v531
    %v2162 = vadd.f32 %v2146, %v531
    %v2163 = vadd.f32 %v2147, %v536
    %v2164 = vadd.f32 %v2148, %v536
    %v2165 = vadd.f32 %v2149, %v541
    %v2166 = vadd.f32 %v2150, %v541
    %v2167 = vadd.f32 %v2151, %v546
    %v2168 = vadd.f32 %v2152, %v546
    %v2169 = vadd.f32 %v2153, %v551
    %v2170 = vadd.f32 %v2154, %v551
    %v2171 = vadd.f32 %v2155, %v556
    %v2172 = vadd.f32 %v2156, %v556
    %v2173 = vadd.f32 %v2157, %v561
    %v2174 = vadd.f32 %v2158, %v561
    %v2175 = vadd.f32 %v2159, %v566
    %v2176 = vadd.f32 %v2160, %v566
    %v2177 = vpack.c.bf16 %v2163, %v2161
    %v2178 = vpack.c.bf16 %v2164, %v2162
    %v2179 = vpack.c.bf16 %v2167, %v2165
    %v2180 = vpack.c.bf16 %v2168, %v2166
    %v2181 = vpack.c.bf16 %v2171, %v2169
    %v2182 = vpack.c.bf16 %v2172, %v2170
    %v2183 = vpack.c.bf16 %v2175, %v2173
    %v2184 = vpack.c.bf16 %v2176, %v2174
    %2185 = vmatprep.subr.bf16.mxu0 %v2178
    %2186 = vmatpush1.bf16.msra.mxu0 %v2177
    %2187 = vmatprep.subr.bf16.mxu0 %v2180
    %2188 = vmatpush1.bf16.msra.mxu0 %v2179
    %2189 = vmatprep.subr.bf16.mxu0 %v2182
    %2190 = vmatpush1.bf16.msra.mxu0 %v2181
    %2191 = vmatprep.subr.bf16.mxu0 %v2184
    %2192 = vmatpush1.bf16.msra.mxu0 %v2183
    %2193 = vmatprep.subr.bf16.mxu0 0
    %2194 = vmatpush1.bf16.msra.mxu0 0
    %2195 = vmatprep.subr.bf16.mxu0 0
    %2196 = vmatpush1.bf16.msra.mxu0 0
    %2197 = vmatprep.subr.bf16.mxu0 0
    %2198 = vmatpush1.bf16.msra.mxu0 0
    %2199 = vmatprep.subr.bf16.mxu0 0
    %2200 = vmatpush1.bf16.msra.mxu0 0
    %2201 = vmatprep.subr.bf16.mxu0 0
    %2202 = vmatpush1.bf16.msra.mxu0 0
    %2203 = vmatprep.subr.bf16.mxu0 0
    %2204 = vmatpush1.bf16.msra.mxu0 0
    %2205 = vmatprep.subr.bf16.mxu0 0
    %2206 = vmatpush1.bf16.msra.mxu0 0
    %2207 = vmatprep.subr.bf16.mxu0 0
    %2208 = vmatpush1.bf16.msra.mxu0 0
    %2209 = vmatprep.subr.bf16.mxu0 0
    %2210 = vmatpush1.bf16.msra.mxu0 0
    %2211 = vmatprep.subr.bf16.mxu0 0
    %2212 = vmatpush1.bf16.msra.mxu0 0
    %2213 = vmatprep.subr.bf16.mxu0 0
    %2214 = vmatpush1.bf16.msra.mxu0 0
    %2215 = vmatprep.subr.bf16.mxu0 0
    %2216 = vmatpush1.bf16.msra.mxu0 0
    %2217 = vmatprep.mubr.bf16.mxu0 0
    %2218 = vmatmul.mubr.bf16.gmra.mrb[0].mxu0 %v653
    %v2219 = vpop.f32.mrb[0].mxu0
    %v2220 = vadd.f32 0.0, %v2219
    %v2221 = vpop.f32.mrb[0].mxu0
    %v2222 = vadd.f32 0.0, %v2221
    %v2223 = vpop.f32.mrb[0].mxu0
    %v2224 = vadd.f32 0.0, %v2223
    %v2225 = vpop.f32.mrb[0].mxu0
    %v2226 = vadd.f32 0.0, %v2225
    %2227 = vmatprep.mubr.bf16.mxu0 0
    %2228 = vmatmul.mubr.bf16.gmra.mrb[0].mxu0 %v656
    %v2229 = vpop.f32.mrb[0].mxu0
    %v2230 = vadd.f32 0.0, %v2229
    %v2231 = vpop.f32.mrb[0].mxu0
    %v2232 = vadd.f32 0.0, %v2231
    %v2233 = vpop.f32.mrb[0].mxu0
    %v2234 = vadd.f32 0.0, %v2233
    %v2235 = vpop.f32.mrb[0].mxu0
    %v2236 = vadd.f32 0.0, %v2235
    %2237 = vmatprep.mubr.bf16.mxu0 0
    %2238 = vmatmul.mubr.bf16.gmra.mrb[0].mxu0 %v659
    %v2239 = vpop.f32.mrb[0].mxu0
    %v2240 = vadd.f32 0.0, %v2239
    %v2241 = vpop.f32.mrb[0].mxu0
    %v2242 = vadd.f32 0.0, %v2241
    %v2243 = vpop.f32.mrb[0].mxu0
    %v2244 = vadd.f32 0.0, %v2243
    %v2245 = vpop.f32.mrb[0].mxu0
    %v2246 = vadd.f32 0.0, %v2245
    %2247 = vmatprep.mubr.bf16.mxu0 0
    %2248 = vmatmul.mubr.bf16.gmra.mrb[0].mxu0 %v662
    %v2249 = vpop.f32.mrb[0].mxu0
    %v2250 = vadd.f32 0.0, %v2249
    %v2251 = vpop.f32.mrb[0].mxu0
    %v2252 = vadd.f32 0.0, %v2251
    %v2253 = vpop.f32.mrb[0].mxu0
    %v2254 = vadd.f32 0.0, %v2253
    %v2255 = vpop.f32.mrb[0].mxu0
    %v2256 = vadd.f32 0.0, %v2255
    %2257 = vmatprep.mubr.bf16.mxu0 0
    %2258 = vmatmul.mubr.bf16.gmra.mrb[0].mxu0 %v665
    %v2259 = vpop.f32.mrb[0].mxu0
    %v2260 = vadd.f32 0.0, %v2259
    %v2261 = vpop.f32.mrb[0].mxu0
    %v2262 = vadd.f32 0.0, %v2261
    %v2263 = vpop.f32.mrb[0].mxu0
    %v2264 = vadd.f32 0.0, %v2263
    %v2265 = vpop.f32.mrb[0].mxu0
    %v2266 = vadd.f32 0.0, %v2265
    %2267 = vmatprep.mubr.bf16.mxu0 0
    %2268 = vmatmul.mubr.bf16.gmra.mrb[0].mxu0 %v668
    %v2269 = vpop.f32.mrb[0].mxu0
    %v2270 = vadd.f32 0.0, %v2269
    %v2271 = vpop.f32.mrb[0].mxu0
    %v2272 = vadd.f32 0.0, %v2271
    %v2273 = vpop.f32.mrb[0].mxu0
    %v2274 = vadd.f32 0.0, %v2273
    %v2275 = vpop.f32.mrb[0].mxu0
    %v2276 = vadd.f32 0.0, %v2275
    %2277 = vmatprep.mubr.bf16.mxu0 0
    %2278 = vmatmul.mubr.bf16.gmra.mrb[0].mxu0 %v671
    %v2279 = vpop.f32.mrb[0].mxu0
    %v2280 = vadd.f32 0.0, %v2279
    %v2281 = vpop.f32.mrb[0].mxu0
    %v2282 = vadd.f32 0.0, %v2281
    %v2283 = vpop.f32.mrb[0].mxu0
    %v2284 = vadd.f32 0.0, %v2283
    %v2285 = vpop.f32.mrb[0].mxu0
    %v2286 = vadd.f32 0.0, %v2285
    %2287 = vmatprep.mubr.bf16.mxu0 0
    %2288 = vmatmul.mubr.bf16.gmra.mrb[0].mxu0 %v674
    %v2289 = vpop.f32.mrb[0].mxu0
    %v2290 = vadd.f32 0.0, %v2289
    %v2291 = vpop.f32.mrb[0].mxu0
    %v2292 = vadd.f32 0.0, %v2291
    %v2293 = vpop.f32.mrb[0].mxu0
    %v2294 = vadd.f32 0.0, %v2293
    %v2295 = vpop.f32.mrb[0].mxu0
    %v2296 = vadd.f32 0.0, %v2295
    %2297 = vmatprep.mubr.bf16.mxu0 0
    %2298 = vmatmul.mubr.bf16.gmra.mrb[0].mxu0 %v677
    %v2299 = vpop.f32.mrb[0].mxu0
    %v2300 = vadd.f32 0.0, %v2299
    %v2301 = vpop.f32.mrb[0].mxu0
    %v2302 = vadd.f32 0.0, %v2301
    %v2303 = vpop.f32.mrb[0].mxu0
    %v2304 = vadd.f32 0.0, %v2303
    %v2305 = vpop.f32.mrb[0].mxu0
    %v2306 = vadd.f32 0.0, %v2305
    %2307 = vmatprep.mubr.bf16.mxu0 0
    %2308 = vmatmul.mubr.bf16.gmra.mrb[0].mxu0 %v680
    %v2309 = vpop.f32.mrb[0].mxu0
    %v2310 = vadd.f32 0.0, %v2309
    %v2311 = vpop.f32.mrb[0].mxu0
    %v2312 = vadd.f32 0.0, %v2311
    %v2313 = vpop.f32.mrb[0].mxu0
    %v2314 = vadd.f32 0.0, %v2313
    %v2315 = vpop.f32.mrb[0].mxu0
    %v2316 = vadd.f32 0.0, %v2315
    %2317 = vmatprep.mubr.bf16.mxu0 0
    %2318 = vmatmul.mubr.bf16.gmra.mrb[0].mxu0 %v683
    %v2319 = vpop.f32.mrb[0].mxu0
    %v2320 = vadd.f32 0.0, %v2319
    %v2321 = vpop.f32.mrb[0].mxu0
    %v2322 = vadd.f32 0.0, %v2321
    %v2323 = vpop.f32.mrb[0].mxu0
    %v2324 = vadd.f32 0.0, %v2323
    %v2325 = vpop.f32.mrb[0].mxu0
    %v2326 = vadd.f32 0.0, %v2325
    %2327 = vmatprep.mubr.bf16.mxu0 0
    %2328 = vmatmul.mubr.bf16.gmra.mrb[0].mxu0 %v686
    %v2329 = vpop.f32.mrb[0].mxu0
    %v2330 = vadd.f32 0.0, %v2329
    %v2331 = vpop.f32.mrb[0].mxu0
    %v2332 = vadd.f32 0.0, %v2331
    %v2333 = vpop.f32.mrb[0].mxu0
    %v2334 = vadd.f32 0.0, %v2333
    %v2335 = vpop.f32.mrb[0].mxu0
    %v2336 = vadd.f32 0.0, %v2335
    %2337 = vdwg.mxu0
    %v2338 = vpack.c.bf16 %v2224, %v2220
    %v2339 = vpack.c.bf16 %v2226, %v2222
    %v2340 = vpack.c.bf16 %v2234, %v2230
    %v2341 = vpack.c.bf16 %v2236, %v2232
    %v2342 = vpack.c.bf16 %v2244, %v2240
    %v2343 = vpack.c.bf16 %v2246, %v2242
    %v2344 = vpack.c.bf16 %v2254, %v2250
    %v2345 = vpack.c.bf16 %v2256, %v2252
    %v2346 = vpack.c.bf16 %v2264, %v2260
    %v2347 = vpack.c.bf16 %v2266, %v2262
    %v2348 = vpack.c.bf16 %v2274, %v2270
    %v2349 = vpack.c.bf16 %v2276, %v2272
    %v2350 = vpack.c.bf16 %v2284, %v2280
    %v2351 = vpack.c.bf16 %v2286, %v2282
    %v2352 = vpack.c.bf16 %v2294, %v2290
    %v2353 = vpack.c.bf16 %v2296, %v2292
    %v2354 = vpack.c.bf16 %v2304, %v2300
    %v2355 = vpack.c.bf16 %v2306, %v2302
    %v2356 = vpack.c.bf16 %v2314, %v2310
    %v2357 = vpack.c.bf16 %v2316, %v2312
    %v2358 = vpack.c.bf16 %v2324, %v2320
    %v2359 = vpack.c.bf16 %v2326, %v2322
    %v2360 = vpack.c.bf16 %v2334, %v2330
    %v2361 = vpack.c.bf16 %v2336, %v2332
    %2362 = vxpose.xlu0.c.b16.start [1/8] %v2338, 128
    %2363 = vxpose.xlu0.c.b16.cont [2/8] %v2340, 128
    %2364 = vxpose.xlu0.c.b16.cont [3/8] %v2342, 128
    %2365 = vxpose.xlu0.c.b16.cont [4/8] %v2344, 128
    %2366 = vxpose.xlu0.c.b16.cont [5/8] 0, 128
    %2367 = vxpose.xlu0.c.b16.cont [6/8] 0, 128
    %2368 = vxpose.xlu0.c.b16.cont [7/8] 0, 128
    %2369 = vxpose.xlu0.c.b16.end [8/8] 0, 128
    %v2370 = vpop.trf.xlu0
    %v2371 = vpop.trf.xlu0
    %v2372 = vpop.trf.xlu0
    %v2373 = vpop.trf.xlu0
    %v2374 = vpop.trf.xlu0
    %v2375 = vpop.trf.xlu0
    %v2376 = vpop.trf.xlu0
    %v2377 = vpop.trf.xlu0
    %2378 = vxpose.xlu0.c.b16.start [1/8] %v2339, 128
    %2379 = vxpose.xlu0.c.b16.cont [2/8] %v2341, 128
    %2380 = vxpose.xlu0.c.b16.cont [3/8] %v2343, 128
    %2381 = vxpose.xlu0.c.b16.cont [4/8] %v2345, 128
    %2382 = vxpose.xlu0.c.b16.cont [5/8] 0, 128
    %2383 = vxpose.xlu0.c.b16.cont [6/8] 0, 128
    %2384 = vxpose.xlu0.c.b16.cont [7/8] 0, 128
    %2385 = vxpose.xlu0.c.b16.end [8/8] 0, 128
    %v2386 = vpop.trf.xlu0
    %v2387 = vpop.trf.xlu0
    %v2388 = vpop.trf.xlu0
    %v2389 = vpop.trf.xlu0
    %v2390 = vpop.trf.xlu0
    %v2391 = vpop.trf.xlu0
    %v2392 = vpop.trf.xlu0
    %v2393 = vpop.trf.xlu0
    %v2395 = vsel %vm182, %v2370, 0
    %v2398 = vsel %vm182, %v2371, 0
    %v2401 = vsel %vm182, %v2372, 0
    %v2404 = vsel %vm182, %v2373, 0
    %v2407 = vsel %vm182, %v2374, 0
    %v2410 = vsel %vm182, %v2375, 0
    %v2413 = vsel %vm182, %v2376, 0
    %v2416 = vsel %vm182, %v2377, 0
    %v2419 = vsel %vm182, %v2386, 0
    %v2422 = vsel %vm182, %v2387, 0
    %v2425 = vsel %vm182, %v2388, 0
    %v2428 = vsel %vm182, %v2389, 0
    %v2431 = vsel %vm182, %v2390, 0
    %v2434 = vsel %vm182, %v2391, 0
    %v2437 = vsel %vm182, %v2392, 0
    %v2440 = vsel %vm182, %v2393, 0
    %2442 = vmatprep.subr.bf16.mxu0 %v2347
    %2443 = vmatpush1.bf16.msra.mxu0 %v2346
    %2444 = vmatprep.subr.bf16.mxu0 %v2349
    %2445 = vmatpush1.bf16.msra.mxu0 %v2348
    %2446 = vmatprep.subr.bf16.mxu0 %v2351
    %2447 = vmatpush1.bf16.msra.mxu0 %v2350
    %2448 = vmatprep.subr.bf16.mxu0 %v2353
    %2449 = vmatpush1.bf16.msra.mxu0 %v2352
    %2450 = vmatprep.subr.bf16.mxu0 0
    %2451 = vmatpush1.bf16.msra.mxu0 0
    %2452 = vmatprep.subr.bf16.mxu0 0
    %2453 = vmatpush1.bf16.msra.mxu0 0
    %2454 = vmatprep.subr.bf16.mxu0 0
    %2455 = vmatpush1.bf16.msra.mxu0 0
    %2456 = vmatprep.subr.bf16.mxu0 0
    %2457 = vmatpush1.bf16.msra.mxu0 0
    %2458 = vmatprep.subr.bf16.mxu0 0
    %2459 = vmatpush1.bf16.msra.mxu0 0
    %2460 = vmatprep.subr.bf16.mxu0 0
    %2461 = vmatpush1.bf16.msra.mxu0 0
    %2462 = vmatprep.subr.bf16.mxu0 0
    %2463 = vmatpush1.bf16.msra.mxu0 0
    %2464 = vmatprep.subr.bf16.mxu0 0
    %2465 = vmatpush1.bf16.msra.mxu0 0
    %2466 = vmatprep.subr.bf16.mxu0 0
    %2467 = vmatpush1.bf16.msra.mxu0 0
    %2468 = vmatprep.subr.bf16.mxu0 0
    %2469 = vmatpush1.bf16.msra.mxu0 0
    %2470 = vmatprep.subr.bf16.mxu0 0
    %2471 = vmatpush1.bf16.msra.mxu0 0
    %2472 = vmatprep.subr.bf16.mxu0 0
    %2473 = vmatpush1.bf16.msra.mxu0 0
    %2474 = vmatprep.mubr.bf16.mxu0 0
    %2475 = vmatmul.mubr.bf16.gmra.mrb[0].mxu0 %v2395
    %v2476 = vpop.f32.mrb[0].mxu0
    %v2477 = vadd.f32 0.0, %v2476
    %v2478 = vpop.f32.mrb[0].mxu0
    %v2479 = vadd.f32 0.0, %v2478
    %v2480 = vpop.f32.mrb[0].mxu0
    %v2481 = vadd.f32 0.0, %v2480
    %v2482 = vpop.f32.mrb[0].mxu0
    %v2483 = vadd.f32 0.0, %v2482
    %2484 = vmatprep.mubr.bf16.mxu0 0
    %2485 = vmatmul.mubr.bf16.gmra.mrb[0].mxu0 %v2398
    %v2486 = vpop.f32.mrb[0].mxu0
    %v2487 = vadd.f32 0.0, %v2486
    %v2488 = vpop.f32.mrb[0].mxu0
    %v2489 = vadd.f32 0.0, %v2488
    %v2490 = vpop.f32.mrb[0].mxu0
    %v2491 = vadd.f32 0.0, %v2490
    %v2492 = vpop.f32.mrb[0].mxu0
    %v2493 = vadd.f32 0.0, %v2492
    %2494 = vmatprep.mubr.bf16.mxu0 0
    %2495 = vmatmul.mubr.bf16.gmra.mrb[0].mxu0 %v2401
    %v2496 = vpop.f32.mrb[0].mxu0
    %v2497 = vadd.f32 0.0, %v2496
    %v2498 = vpop.f32.mrb[0].mxu0
    %v2499 = vadd.f32 0.0, %v2498
    %v2500 = vpop.f32.mrb[0].mxu0
    %v2501 = vadd.f32 0.0, %v2500
    %v2502 = vpop.f32.mrb[0].mxu0
    %v2503 = vadd.f32 0.0, %v2502
    %2504 = vmatprep.mubr.bf16.mxu0 0
    %2505 = vmatmul.mubr.bf16.gmra.mrb[0].mxu0 %v2404
    %v2506 = vpop.f32.mrb[0].mxu0
    %v2507 = vadd.f32 0.0, %v2506
    %v2508 = vpop.f32.mrb[0].mxu0
    %v2509 = vadd.f32 0.0, %v2508
    %v2510 = vpop.f32.mrb[0].mxu0
    %v2511 = vadd.f32 0.0, %v2510
    %v2512 = vpop.f32.mrb[0].mxu0
    %v2513 = vadd.f32 0.0, %v2512
    %2514 = vmatprep.mubr.bf16.mxu0 0
    %2515 = vmatmul.mubr.bf16.gmra.mrb[0].mxu0 %v2407
    %v2516 = vpop.f32.mrb[0].mxu0
    %v2517 = vadd.f32 0.0, %v2516
    %v2518 = vpop.f32.mrb[0].mxu0
    %v2519 = vadd.f32 0.0, %v2518
    %v2520 = vpop.f32.mrb[0].mxu0
    %v2521 = vadd.f32 0.0, %v2520
    %v2522 = vpop.f32.mrb[0].mxu0
    %v2523 = vadd.f32 0.0, %v2522
    %2524 = vmatprep.mubr.bf16.mxu0 0
    %2525 = vmatmul.mubr.bf16.gmra.mrb[0].mxu0 %v2410
    %v2526 = vpop.f32.mrb[0].mxu0
    %v2527 = vadd.f32 0.0, %v2526
    %v2528 = vpop.f32.mrb[0].mxu0
    %v2529 = vadd.f32 0.0, %v2528
    %v2530 = vpop.f32.mrb[0].mxu0
    %v2531 = vadd.f32 0.0, %v2530
    %v2532 = vpop.f32.mrb[0].mxu0
    %v2533 = vadd.f32 0.0, %v2532
    %2534 = vmatprep.mubr.bf16.mxu0 0
    %2535 = vmatmul.mubr.bf16.gmra.mrb[0].mxu0 %v2413
    %v2536 = vpop.f32.mrb[0].mxu0
    %v2537 = vadd.f32 0.0, %v2536
    %v2538 = vpop.f32.mrb[0].mxu0
    %v2539 = vadd.f32 0.0, %v2538
    %v2540 = vpop.f32.mrb[0].mxu0
    %v2541 = vadd.f32 0.0, %v2540
    %v2542 = vpop.f32.mrb[0].mxu0
    %v2543 = vadd.f32 0.0, %v2542
    %2544 = vmatprep.mubr.bf16.mxu0 0
    %2545 = vmatmul.mubr.bf16.gmra.mrb[0].mxu0 %v2416
    %v2546 = vpop.f32.mrb[0].mxu0
    %v2547 = vadd.f32 0.0, %v2546
    %v2548 = vpop.f32.mrb[0].mxu0
    %v2549 = vadd.f32 0.0, %v2548
    %v2550 = vpop.f32.mrb[0].mxu0
    %v2551 = vadd.f32 0.0, %v2550
    %v2552 = vpop.f32.mrb[0].mxu0
    %v2553 = vadd.f32 0.0, %v2552
    %2554 = vmatprep.mubr.bf16.mxu0 0
    %2555 = vmatmul.mubr.bf16.gmra.mrb[0].mxu0 %v2419
    %v2556 = vpop.f32.mrb[0].mxu0
    %v2557 = vadd.f32 0.0, %v2556
    %v2558 = vpop.f32.mrb[0].mxu0
    %v2559 = vadd.f32 0.0, %v2558
    %v2560 = vpop.f32.mrb[0].mxu0
    %v2561 = vadd.f32 0.0, %v2560
    %v2562 = vpop.f32.mrb[0].mxu0
    %v2563 = vadd.f32 0.0, %v2562
    %2564 = vmatprep.mubr.bf16.mxu0 0
    %2565 = vmatmul.mubr.bf16.gmra.mrb[0].mxu0 %v2422
    %v2566 = vpop.f32.mrb[0].mxu0
    %v2567 = vadd.f32 0.0, %v2566
    %v2568 = vpop.f32.mrb[0].mxu0
    %v2569 = vadd.f32 0.0, %v2568
    %v2570 = vpop.f32.mrb[0].mxu0
    %v2571 = vadd.f32 0.0, %v2570
    %v2572 = vpop.f32.mrb[0].mxu0
    %v2573 = vadd.f32 0.0, %v2572
    %2574 = vmatprep.mubr.bf16.mxu0 0
    %2575 = vmatmul.mubr.bf16.gmra.mrb[0].mxu0 %v2425
    %v2576 = vpop.f32.mrb[0].mxu0
    %v2577 = vadd.f32 0.0, %v2576
    %v2578 = vpop.f32.mrb[0].mxu0
    %v2579 = vadd.f32 0.0, %v2578
    %v2580 = vpop.f32.mrb[0].mxu0
    %v2581 = vadd.f32 0.0, %v2580
    %v2582 = vpop.f32.mrb[0].mxu0
    %v2583 = vadd.f32 0.0, %v2582
    %2584 = vmatprep.mubr.bf16.mxu0 0
    %2585 = vmatmul.mubr.bf16.gmra.mrb[0].mxu0 %v2428
    %v2586 = vpop.f32.mrb[0].mxu0
    %v2587 = vadd.f32 0.0, %v2586
    %v2588 = vpop.f32.mrb[0].mxu0
    %v2589 = vadd.f32 0.0, %v2588
    %v2590 = vpop.f32.mrb[0].mxu0
    %v2591 = vadd.f32 0.0, %v2590
    %v2592 = vpop.f32.mrb[0].mxu0
    %v2593 = vadd.f32 0.0, %v2592
    %2594 = vmatprep.mubr.bf16.mxu0 0
    %2595 = vmatmul.mubr.bf16.gmra.mrb[0].mxu0 %v2431
    %v2596 = vpop.f32.mrb[0].mxu0
    %v2597 = vadd.f32 0.0, %v2596
    %v2598 = vpop.f32.mrb[0].mxu0
    %v2599 = vadd.f32 0.0, %v2598
    %v2600 = vpop.f32.mrb[0].mxu0
    %v2601 = vadd.f32 0.0, %v2600
    %v2602 = vpop.f32.mrb[0].mxu0
    %v2603 = vadd.f32 0.0, %v2602
    %2604 = vmatprep.mubr.bf16.mxu0 0
    %2605 = vmatmul.mubr.bf16.gmra.mrb[0].mxu0 %v2434
    %v2606 = vpop.f32.mrb[0].mxu0
    %v2607 = vadd.f32 0.0, %v2606
    %v2608 = vpop.f32.mrb[0].mxu0
    %v2609 = vadd.f32 0.0, %v2608
    %v2610 = vpop.f32.mrb[0].mxu0
    %v2611 = vadd.f32 0.0, %v2610
    %v2612 = vpop.f32.mrb[0].mxu0
    %v2613 = vadd.f32 0.0, %v2612
    %2614 = vmatprep.mubr.bf16.mxu0 0
    %2615 = vmatmul.mubr.bf16.gmra.mrb[0].mxu0 %v2437
    %v2616 = vpop.f32.mrb[0].mxu0
    %v2617 = vadd.f32 0.0, %v2616
    %v2618 = vpop.f32.mrb[0].mxu0
    %v2619 = vadd.f32 0.0, %v2618
    %v2620 = vpop.f32.mrb[0].mxu0
    %v2621 = vadd.f32 0.0, %v2620
    %v2622 = vpop.f32.mrb[0].mxu0
    %v2623 = vadd.f32 0.0, %v2622
    %2624 = vmatprep.mubr.bf16.mxu0 0
    %2625 = vmatmul.mubr.bf16.gmra.mrb[0].mxu0 %v2440
    %v2626 = vpop.f32.mrb[0].mxu0
    %v2627 = vadd.f32 0.0, %v2626
    %v2628 = vpop.f32.mrb[0].mxu0
    %v2629 = vadd.f32 0.0, %v2628
    %v2630 = vpop.f32.mrb[0].mxu0
    %v2631 = vadd.f32 0.0, %v2630
    %v2632 = vpop.f32.mrb[0].mxu0
    %v2633 = vadd.f32 0.0, %v2632
    %2634 = vdwg.mxu0
    %v2635 = vmax.f32 %v2477, %v2479
    %2636 = vmax.xlane.f32.xlu0 %v2635
    %v2637 = vpop.xlane.xlu0 %2636
    %v2638 = vmax.f32 %v2481, %v2483
    %2639 = vmax.xlane.f32.xlu0 %v2638
    %v2640 = vpop.xlane.xlu0 %2639
    %v2641 = vmax.f32 %v2487, %v2489
    %2642 = vmax.xlane.f32.xlu0 %v2641
    %v2643 = vpop.xlane.xlu0 %2642
    %v2644 = vmax.f32 %v2491, %v2493
    %2645 = vmax.xlane.f32.xlu0 %v2644
    %v2646 = vpop.xlane.xlu0 %2645
    %v2647 = vmax.f32 %v2497, %v2499
    %2648 = vmax.xlane.f32.xlu0 %v2647
    %v2649 = vpop.xlane.xlu0 %2648
    %v2650 = vmax.f32 %v2501, %v2503
    %2651 = vmax.xlane.f32.xlu0 %v2650
    %v2652 = vpop.xlane.xlu0 %2651
    %v2653 = vmax.f32 %v2507, %v2509
    %2654 = vmax.xlane.f32.xlu0 %v2653
    %v2655 = vpop.xlane.xlu0 %2654
    %v2656 = vmax.f32 %v2511, %v2513
    %2657 = vmax.xlane.f32.xlu0 %v2656
    %v2658 = vpop.xlane.xlu0 %2657
    %v2659 = vmax.f32 %v2517, %v2519
    %2660 = vmax.xlane.f32.xlu0 %v2659
    %v2661 = vpop.xlane.xlu0 %2660
    %v2662 = vmax.f32 %v2521, %v2523
    %2663 = vmax.xlane.f32.xlu0 %v2662
    %v2664 = vpop.xlane.xlu0 %2663
    %v2665 = vmax.f32 %v2527, %v2529
    %2666 = vmax.xlane.f32.xlu0 %v2665
    %v2667 = vpop.xlane.xlu0 %2666
    %v2668 = vmax.f32 %v2531, %v2533
    %2669 = vmax.xlane.f32.xlu0 %v2668
    %v2670 = vpop.xlane.xlu0 %2669
    %v2671 = vmax.f32 %v2537, %v2539
    %2672 = vmax.xlane.f32.xlu0 %v2671
    %v2673 = vpop.xlane.xlu0 %2672
    %v2674 = vmax.f32 %v2541, %v2543
    %2675 = vmax.xlane.f32.xlu0 %v2674
    %v2676 = vpop.xlane.xlu0 %2675
    %v2677 = vmax.f32 %v2547, %v2549
    %2678 = vmax.xlane.f32.xlu0 %v2677
    %v2679 = vpop.xlane.xlu0 %2678
    %v2680 = vmax.f32 %v2551, %v2553
    %2681 = vmax.xlane.f32.xlu0 %v2680
    %v2682 = vpop.xlane.xlu0 %2681
    %v2683 = vmax.f32 %v2557, %v2559
    %2684 = vmax.xlane.f32.xlu0 %v2683
    %v2685 = vpop.xlane.xlu0 %2684
    %v2686 = vmax.f32 %v2561, %v2563
    %2687 = vmax.xlane.f32.xlu0 %v2686
    %v2688 = vpop.xlane.xlu0 %2687
    %v2689 = vmax.f32 %v2567, %v2569
    %2690 = vmax.xlane.f32.xlu0 %v2689
    %v2691 = vpop.xlane.xlu0 %2690
    %v2692 = vmax.f32 %v2571, %v2573
    %2693 = vmax.xlane.f32.xlu0 %v2692
    %v2694 = vpop.xlane.xlu0 %2693
    %v2695 = vmax.f32 %v2577, %v2579
    %2696 = vmax.xlane.f32.xlu0 %v2695
    %v2697 = vpop.xlane.xlu0 %2696
    %v2698 = vmax.f32 %v2581, %v2583
    %2699 = vmax.xlane.f32.xlu0 %v2698
    %v2700 = vpop.xlane.xlu0 %2699
    %v2701 = vmax.f32 %v2587, %v2589
    %2702 = vmax.xlane.f32.xlu0 %v2701
    %v2703 = vpop.xlane.xlu0 %2702
    %v2704 = vmax.f32 %v2591, %v2593
    %2705 = vmax.xlane.f32.xlu0 %v2704
    %v2706 = vpop.xlane.xlu0 %2705
    %v2707 = vmax.f32 %v2597, %v2599
    %2708 = vmax.xlane.f32.xlu0 %v2707
    %v2709 = vpop.xlane.xlu0 %2708
    %v2710 = vmax.f32 %v2601, %v2603
    %2711 = vmax.xlane.f32.xlu0 %v2710
    %v2712 = vpop.xlane.xlu0 %2711
    %v2713 = vmax.f32 %v2607, %v2609
    %2714 = vmax.xlane.f32.xlu0 %v2713
    %v2715 = vpop.xlane.xlu0 %2714
    %v2716 = vmax.f32 %v2611, %v2613
    %2717 = vmax.xlane.f32.xlu0 %v2716
    %v2718 = vpop.xlane.xlu0 %2717
    %v2719 = vmax.f32 %v2617, %v2619
    %2720 = vmax.xlane.f32.xlu0 %v2719
    %v2721 = vpop.xlane.xlu0 %2720
    %v2722 = vmax.f32 %v2621, %v2623
    %2723 = vmax.xlane.f32.xlu0 %v2722
    %v2724 = vpop.xlane.xlu0 %2723
    %v2725 = vmax.f32 %v2627, %v2629
    %2726 = vmax.xlane.f32.xlu0 %v2725
    %v2727 = vpop.xlane.xlu0 %2726
    %v2728 = vmax.f32 %v2631, %v2633
    %2729 = vmax.xlane.f32.xlu0 %v2728
    %v2730 = vpop.xlane.xlu0 %2729
    %v2731 = vsub.f32 %v2477, %v2637
    %v2732 = vsub.f32 %v2479, %v2637
    %v2733 = vsub.f32 %v2481, %v2640
    %v2734 = vsub.f32 %v2483, %v2640
    %v2735 = vsub.f32 %v2487, %v2643
    %v2736 = vsub.f32 %v2489, %v2643
    %v2737 = vsub.f32 %v2491, %v2646
    %v2738 = vsub.f32 %v2493, %v2646
    %v2739 = vsub.f32 %v2497, %v2649
    %v2740 = vsub.f32 %v2499, %v2649
    %v2741 = vsub.f32 %v2501, %v2652
    %v2742 = vsub.f32 %v2503, %v2652
    %v2743 = vsub.f32 %v2507, %v2655
    %v2744 = vsub.f32 %v2509, %v2655
    %v2745 = vsub.f32 %v2511, %v2658
    %v2746 = vsub.f32 %v2513, %v2658
    %v2747 = vsub.f32 %v2517, %v2661
    %v2748 = vsub.f32 %v2519, %v2661
    %v2749 = vsub.f32 %v2521, %v2664
    %v2750 = vsub.f32 %v2523, %v2664
    %v2751 = vsub.f32 %v2527, %v2667
    %v2752 = vsub.f32 %v2529, %v2667
    %v2753 = vsub.f32 %v2531, %v2670
    %v2754 = vsub.f32 %v2533, %v2670
    %v2755 = vsub.f32 %v2537, %v2673
    %v2756 = vsub.f32 %v2539, %v2673
    %v2757 = vsub.f32 %v2541, %v2676
    %v2758 = vsub.f32 %v2543, %v2676
    %v2759 = vsub.f32 %v2547, %v2679
    %v2760 = vsub.f32 %v2549, %v2679
    %v2761 = vsub.f32 %v2551, %v2682
    %v2762 = vsub.f32 %v2553, %v2682
    %v2763 = vsub.f32 %v2557, %v2685
    %v2764 = vsub.f32 %v2559, %v2685
    %v2765 = vsub.f32 %v2561, %v2688
    %v2766 = vsub.f32 %v2563, %v2688
    %v2767 = vsub.f32 %v2567, %v2691
    %v2768 = vsub.f32 %v2569, %v2691
    %v2769 = vsub.f32 %v2571, %v2694
    %v2770 = vsub.f32 %v2573, %v2694
    %v2771 = vsub.f32 %v2577, %v2697
    %v2772 = vsub.f32 %v2579, %v2697
    %v2773 = vsub.f32 %v2581, %v2700
    %v2774 = vsub.f32 %v2583, %v2700
    %v2775 = vsub.f32 %v2587, %v2703
    %v2776 = vsub.f32 %v2589, %v2703
    %v2777 = vsub.f32 %v2591, %v2706
    %v2778 = vsub.f32 %v2593, %v2706
    %v2779 = vsub.f32 %v2597, %v2709
    %v2780 = vsub.f32 %v2599, %v2709
    %v2781 = vsub.f32 %v2601, %v2712
    %v2782 = vsub.f32 %v2603, %v2712
    %v2783 = vsub.f32 %v2607, %v2715
    %v2784 = vsub.f32 %v2609, %v2715
    %v2785 = vsub.f32 %v2611, %v2718
    %v2786 = vsub.f32 %v2613, %v2718
    %v2787 = vsub.f32 %v2617, %v2721
    %v2788 = vsub.f32 %v2619, %v2721
    %v2789 = vsub.f32 %v2621, %v2724
    %v2790 = vsub.f32 %v2623, %v2724
    %v2791 = vsub.f32 %v2627, %v2727
    %v2792 = vsub.f32 %v2629, %v2727
    %v2793 = vsub.f32 %v2631, %v2730
    %v2794 = vsub.f32 %v2633, %v2730
    %v2795 = vmul.f32 %v2731, 1.442695
    %v2796 = vpow.pop %v2795
    %v2797 = vmul.f32 %v2732, 1.442695
    %v2798 = vpow.pop %v2797
    %v2799 = vmul.f32 %v2733, 1.442695
    %v2800 = vpow.pop %v2799
    %v2801 = vmul.f32 %v2734, 1.442695
    %v2802 = vpow.pop %v2801
    %v2803 = vmul.f32 %v2735, 1.442695
    %v2804 = vpow.pop %v2803
    %v2805 = vmul.f32 %v2736, 1.442695
    %v2806 = vpow.pop %v2805
    %v2807 = vmul.f32 %v2737, 1.442695
    %v2808 = vpow.pop %v2807
    %v2809 = vmul.f32 %v2738, 1.442695
    %v2810 = vpow.pop %v2809
    %v2811 = vmul.f32 %v2739, 1.442695
    %v2812 = vpow.pop %v2811
    %v2813 = vmul.f32 %v2740, 1.442695
    %v2814 = vpow.pop %v2813
    %v2815 = vmul.f32 %v2741, 1.442695
    %v2816 = vpow.pop %v2815
    %v2817 = vmul.f32 %v2742, 1.442695
    %v2818 = vpow.pop %v2817
    %v2819 = vmul.f32 %v2743, 1.442695
    %v2820 = vpow.pop %v2819
    %v2821 = vmul.f32 %v2744, 1.442695
    %v2822 = vpow.pop %v2821
    %v2823 = vmul.f32 %v2745, 1.442695
    %v2824 = vpow.pop %v2823
    %v2825 = vmul.f32 %v2746, 1.442695
    %v2826 = vpow.pop %v2825
    %v2827 = vmul.f32 %v2747, 1.442695
    %v2828 = vpow.pop %v2827
    %v2829 = vmul.f32 %v2748, 1.442695
    %v2830 = vpow.pop %v2829
    %v2831 = vmul.f32 %v2749, 1.442695
    %v2832 = vpow.pop %v2831
    %v2833 = vmul.f32 %v2750, 1.442695
    %v2834 = vpow.pop %v2833
    %v2835 = vmul.f32 %v2751, 1.442695
    %v2836 = vpow.pop %v2835
    %v2837 = vmul.f32 %v2752, 1.442695
    %v2838 = vpow.pop %v2837
    %v2839 = vmul.f32 %v2753, 1.442695
    %v2840 = vpow.pop %v2839
    %v2841 = vmul.f32 %v2754, 1.442695
    %v2842 = vpow.pop %v2841
    %v2843 = vmul.f32 %v2755, 1.442695
    %v2844 = vpow.pop %v2843
    %v2845 = vmul.f32 %v2756, 1.442695
    %v2846 = vpow.pop %v2845
    %v2847 = vmul.f32 %v2757, 1.442695
    %v2848 = vpow.pop %v2847
    %v2849 = vmul.f32 %v2758, 1.442695
    %v2850 = vpow.pop %v2849
    %v2851 = vmul.f32 %v2759, 1.442695
    %v2852 = vpow.pop %v2851
    %v2853 = vmul.f32 %v2760, 1.442695
    %v2854 = vpow.pop %v2853
    %v2855 = vmul.f32 %v2761, 1.442695
    %v2856 = vpow.pop %v2855
    %v2857 = vmul.f32 %v2762, 1.442695
    %v2858 = vpow.pop %v2857
    %v2859 = vmul.f32 %v2763, 1.442695
    %v2860 = vpow.pop %v2859
    %v2861 = vmul.f32 %v2764, 1.442695
    %v2862 = vpow.pop %v2861
    %v2863 = vmul.f32 %v2765, 1.442695
    %v2864 = vpow.pop %v2863
    %v2865 = vmul.f32 %v2766, 1.442695
    %v2866 = vpow.pop %v2865
    %v2867 = vmul.f32 %v2767, 1.442695
    %v2868 = vpow.pop %v2867
    %v2869 = vmul.f32 %v2768, 1.442695
    %v2870 = vpow.pop %v2869
    %v2871 = vmul.f32 %v2769, 1.442695
    %v2872 = vpow.pop %v2871
    %v2873 = vmul.f32 %v2770, 1.442695
    %v2874 = vpow.pop %v2873
    %v2875 = vmul.f32 %v2771, 1.442695
    %v2876 = vpow.pop %v2875
    %v2877 = vmul.f32 %v2772, 1.442695
    %v2878 = vpow.pop %v2877
    %v2879 = vmul.f32 %v2773, 1.442695
    %v2880 = vpow.pop %v2879
    %v2881 = vmul.f32 %v2774, 1.442695
    %v2882 = vpow.pop %v2881
    %v2883 = vmul.f32 %v2775, 1.442695
    %v2884 = vpow.pop %v2883
    %v2885 = vmul.f32 %v2776, 1.442695
    %v2886 = vpow.pop %v2885
    %v2887 = vmul.f32 %v2777, 1.442695
    %v2888 = vpow.pop %v2887
    %v2889 = vmul.f32 %v2778, 1.442695
    %v2890 = vpow.pop %v2889
    %v2891 = vmul.f32 %v2779, 1.442695
    %v2892 = vpow.pop %v2891
    %v2893 = vmul.f32 %v2780, 1.442695
    %v2894 = vpow.pop %v2893
    %v2895 = vmul.f32 %v2781, 1.442695
    %v2896 = vpow.pop %v2895
    %v2897 = vmul.f32 %v2782, 1.442695
    %v2898 = vpow.pop %v2897
    %v2899 = vmul.f32 %v2783, 1.442695
    %v2900 = vpow.pop %v2899
    %v2901 = vmul.f32 %v2784, 1.442695
    %v2902 = vpow.pop %v2901
    %v2903 = vmul.f32 %v2785, 1.442695
    %v2904 = vpow.pop %v2903
    %v2905 = vmul.f32 %v2786, 1.442695
    %v2906 = vpow.pop %v2905
    %v2907 = vmul.f32 %v2787, 1.442695
    %v2908 = vpow.pop %v2907
    %v2909 = vmul.f32 %v2788, 1.442695
    %v2910 = vpow.pop %v2909
    %v2911 = vmul.f32 %v2789, 1.442695
    %v2912 = vpow.pop %v2911
    %v2913 = vmul.f32 %v2790, 1.442695
    %v2914 = vpow.pop %v2913
    %v2915 = vmul.f32 %v2791, 1.442695
    %v2916 = vpow.pop %v2915
    %v2917 = vmul.f32 %v2792, 1.442695
    %v2918 = vpow.pop %v2917
    %v2919 = vmul.f32 %v2793, 1.442695
    %v2920 = vpow.pop %v2919
    %v2921 = vmul.f32 %v2794, 1.442695
    %v2922 = vpow.pop %v2921
    %v2923 = vpack.c.bf16 %v2800, %v2796
    %v2924 = vpack.c.bf16 %v2802, %v2798
    %v2925 = vpack.c.bf16 %v2808, %v2804
    %v2926 = vpack.c.bf16 %v2810, %v2806
    %v2927 = vpack.c.bf16 %v2816, %v2812
    %v2928 = vpack.c.bf16 %v2818, %v2814
    %v2929 = vpack.c.bf16 %v2824, %v2820
    %v2930 = vpack.c.bf16 %v2826, %v2822
    %v2931 = vpack.c.bf16 %v2832, %v2828
    %v2932 = vpack.c.bf16 %v2834, %v2830
    %v2933 = vpack.c.bf16 %v2840, %v2836
    %v2934 = vpack.c.bf16 %v2842, %v2838
    %v2935 = vpack.c.bf16 %v2848, %v2844
    %v2936 = vpack.c.bf16 %v2850, %v2846
    %v2937 = vpack.c.bf16 %v2856, %v2852
    %v2938 = vpack.c.bf16 %v2858, %v2854
    %v2939 = vpack.c.bf16 %v2864, %v2860
    %v2940 = vpack.c.bf16 %v2866, %v2862
    %v2941 = vpack.c.bf16 %v2872, %v2868
    %v2942 = vpack.c.bf16 %v2874, %v2870
    %v2943 = vpack.c.bf16 %v2880, %v2876
    %v2944 = vpack.c.bf16 %v2882, %v2878
    %v2945 = vpack.c.bf16 %v2888, %v2884
    %v2946 = vpack.c.bf16 %v2890, %v2886
    %v2947 = vpack.c.bf16 %v2896, %v2892
    %v2948 = vpack.c.bf16 %v2898, %v2894
    %v2949 = vpack.c.bf16 %v2904, %v2900
    %v2950 = vpack.c.bf16 %v2906, %v2902
    %v2951 = vpack.c.bf16 %v2912, %v2908
    %v2952 = vpack.c.bf16 %v2914, %v2910
    %v2953 = vpack.c.bf16 %v2920, %v2916
    %v2954 = vpack.c.bf16 %v2922, %v2918
    %2955 = vmatprep.subr.bf16.mxu0 %v2924
    %2956 = vmatpush1.bf16.xpose.msra.mxu0 %v2923
    %2957 = vmatprep.subr.bf16.mxu0 %v2926
    %2958 = vmatpush1.bf16.xpose.msra.mxu0 %v2925
    %2959 = vmatprep.subr.bf16.mxu0 %v2928
    %2960 = vmatpush1.bf16.xpose.msra.mxu0 %v2927
    %2961 = vmatprep.subr.bf16.mxu0 %v2930
    %2962 = vmatpush1.bf16.xpose.msra.mxu0 %v2929
    %2963 = vmatprep.subr.bf16.mxu0 %v2932
    %2964 = vmatpush1.bf16.xpose.msra.mxu0 %v2931
    %2965 = vmatprep.subr.bf16.mxu0 %v2934
    %2966 = vmatpush1.bf16.xpose.msra.mxu0 %v2933
    %2967 = vmatprep.subr.bf16.mxu0 %v2936
    %2968 = vmatpush1.bf16.xpose.msra.mxu0 %v2935
    %2969 = vmatprep.subr.bf16.mxu0 %v2938
    %2970 = vmatpush1.bf16.xpose.msra.mxu0 %v2937
    %2971 = vmatprep.subr.bf16.mxu0 %v2940
    %2972 = vmatpush1.bf16.xpose.msra.mxu0 %v2939
    %2973 = vmatprep.subr.bf16.mxu0 %v2942
    %2974 = vmatpush1.bf16.xpose.msra.mxu0 %v2941
    %2975 = vmatprep.subr.bf16.mxu0 %v2944
    %2976 = vmatpush1.bf16.xpose.msra.mxu0 %v2943
    %2977 = vmatprep.subr.bf16.mxu0 %v2946
    %2978 = vmatpush1.bf16.xpose.msra.mxu0 %v2945
    %2979 = vmatprep.subr.bf16.mxu0 %v2948
    %2980 = vmatpush1.bf16.xpose.msra.mxu0 %v2947
    %2981 = vmatprep.subr.bf16.mxu0 %v2950
    %2982 = vmatpush1.bf16.xpose.msra.mxu0 %v2949
    %2983 = vmatprep.subr.bf16.mxu0 %v2952
    %2984 = vmatpush1.bf16.xpose.msra.mxu0 %v2951
    %2985 = vmatprep.subr.bf16.mxu0 %v2954
    %2986 = vmatpush1.bf16.xpose.msra.mxu0 %v2953
    %2987 = vmatprep.mubr.bf16.mxu0 %v2355
    %2988 = vmatmul.mubr.bf16.gmra.mrb[0].mxu0 %v2354
    %v2989 = vpop.f32.mrb[0].mxu0
    %v2990 = vadd.f32 0.0, %v2989
    %v2991 = vpop.f32.mrb[0].mxu0
    %v2992 = vadd.f32 0.0, %v2991
    %v2993 = vpop.f32.mrb[0].mxu0
    %v2994 = vadd.f32 0.0, %v2993
    %v2995 = vpop.f32.mrb[0].mxu0
    %v2996 = vadd.f32 0.0, %v2995
    %2997 = vmatprep.mubr.bf16.mxu0 %v2357
    %2998 = vmatmul.mubr.bf16.gmra.mrb[0].mxu0 %v2356
    %v2999 = vpop.f32.mrb[0].mxu0
    %v3000 = vadd.f32 0.0, %v2999
    %v3001 = vpop.f32.mrb[0].mxu0
    %v3002 = vadd.f32 0.0, %v3001
    %v3003 = vpop.f32.mrb[0].mxu0
    %v3004 = vadd.f32 0.0, %v3003
    %v3005 = vpop.f32.mrb[0].mxu0
    %v3006 = vadd.f32 0.0, %v3005
    %3007 = vmatprep.mubr.bf16.mxu0 %v2359
    %3008 = vmatmul.mubr.bf16.gmra.mrb[0].mxu0 %v2358
    %v3009 = vpop.f32.mrb[0].mxu0
    %v3010 = vadd.f32 0.0, %v3009
    %v3011 = vpop.f32.mrb[0].mxu0
    %v3012 = vadd.f32 0.0, %v3011
    %v3013 = vpop.f32.mrb[0].mxu0
    %v3014 = vadd.f32 0.0, %v3013
    %v3015 = vpop.f32.mrb[0].mxu0
    %v3016 = vadd.f32 0.0, %v3015
    %3017 = vmatprep.mubr.bf16.mxu0 %v2361
    %3018 = vmatmul.mubr.bf16.gmra.mrb[0].mxu0 %v2360
    %v3019 = vpop.f32.mrb[0].mxu0
    %v3020 = vadd.f32 0.0, %v3019
    %v3021 = vpop.f32.mrb[0].mxu0
    %v3022 = vadd.f32 0.0, %v3021
    %v3023 = vpop.f32.mrb[0].mxu0
    %v3024 = vadd.f32 0.0, %v3023
    %v3025 = vpop.f32.mrb[0].mxu0
    %v3026 = vadd.f32 0.0, %v3025
    %3027 = vdwg.mxu0
    %3028 = vmatprep.subr.bf16.mxu0 %v2924
    %3029 = vmatpush1.bf16.xpose.msra.mxu0 %v2923
    %3030 = vmatprep.subr.bf16.mxu0 %v2926
    %3031 = vmatpush1.bf16.xpose.msra.mxu0 %v2925
    %3032 = vmatprep.subr.bf16.mxu0 %v2928
    %3033 = vmatpush1.bf16.xpose.msra.mxu0 %v2927
    %3034 = vmatprep.subr.bf16.mxu0 %v2930
    %3035 = vmatpush1.bf16.xpose.msra.mxu0 %v2929
    %3036 = vmatprep.subr.bf16.mxu0 %v2932
    %3037 = vmatpush1.bf16.xpose.msra.mxu0 %v2931
    %3038 = vmatprep.subr.bf16.mxu0 %v2934
    %3039 = vmatpush1.bf16.xpose.msra.mxu0 %v2933
    %3040 = vmatprep.subr.bf16.mxu0 %v2936
    %3041 = vmatpush1.bf16.xpose.msra.mxu0 %v2935
    %3042 = vmatprep.subr.bf16.mxu0 %v2938
    %3043 = vmatpush1.bf16.xpose.msra.mxu0 %v2937
    %3044 = vmatprep.subr.bf16.mxu0 %v2940
    %3045 = vmatpush1.bf16.xpose.msra.mxu0 %v2939
    %3046 = vmatprep.subr.bf16.mxu0 %v2942
    %3047 = vmatpush1.bf16.xpose.msra.mxu0 %v2941
    %3048 = vmatprep.subr.bf16.mxu0 %v2944
    %3049 = vmatpush1.bf16.xpose.msra.mxu0 %v2943
    %3050 = vmatprep.subr.bf16.mxu0 %v2946
    %3051 = vmatpush1.bf16.xpose.msra.mxu0 %v2945
    %3052 = vmatprep.subr.bf16.mxu0 %v2948
    %3053 = vmatpush1.bf16.xpose.msra.mxu0 %v2947
    %3054 = vmatprep.subr.bf16.mxu0 %v2950
    %3055 = vmatpush1.bf16.xpose.msra.mxu0 %v2949
    %3056 = vmatprep.subr.bf16.mxu0 %v2952
    %3057 = vmatpush1.bf16.xpose.msra.mxu0 %v2951
    %3058 = vmatprep.subr.bf16.mxu0 %v2954
    %3059 = vmatpush1.bf16.xpose.msra.mxu0 %v2953
    %3060 = vmatprep.mubr.bf16.mxu0 1065369472
    %3061 = vmatmul.mubr.bf16.gmra.mrb[0].mxu0 1065369472
    %v3062 = vpop.f32.mrb[0].mxu0
    %v3063 = vadd.f32 0.0, %v3062
    %v3064 = vpop.f32.mrb[0].mxu0
    %v3065 = vadd.f32 0.0, %v3064
    %v3066 = vpop.f32.mrb[0].mxu0
    %v3067 = vpop.f32.mrb[0].mxu0
    %3068 = vdwg.mxu0
    %v3069 = vrcp.pop %v3063
    %v3070 = vrcp.pop %v3065
    %v3071 = vlaneseq
    %v3072 = vshrl.u32 %v3071, 7
    %v3073 = vsub.s32 0, %v3072
    %v3074 = vrot.slane %v3069, %v3073
    %v3075 = vlaneseq
    %v3076 = vshrl.u32 %v3075, 7
    %v3077 = vsub.s32 0, %v3076
    %v3078 = vrot.slane %v3070, %v3077
    %v3079 = vmul.f32 %v2990, %v3074
    %v3080 = vmul.f32 %v2992, %v3078
    %v3081 = vmul.f32 %v2994, %v3074
    %v3082 = vmul.f32 %v2996, %v3078
    %v3083 = vmul.f32 %v3000, %v3074
    %v3084 = vmul.f32 %v3002, %v3078
    %v3085 = vmul.f32 %v3004, %v3074
    %v3086 = vmul.f32 %v3006, %v3078
    %v3087 = vmul.f32 %v3010, %v3074
    %v3088 = vmul.f32 %v3012, %v3078
    %v3089 = vmul.f32 %v3014, %v3074
    %v3090 = vmul.f32 %v3016, %v3078
    %v3091 = vmul.f32 %v3020, %v3074
    %v3092 = vmul.f32 %v3022, %v3078
    %v3093 = vmul.f32 %v3024, %v3074
    %v3094 = vmul.f32 %v3026, %v3078
    %v3095 = vpack.c.bf16 %v3081, %v3079
    %v3096 = vpack.c.bf16 %v3082, %v3080
    %v3097 = vpack.c.bf16 %v3085, %v3083
    %v3098 = vpack.c.bf16 %v3086, %v3084
    %v3099 = vpack.c.bf16 %v3089, %v3087
    %v3100 = vpack.c.bf16 %v3090, %v3088
    %v3101 = vpack.c.bf16 %v3093, %v3091
    %v3102 = vpack.c.bf16 %v3094, %v3092
    %3103 = vmatprep.subr.bf16.mxu0 %v3096
    %3104 = vmatpush1.bf16.msra.mxu0 %v3095
    %3105 = vmatprep.subr.bf16.mxu0 %v3098
    %3106 = vmatpush1.bf16.msra.mxu0 %v3097
    %3107 = vmatprep.subr.bf16.mxu0 %v3100
    %3108 = vmatpush1.bf16.msra.mxu0 %v3099
    %3109 = vmatprep.subr.bf16.mxu0 %v3102
    %3110 = vmatpush1.bf16.msra.mxu0 %v3101
    %3111 = vmatprep.subr.bf16.mxu0 0
    %3112 = vmatpush1.bf16.msra.mxu0 0
    %3113 = vmatprep.subr.bf16.mxu0 0
    %3114 = vmatpush1.bf16.msra.mxu0 0
    %3115 = vmatprep.subr.bf16.mxu0 0
    %3116 = vmatpush1.bf16.msra.mxu0 0
    %3117 = vmatprep.subr.bf16.mxu0 0
    %3118 = vmatpush1.bf16.msra.mxu0 0
    %3119 = vmatprep.subr.bf16.mxu0 0
    %3120 = vmatpush1.bf16.msra.mxu0 0
    %3121 = vmatprep.subr.bf16.mxu0 0
    %3122 = vmatpush1.bf16.msra.mxu0 0
    %3123 = vmatprep.subr.bf16.mxu0 0
    %3124 = vmatpush1.bf16.msra.mxu0 0
    %3125 = vmatprep.subr.bf16.mxu0 0
    %3126 = vmatpush1.bf16.msra.mxu0 0
    %3127 = vmatprep.subr.bf16.mxu0 0
    %3128 = vmatpush1.bf16.msra.mxu0 0
    %3129 = vmatprep.subr.bf16.mxu0 0
    %3130 = vmatpush1.bf16.msra.mxu0 0
    %3131 = vmatprep.subr.bf16.mxu0 0
    %3132 = vmatpush1.bf16.msra.mxu0 0
    %3133 = vmatprep.subr.bf16.mxu0 0
    %3134 = vmatpush1.bf16.msra.mxu0 0
    %3135 = vmatprep.mubr.bf16.mxu0 0
    %3136 = vmatmul.mubr.bf16.gmra.mrb[0].mxu0 %v1667
    %v3137 = vpop.f32.mrb[0].mxu0
    %v3138 = vadd.f32 %v1609, %v3137
    %v3139 = vpop.f32.mrb[0].mxu0
    %v3140 = vadd.f32 %v1609, %v3139
    %v3141 = vpop.f32.mrb[0].mxu0
    %v3142 = vadd.f32 %v1614, %v3141
    %v3143 = vpop.f32.mrb[0].mxu0
    %v3144 = vadd.f32 %v1614, %v3143
    %3145 = vmatprep.mubr.bf16.mxu0 0
    %3146 = vmatmul.mubr.bf16.gmra.mrb[0].mxu0 %v1670
    %v3147 = vpop.f32.mrb[0].mxu0
    %v3148 = vadd.f32 %v1619, %v3147
    %v3149 = vpop.f32.mrb[0].mxu0
    %v3150 = vadd.f32 %v1619, %v3149
    %v3151 = vpop.f32.mrb[0].mxu0
    %v3152 = vadd.f32 %v1624, %v3151
    %v3153 = vpop.f32.mrb[0].mxu0
    %v3154 = vadd.f32 %v1624, %v3153
    %3155 = vmatprep.mubr.bf16.mxu0 0
    %3156 = vmatmul.mubr.bf16.gmra.mrb[0].mxu0 %v1673
    %v3157 = vpop.f32.mrb[0].mxu0
    %v3158 = vadd.f32 %v1629, %v3157
    %v3159 = vpop.f32.mrb[0].mxu0
    %v3160 = vadd.f32 %v1629, %v3159
    %v3161 = vpop.f32.mrb[0].mxu0
    %v3162 = vadd.f32 %v1634, %v3161
    %v3163 = vpop.f32.mrb[0].mxu0
    %v3164 = vadd.f32 %v1634, %v3163
    %3165 = vmatprep.mubr.bf16.mxu0 0
    %3166 = vmatmul.mubr.bf16.gmra.mrb[0].mxu0 %v1676
    %v3167 = vpop.f32.mrb[0].mxu0
    %v3168 = vadd.f32 %v1639, %v3167
    %v3169 = vpop.f32.mrb[0].mxu0
    %v3170 = vadd.f32 %v1639, %v3169
    %v3171 = vpop.f32.mrb[0].mxu0
    %v3172 = vadd.f32 %v1644, %v3171
    %v3173 = vpop.f32.mrb[0].mxu0
    %v3174 = vadd.f32 %v1644, %v3173
    %3175 = vdwg.mxu0
    %v3176 = vadd.f32 %v3138, %v1784
    %v3177 = vadd.f32 %v3140, %v1785
    %v3178 = vadd.f32 %v3142, %v1786
    %v3179 = vadd.f32 %v3144, %v1787
    %v3180 = vadd.f32 %v3148, %v1788
    %v3181 = vadd.f32 %v3150, %v1789
    %v3182 = vadd.f32 %v3152, %v1790
    %v3183 = vadd.f32 %v3154, %v1791
    %v3184 = vadd.f32 %v3158, %v1792
    %v3185 = vadd.f32 %v3160, %v1793
    %v3186 = vadd.f32 %v3162, %v1794
    %v3187 = vadd.f32 %v3164, %v1795
    %v3188 = vadd.f32 %v3168, %v1796
    %v3189 = vadd.f32 %v3170, %v1797
    %v3190 = vadd.f32 %v3172, %v1798
    %v3191 = vadd.f32 %v3174, %v1799
    %s3192 = scalar_lea.vmem [#allocation2], 128
    %3193 = vst [vmem:[%s3192] sm:$0xff] %v3176
    %3194 = vst [vmem:[%s3192 + $0x8] sm:$0xff] %v3177
    %3195 = vst [vmem:[%s3192 + $0x10] sm:$0xff] %v3178
    %3196 = vst [vmem:[%s3192 + $0x18] sm:$0xff] %v3179
    %3197 = vst [vmem:[%s3192 + $0x20] sm:$0xff] %v3180
    %3198 = vst [vmem:[%s3192 + $0x28] sm:$0xff] %v3181
    %3199 = vst [vmem:[%s3192 + $0x30] sm:$0xff] %v3182
    %3200 = vst [vmem:[%s3192 + $0x38] sm:$0xff] %v3183
    %3201 = vst [vmem:[%s3192 + $0x40] sm:$0xff] %v3184
    %3202 = vst [vmem:[%s3192 + $0x48] sm:$0xff] %v3185
    %3203 = vst [vmem:[%s3192 + $0x50] sm:$0xff] %v3186
    %3204 = vst [vmem:[%s3192 + $0x58] sm:$0xff] %v3187
    %3205 = vst [vmem:[%s3192 + $0x60] sm:$0xff] %v3188
    %3206 = vst [vmem:[%s3192 + $0x68] sm:$0xff] %v3189
    %3207 = vst [vmem:[%s3192 + $0x70] sm:$0xff] %v3190
    %3208 = vst [vmem:[%s3192 + $0x78] sm:$0xff] %v3191
    // Predicated region
    $region30: #{tpu_custom_call.1} parent=1 // pred_check
      _
    $region31: #{tpu_custom_call.1} parent=1 // pred_check_branch
      %3210 = sbr.rel (0) target = $region33
    $region32: #{tpu_custom_call.1} parent=1 // pred_region
      %s3212 = ssub.s32 4096, 4096
      %3213 = vsyncadd [#allocation3], %s3212
      %s3214 = sshll.u32 [#allocation2], 4
      %s3215 = int_to_ptr.vmem [resolvable:$true] %s3214
      %3220 = dma.vmem_to_hbm [thread:$0]  %s3215, 4096, %s7, [#allocation3], 256, 256, 16
    $region33: #{tpu_custom_call.1} parent=1 // pred_fallthru
      _
    // Predicated region
    $region34: #{tpu_custom_call.1} parent=1 // pred_check
      _
    $region35: #{tpu_custom_call.1} parent=1 // pred_check_branch
      %3222 = sbr.rel (0) target = $region37
    $region36: #{tpu_custom_call.1} parent=1 // pred_region
      %3223 = dma.done [#allocation3], 4096
    $region37: #{tpu_custom_call.1} parent=1 // pred_fallthru
      _
    %3224 = vsyncpa [#allocation3], 1

</llo_original>
